<compile_context>
chip_gen: v7x
topology: tpu7x:2x2x1
jax: 0.10.0
libtpu: 0.0.40
codegen_flags: <defaults>
</compile_context>

<pallas_src>
import functools
import math

import jax
import jax.numpy as jnp
import numpy as np
from jax.experimental import pallas as pl
from jax.experimental.pallas import tpu as pltpu


def encoder_layer_kernel(src_ref, pos_ref,
                         wqk_ref, bqk_ref,
                         wv_ref, bv_ref,
                         wo_ref, bo_ref,
                         g1_ref, be1_ref,
                         w1_ref, b1_ref,
                         w2_ref, b2_ref,
                         g2_ref, be2_ref,
                         out_ref,
                         *, nhead):
    nb, L, E = src_ref.shape
    hd = E // nhead
    R = nb * L
    scale = 1.0 / math.sqrt(hd)
    cdt = wqk_ref.dtype                       # compute (matmul) dtype, bf16

    x = src_ref[...].astype(jnp.float32)          # (nb, L, E), f32 for residual/LN
    qk_in = x + pos_ref[...].astype(jnp.float32)  # (nb, L, E)

    xr = x.reshape(R, E)                          # flat rows for MXU matmuls
    qkr = qk_in.reshape(R, E).astype(cdt)

    # --- fused Q/K projection + V projection (y = x @ W^T + b, W^T prefused) ---
    qk = jnp.dot(qkr, wqk_ref[...],
                 preferred_element_type=jnp.float32) + bqk_ref[...]   # (R, 2E) f32
    v = jnp.dot(xr.astype(cdt), wv_ref[...],
                preferred_element_type=jnp.float32) + bv_ref[...]     # (R, E)  f32

    # Cast once to bf16 (q pre-scaled, as in PyTorch MHA) and go 3-D.
    q2 = (qk[:, :E] * scale).astype(cdt).reshape(nb, L, E)
    k2 = qk[:, E:].astype(cdt).reshape(nb, L, E)
    v2 = v.astype(cdt).reshape(nb, L, E)

    # Head-major batch: (nhead*nb, L, hd); batch index = h*nb + b.
    def split_heads(t):
        return jnp.concatenate(
            [t[:, :, h * hd:(h + 1) * hd] for h in range(nhead)], axis=0)

    qh = split_heads(q2)
    kh = split_heads(k2)
    vh = split_heads(v2)

    # --- attention: one batched QK^T and one batched P@V over all nb*nhead heads ---
    s = jnp.einsum("bld,bmd->blm", qh, kh,
                   preferred_element_type=jnp.float32)                # (nh*nb, L, L)
    s = s - jnp.max(s, axis=-1, keepdims=True)
    p = jnp.exp(s)
    p = p * pl.reciprocal(jnp.sum(p, axis=-1, keepdims=True), approx=True)
    ctx = jnp.einsum("blm,bmd->bld", p.astype(cdt), vh,
                     preferred_element_type=jnp.float32).astype(cdt)  # (nh*nb, L, hd)

    # Merge heads back to a full-width slab and do ONE output projection (K = E).
    ctx = jnp.concatenate(
        [ctx[h * nb:(h + 1) * nb] for h in range(nhead)], axis=-1)    # (nb, L, E)
    attn = jnp.dot(ctx.reshape(R, E), wo_ref[...],
                   preferred_element_type=jnp.float32) + bo_ref[...]  # (R, E)

    # --- residual + LayerNorm1 (f32) ---
    y = xr + attn
    mu = jnp.mean(y, axis=-1, keepdims=True)
    var = jnp.mean((y - mu) ** 2, axis=-1, keepdims=True)
    y = (y - mu) * jax.lax.rsqrt(var + 1e-5) * g1_ref[...] + be1_ref[...]

    # --- feed-forward (relu), bf16 matmuls / f32 accumulate ---
    h1 = jnp.dot(y.astype(cdt), w1_ref[...],
                 preferred_element_type=jnp.float32) + b1_ref[...]    # (R, Fd) f32
    h1 = jnp.maximum(h1, 0.0).astype(cdt)                             # fused relu+downcast
    ff = jnp.dot(h1, w2_ref[...],
                 preferred_element_type=jnp.float32) + b2_ref[...]    # (R, E)

    # --- residual + LayerNorm2 (f32) ---
    z = y + ff
    mu2 = jnp.mean(z, axis=-1, keepdims=True)
    var2 = jnp.mean((z - mu2) ** 2, axis=-1, keepdims=True)
    z = (z - mu2) * jax.lax.rsqrt(var2 + 1e-5) * g2_ref[...] + be2_ref[...]

    out_ref[...] = z.reshape(nb, L, E).astype(out_ref.dtype)


# ----------------------------- wrapper helpers -----------------------------

def _vmem_capacity_bytes():
    try:
        return int(pltpu.get_tpu_info().vmem_capacity_bytes)
    except Exception:
        return 64 * 1024 * 1024        # conservative (v7x per-core size)


def _tile_vmem_bytes(nb, L, E, Fd, nhead):
    """Generous per-grid-step working-set estimate (activations + IO blocks)."""
    rows = nb * L
    heads = nb * nhead
    io = 2 * 3 * rows * E * 4              # double-buffered src/pos/out blocks
    f32_act = rows * (12 * E + Fd) * 4     # x, qk(2E), v, attn, y, ff, z, temps
    bf16_act = rows * (8 * E + Fd) * 2     # bf16 casts + head-major copies, h1
    scores = heads * L * L * 6             # f32 scores + bf16 probs
    return io + f32_act + bf16_act + scores


def _weight_vmem_bytes(E, Fd):
    w = (2 * E * E + 2 * E * E + 2 * E * Fd) * 2     # bf16 Wqk, Wv, Wo, W1, W2
    b = (2 * E + 2 * E + Fd + 5 * E) * 4             # f32 biases / LN params
    return w + b


def _pick_batch_tile(N, L, E, Fd, nhead, budget_bytes):
    """Largest divisor of N whose working set fits the VMEM budget, keeping
    >= 2 grid steps (v7x megacore) and preferring rows % 256 == 0."""
    avail = max(budget_bytes - _weight_vmem_bytes(E, Fd), budget_bytes // 4)
    candidates = [nb for nb in range(1, N + 1)
                  if N % nb == 0
                  and (N < 2 or N // nb >= 2)
                  and _tile_vmem_bytes(nb, L, E, Fd, nhead) <= avail]
    if not candidates:
        return 1
    best = max(candidates)
    rounded = [nb for nb in candidates if (nb * L) % 256 == 0]
    if rounded and max(rounded) * 2 >= best:
        return max(rounded)
    return best


def transformer_encoder_layer(src, pos, params, nhead, *,
                              batch_tile=None, compute_dtype=jnp.bfloat16):
    """src, pos: (L, N, E) float32 (PyTorch layout). Returns (L, N, E)."""
    L, N, E = src.shape
    Fd = params["w1"].shape[0]
    assert E % nhead == 0

    cap = _vmem_capacity_bytes()
    vmem_limit = int(min(0.85 * cap, cap - (4 << 20)))
    vmem_limit = max(vmem_limit, 16 << 20)
    tile_budget = int(0.70 * vmem_limit)

    nb = batch_tile if batch_tile is not None else _pick_batch_tile(
        N, L, E, Fd, nhead, tile_budget)
    assert N % nb == 0, "batch tile must divide batch"

    src_b = jnp.transpose(src, (1, 0, 2))   # (N, L, E)
    pos_b = jnp.transpose(pos, (1, 0, 2))

    f32 = jnp.float32
    # Pre-transpose weights once (y = x @ W^T + b  ->  x @ Wt) and fuse Q/K.
    wqk_t = jnp.concatenate([params["wq"], params["wk"]], axis=0).T.astype(compute_dtype)  # (E, 2E)
    bqk = jnp.concatenate([params["bq"], params["bk"]], axis=1).astype(f32)                # (1, 2E)
    wv_t = params["wv"].T.astype(compute_dtype)    # (E, E)
    wo_t = params["wo"].T.astype(compute_dtype)    # (E, E)
    w1_t = params["w1"].T.astype(compute_dtype)    # (E, Fd)
    w2_t = params["w2"].T.astype(compute_dtype)    # (Fd, E)
    bv, bo = params["bv"].astype(f32), params["bo"].astype(f32)
    b1, b2 = params["b1"].astype(f32), params["b2"].astype(f32)
    g1, be1 = params["g1"].astype(f32), params["be1"].astype(f32)
    g2, be2 = params["g2"].astype(f32), params["be2"].astype(f32)

    seq_spec = pl.BlockSpec((nb, L, E), lambda b: (b, 0, 0))

    def build_call(single_buffer_weights):
        def resident(arr):
            idx = lambda b: (0, 0)
            if single_buffer_weights:
                # Constant block index across the grid -> single buffer is enough.
                return pl.BlockSpec(arr.shape, idx, pipeline_mode=pl.Buffered(1))
            return pl.BlockSpec(arr.shape, idx)

        return pl.pallas_call(
            functools.partial(encoder_layer_kernel, nhead=nhead),
            out_shape=jax.ShapeDtypeStruct((N, L, E), src.dtype),
            grid=(N // nb,),
            in_specs=[
                seq_spec, seq_spec,                 # src, pos
                resident(wqk_t), resident(bqk),     # fused Wqk^T, fused bias
                resident(wv_t), resident(bv),
                resident(wo_t), resident(bo),
                resident(g1), resident(be1),
                resident(w1_t), resident(b1),
                resident(w2_t), resident(b2),
                resident(g2), resident(be2),
            ],
            out_specs=seq_spec,
            compiler_params=pltpu.CompilerParams(
                dimension_semantics=("parallel",),
                vmem_limit_bytes=vmem_limit),
        )

    args = (src_b, pos_b,
            wqk_t, bqk, wv_t, bv, wo_t, bo,
            g1, be1, w1_t, b1, w2_t, b2, g2, be2)

    try:
        out = jax.block_until_ready(build_call(True)(*args))
    except Exception:
        # Fallback for jax versions that reject pipeline_mode / Buffered(1).
        out = jax.block_until_ready(build_call(False)(*args))

    return jnp.transpose(out, (1, 0, 2))    # back to (L, N, E)


# ------------------------------- reference --------------------------------

def reference_jax(src, pos, p, nhead):
    """Pure-JAX f32 reference of forward_post (eval mode)."""
    L, N, E = src.shape
    hd = E // nhead

    def lin(a, w, b):
        return jnp.einsum("lne,fe->lnf", a, w) + b

    def ln(z, g, b):
        mu = z.mean(-1, keepdims=True)
        var = ((z - mu) ** 2).mean(-1, keepdims=True)
        return (z - mu) / jnp.sqrt(var + 1e-5) * g[0] + b[0]

    x = src
    qk = x + pos
    q = lin(qk, p["wq"], p["bq"][0]) / jnp.sqrt(jnp.float32(hd))
    k = lin(qk, p["wk"], p["bk"][0])
    v = lin(x, p["wv"], p["bv"][0])
    qh = q.reshape(L, N, nhead, hd)
    kh = k.reshape(L, N, nhead, hd)
    vh = v.reshape(L, N, nhead, hd)
    s = jnp.einsum("lnhd,mnhd->nhlm", qh, kh)
    a = jax.nn.softmax(s, axis=-1)
    ctx = jnp.einsum("nhlm,mnhd->lnhd", a, vh).reshape(L, N, E)
    attn = lin(ctx, p["wo"], p["bo"][0])
    y = ln(x + attn, p["g1"], p["be1"])
    h = jax.nn.relu(lin(y, p["w1"], p["b1"][0]))
    ff = lin(h, p["w2"], p["b2"][0])
    return ln(y + ff, p["g2"], p["be2"])


def make_params(key, d_model, nhead, dim_feedforward):
    E, Fd = d_model, dim_feedforward
    ks = jax.random.split(key, 10)
    scale = 0.05

    def w(k, shape):
        return (scale * jax.random.normal(k, shape)).astype(jnp.float32)

    return {
        # MultiheadAttention in_proj split into q/k/v (each (E, E)), biases (1, E)
        "wq": w(ks[0], (E, E)), "wk": w(ks[1], (E, E)), "wv": w(ks[2], (E, E)),
        "bq": w(ks[3], (1, E)), "bk": w(ks[4], (1, E)), "bv": w(ks[5], (1, E)),
        "wo": w(ks[6], (E, E)), "bo": jnp.zeros((1, E), jnp.float32),
        "g1": jnp.ones((1, E), jnp.float32), "be1": jnp.zeros((1, E), jnp.float32),
        "w1": w(ks[7], (Fd, E)), "b1": w(ks[8], (1, Fd)),
        "w2": w(ks[9], (E, Fd)), "b2": jnp.zeros((1, E), jnp.float32),
        "g2": jnp.ones((1, E), jnp.float32), "be2": jnp.zeros((1, E), jnp.float32),
    }


if __name__ == "__main__":
    # small shapes: seq L=8, batch N=2, d_model E=32, nhead=4, dim_feedforward=64
    L, N, E, H, Fd = 8, 2, 32, 4, 64
    key = jax.random.PRNGKey(0)
    k_src, k_pos, k_par = jax.random.split(key, 3)

    src = jax.random.normal(k_src, (L, N, E), dtype=jnp.float32)
    pos = jax.random.normal(k_pos, (L, N, E), dtype=jnp.float32)
    params = make_params(k_par, E, H, Fd)

    out = transformer_encoder_layer(src, pos, params, nhead=H)
    out = jax.block_until_ready(out)

    ref = jax.block_until_ready(reference_jax(src, pos, params, H))
    np.testing.assert_allclose(np.asarray(out), np.asarray(ref), rtol=5e-2, atol=5e-2)

    print("KERNEL_OK")
</pallas_src>

<mosaic_0001>
module attributes {stable_mosaic.version = 11 : i64} {
  func.func @encoder_layer_kernel(%arg0: i32, %arg1: memref<1x8x32xf32, #tpu.memory_space<vmem>>, %arg2: memref<1x8x32xf32, #tpu.memory_space<vmem>>, %arg3: memref<32x64xbf16, #tpu.memory_space<vmem>>, %arg4: memref<1x64xf32, #tpu.memory_space<vmem>>, %arg5: memref<32x32xbf16, #tpu.memory_space<vmem>>, %arg6: memref<1x32xf32, #tpu.memory_space<vmem>>, %arg7: memref<32x32xbf16, #tpu.memory_space<vmem>>, %arg8: memref<1x32xf32, #tpu.memory_space<vmem>>, %arg9: memref<1x32xf32, #tpu.memory_space<vmem>>, %arg10: memref<1x32xf32, #tpu.memory_space<vmem>>, %arg11: memref<32x64xbf16, #tpu.memory_space<vmem>>, %arg12: memref<1x64xf32, #tpu.memory_space<vmem>>, %arg13: memref<64x32xbf16, #tpu.memory_space<vmem>>, %arg14: memref<1x32xf32, #tpu.memory_space<vmem>>, %arg15: memref<1x32xf32, #tpu.memory_space<vmem>>, %arg16: memref<1x32xf32, #tpu.memory_space<vmem>>, %arg17: memref<1x8x32xf32, #tpu.memory_space<vmem>>) attributes {dimension_semantics = [#tpu.dimension_semantics<parallel>], iteration_bounds = array<i64: 2>, scalar_prefetch = 0 : i64, scratch_operands = 0 : i64, tpu.core_type = #tpu.core_type<tc>, window_params = [{transform_indices = @transform_0, window_bounds = array<i64: 1, 8, 32>}, {transform_indices = @transform_1, window_bounds = array<i64: 1, 8, 32>}, {pipeline_mode = #tpu.pipeline_mode<synchronous>, transform_indices = @transform_2, window_bounds = array<i64: 32, 64>}, {pipeline_mode = #tpu.pipeline_mode<synchronous>, transform_indices = @transform_3, window_bounds = array<i64: 1, 64>}, {pipeline_mode = #tpu.pipeline_mode<synchronous>, transform_indices = @transform_4, window_bounds = array<i64: 32, 32>}, {pipeline_mode = #tpu.pipeline_mode<synchronous>, transform_indices = @transform_5, window_bounds = array<i64: 1, 32>}, {pipeline_mode = #tpu.pipeline_mode<synchronous>, transform_indices = @transform_6, window_bounds = array<i64: 32, 32>}, {pipeline_mode = #tpu.pipeline_mode<synchronous>, transform_indices = @transform_7, window_bounds = array<i64: 1, 32>}, {pipeline_mode = #tpu.pipeline_mode<synchronous>, transform_indices = @transform_8, window_bounds = array<i64: 1, 32>}, {pipeline_mode = #tpu.pipeline_mode<synchronous>, transform_indices = @transform_9, window_bounds = array<i64: 1, 32>}, {pipeline_mode = #tpu.pipeline_mode<synchronous>, transform_indices = @transform_10, window_bounds = array<i64: 32, 64>}, {pipeline_mode = #tpu.pipeline_mode<synchronous>, transform_indices = @transform_11, window_bounds = array<i64: 1, 64>}, {pipeline_mode = #tpu.pipeline_mode<synchronous>, transform_indices = @transform_12, window_bounds = array<i64: 64, 32>}, {pipeline_mode = #tpu.pipeline_mode<synchronous>, transform_indices = @transform_13, window_bounds = array<i64: 1, 32>}, {pipeline_mode = #tpu.pipeline_mode<synchronous>, transform_indices = @transform_14, window_bounds = array<i64: 1, 32>}, {pipeline_mode = #tpu.pipeline_mode<synchronous>, transform_indices = @transform_15, window_bounds = array<i64: 1, 32>}, {transform_indices = @transform_16, window_bounds = array<i64: 1, 8, 32>}]} {
    %c0 = arith.constant 0 : index
    %c0_0 = arith.constant 0 : index
    %c0_1 = arith.constant 0 : index
    %0 = vector.load %arg1[%c0, %c0_0, %c0_1] : memref<1x8x32xf32, #tpu.memory_space<vmem>>, vector<1x8x32xf32>
    %c0_2 = arith.constant 0 : index
    %c0_3 = arith.constant 0 : index
    %c0_4 = arith.constant 0 : index
    %1 = vector.load %arg2[%c0_2, %c0_3, %c0_4] : memref<1x8x32xf32, #tpu.memory_space<vmem>>, vector<1x8x32xf32>
    %2 = arith.addf %0, %1 : vector<1x8x32xf32>
    %3 = vector.shape_cast %0 : vector<1x8x32xf32> to vector<8x32xf32>
    %4 = vector.shape_cast %2 : vector<1x8x32xf32> to vector<8x32xf32>
    %5 = arith.truncf %4 : vector<8x32xf32> to vector<8x32xbf16>
    %c0_5 = arith.constant 0 : index
    %c0_6 = arith.constant 0 : index
    %6 = vector.load %arg3[%c0_5, %c0_6] : memref<32x64xbf16, #tpu.memory_space<vmem>>, vector<32x64xbf16>
    %cst = arith.constant dense<0.000000e+00> : vector<8x64xf32>
    %7 = tpu.matmul %5, %6, %cst {dimension_numbers = #tpu.dot_dimension_numbers<[1], [0], [0], [1], [0, 0, 1, 1], [], []>} : vector<8x32xbf16>, vector<32x64xbf16>, vector<8x64xf32> -> vector<8x64xf32>
    %c0_7 = arith.constant 0 : index
    %c0_8 = arith.constant 0 : index
    %8 = vector.load %arg4[%c0_7, %c0_8] : memref<1x64xf32, #tpu.memory_space<vmem>>, vector<1x64xf32>
    %9 = vector.broadcast %8 : vector<1x64xf32> to vector<8x64xf32>
    %10 = arith.addf %7, %9 : vector<8x64xf32>
    %11 = arith.truncf %3 : vector<8x32xf32> to vector<8x32xbf16>
    %c0_9 = arith.constant 0 : index
    %c0_10 = arith.constant 0 : index
    %12 = vector.load %arg5[%c0_9, %c0_10] : memref<32x32xbf16, #tpu.memory_space<vmem>>, vector<32x32xbf16>
    %cst_11 = arith.constant dense<0.000000e+00> : vector<8x32xf32>
    %13 = tpu.matmul %11, %12, %cst_11 {dimension_numbers = #tpu.dot_dimension_numbers<[1], [0], [0], [1], [0, 0, 1, 1], [], []>} : vector<8x32xbf16>, vector<32x32xbf16>, vector<8x32xf32> -> vector<8x32xf32>
    %c0_12 = arith.constant 0 : index
    %c0_13 = arith.constant 0 : index
    %14 = vector.load %arg6[%c0_12, %c0_13] : memref<1x32xf32, #tpu.memory_space<vmem>>, vector<1x32xf32>
    %15 = vector.broadcast %14 : vector<1x32xf32> to vector<8x32xf32>
    %16 = arith.addf %13, %15 : vector<8x32xf32>
    %17 = vector.extract_strided_slice %10 {offsets = [0, 0], sizes = [8, 32], strides = [1, 1]} : vector<8x64xf32> to vector<8x32xf32>
    %cst_14 = arith.constant 0.353553385 : f32
    %18 = vector.broadcast %cst_14 : f32 to vector<8x32xf32>
    %19 = arith.mulf %17, %18 : vector<8x32xf32>
    %20 = arith.truncf %19 : vector<8x32xf32> to vector<8x32xbf16>
    %21 = vector.shape_cast %20 : vector<8x32xbf16> to vector<1x8x32xbf16>
    %22 = vector.extract_strided_slice %10 {offsets = [0, 32], sizes = [8, 32], strides = [1, 1]} : vector<8x64xf32> to vector<8x32xf32>
    %23 = arith.truncf %22 : vector<8x32xf32> to vector<8x32xbf16>
    %24 = vector.shape_cast %23 : vector<8x32xbf16> to vector<1x8x32xbf16>
    %25 = arith.truncf %16 : vector<8x32xf32> to vector<8x32xbf16>
    %26 = vector.shape_cast %25 : vector<8x32xbf16> to vector<1x8x32xbf16>
    %27 = vector.extract_strided_slice %21 {offsets = [0, 0, 0], sizes = [1, 8, 8], strides = [1, 1, 1]} : vector<1x8x32xbf16> to vector<1x8x8xbf16>
    %28 = vector.extract_strided_slice %21 {offsets = [0, 0, 8], sizes = [1, 8, 8], strides = [1, 1, 1]} : vector<1x8x32xbf16> to vector<1x8x8xbf16>
    %29 = vector.extract_strided_slice %21 {offsets = [0, 0, 16], sizes = [1, 8, 8], strides = [1, 1, 1]} : vector<1x8x32xbf16> to vector<1x8x8xbf16>
    %30 = vector.extract_strided_slice %21 {offsets = [0, 0, 24], sizes = [1, 8, 8], strides = [1, 1, 1]} : vector<1x8x32xbf16> to vector<1x8x8xbf16>
    %31 = tpu.concatenate %27, %28, %29, %30 in 0 : vector<1x8x8xbf16>, vector<1x8x8xbf16>, vector<1x8x8xbf16>, vector<1x8x8xbf16> -> vector<4x8x8xbf16>
    %32 = vector.extract_strided_slice %24 {offsets = [0, 0, 0], sizes = [1, 8, 8], strides = [1, 1, 1]} : vector<1x8x32xbf16> to vector<1x8x8xbf16>
    %33 = vector.extract_strided_slice %24 {offsets = [0, 0, 8], sizes = [1, 8, 8], strides = [1, 1, 1]} : vector<1x8x32xbf16> to vector<1x8x8xbf16>
    %34 = vector.extract_strided_slice %24 {offsets = [0, 0, 16], sizes = [1, 8, 8], strides = [1, 1, 1]} : vector<1x8x32xbf16> to vector<1x8x8xbf16>
    %35 = vector.extract_strided_slice %24 {offsets = [0, 0, 24], sizes = [1, 8, 8], strides = [1, 1, 1]} : vector<1x8x32xbf16> to vector<1x8x8xbf16>
    %36 = tpu.concatenate %32, %33, %34, %35 in 0 : vector<1x8x8xbf16>, vector<1x8x8xbf16>, vector<1x8x8xbf16>, vector<1x8x8xbf16> -> vector<4x8x8xbf16>
    %37 = vector.extract_strided_slice %26 {offsets = [0, 0, 0], sizes = [1, 8, 8], strides = [1, 1, 1]} : vector<1x8x32xbf16> to vector<1x8x8xbf16>
    %38 = vector.extract_strided_slice %26 {offsets = [0, 0, 8], sizes = [1, 8, 8], strides = [1, 1, 1]} : vector<1x8x32xbf16> to vector<1x8x8xbf16>
    %39 = vector.extract_strided_slice %26 {offsets = [0, 0, 16], sizes = [1, 8, 8], strides = [1, 1, 1]} : vector<1x8x32xbf16> to vector<1x8x8xbf16>
    %40 = vector.extract_strided_slice %26 {offsets = [0, 0, 24], sizes = [1, 8, 8], strides = [1, 1, 1]} : vector<1x8x32xbf16> to vector<1x8x8xbf16>
    %41 = tpu.concatenate %37, %38, %39, %40 in 0 : vector<1x8x8xbf16>, vector<1x8x8xbf16>, vector<1x8x8xbf16>, vector<1x8x8xbf16> -> vector<4x8x8xbf16>
    "tpu.trace_start"() <{level = 10 : i32, message = "bld,bmd->blm"}> : () -> ()
    %cst_15 = arith.constant dense<0.000000e+00> : vector<4x8x8xf32>
    %42 = tpu.matmul %31, %36, %cst_15 {dimension_numbers = #tpu.dot_dimension_numbers<[2], [2], [1], [1], [0, 0, 0, 1, 1, 1], [0], [0]>} : vector<4x8x8xbf16>, vector<4x8x8xbf16>, vector<4x8x8xf32> -> vector<4x8x8xf32>
    "tpu.trace_stop"() : () -> ()
    %cst_16 = arith.constant dense<0xFF800000> : vector<4x8xf32>
    %43 = vector.multi_reduction <maximumf>, %42, %cst_16 [2] : vector<4x8x8xf32> to vector<4x8xf32>
    %44 = vector.shape_cast %43 : vector<4x8xf32> to vector<4x8x1xf32>
    %45 = vector.broadcast %44 : vector<4x8x1xf32> to vector<4x8x8xf32>
    %46 = arith.subf %42, %45 : vector<4x8x8xf32>
    %47 = math.exp %46 : vector<4x8x8xf32>
    %cst_17 = arith.constant dense<0.000000e+00> : vector<4x8xf32>
    %48 = vector.multi_reduction <add>, %47, %cst_17 [2] : vector<4x8x8xf32> to vector<4x8xf32>
    %49 = vector.shape_cast %48 : vector<4x8xf32> to vector<4x8x1xf32>
    %50 = tpu.reciprocal %49 {approx = true} : vector<4x8x1xf32> -> vector<4x8x1xf32>
    %51 = vector.broadcast %50 : vector<4x8x1xf32> to vector<4x8x8xf32>
    %52 = arith.mulf %47, %51 : vector<4x8x8xf32>
    %53 = arith.truncf %52 : vector<4x8x8xf32> to vector<4x8x8xbf16>
    "tpu.trace_start"() <{level = 10 : i32, message = "blm,bmd->bld"}> : () -> ()
    %cst_18 = arith.constant dense<0.000000e+00> : vector<4x8x8xf32>
    %54 = tpu.matmul %53, %41, %cst_18 {dimension_numbers = #tpu.dot_dimension_numbers<[2], [1], [1], [2], [0, 0, 0, 1, 1, 2], [0], [0]>} : vector<4x8x8xbf16>, vector<4x8x8xbf16>, vector<4x8x8xf32> -> vector<4x8x8xf32>
    "tpu.trace_stop"() : () -> ()
    %55 = arith.truncf %54 : vector<4x8x8xf32> to vector<4x8x8xbf16>
    %56 = vector.extract_strided_slice %55 {offsets = [0, 0, 0], sizes = [1, 8, 8], strides = [1, 1, 1]} : vector<4x8x8xbf16> to vector<1x8x8xbf16>
    %57 = vector.extract_strided_slice %55 {offsets = [1, 0, 0], sizes = [1, 8, 8], strides = [1, 1, 1]} : vector<4x8x8xbf16> to vector<1x8x8xbf16>
    %58 = vector.extract_strided_slice %55 {offsets = [2, 0, 0], sizes = [1, 8, 8], strides = [1, 1, 1]} : vector<4x8x8xbf16> to vector<1x8x8xbf16>
    %59 = vector.extract_strided_slice %55 {offsets = [3, 0, 0], sizes = [1, 8, 8], strides = [1, 1, 1]} : vector<4x8x8xbf16> to vector<1x8x8xbf16>
    %60 = tpu.concatenate %56, %57, %58, %59 in 2 : vector<1x8x8xbf16>, vector<1x8x8xbf16>, vector<1x8x8xbf16>, vector<1x8x8xbf16> -> vector<1x8x32xbf16>
    %61 = vector.shape_cast %60 : vector<1x8x32xbf16> to vector<8x32xbf16>
    %c0_19 = arith.constant 0 : index
    %c0_20 = arith.constant 0 : index
    %62 = vector.load %arg7[%c0_19, %c0_20] : memref<32x32xbf16, #tpu.memory_space<vmem>>, vector<32x32xbf16>
    %cst_21 = arith.constant dense<0.000000e+00> : vector<8x32xf32>
    %63 = tpu.matmul %61, %62, %cst_21 {dimension_numbers = #tpu.dot_dimension_numbers<[1], [0], [0], [1], [0, 0, 1, 1], [], []>} : vector<8x32xbf16>, vector<32x32xbf16>, vector<8x32xf32> -> vector<8x32xf32>
    %c0_22 = arith.constant 0 : index
    %c0_23 = arith.constant 0 : index
    %64 = vector.load %arg8[%c0_22, %c0_23] : memref<1x32xf32, #tpu.memory_space<vmem>>, vector<1x32xf32>
    %65 = vector.broadcast %64 : vector<1x32xf32> to vector<8x32xf32>
    %66 = arith.addf %63, %65 : vector<8x32xf32>
    %67 = arith.addf %3, %66 : vector<8x32xf32>
    %cst_24 = arith.constant dense<0.000000e+00> : vector<8xf32>
    %68 = vector.multi_reduction <add>, %67, %cst_24 [1] : vector<8x32xf32> to vector<8xf32>
    %69 = vector.shape_cast %68 : vector<8xf32> to vector<8x1xf32>
    %cst_25 = arith.constant 3.200000e+01 : f32
    %70 = vector.broadcast %cst_25 : f32 to vector<8x1xf32>
    %71 = arith.divf %69, %70 : vector<8x1xf32>
    %72 = vector.broadcast %71 : vector<8x1xf32> to vector<8x32xf32>
    %73 = arith.subf %67, %72 : vector<8x32xf32>
    %74 = arith.mulf %73, %73 : vector<8x32xf32>
    %cst_26 = arith.constant dense<0.000000e+00> : vector<8xf32>
    %75 = vector.multi_reduction <add>, %74, %cst_26 [1] : vector<8x32xf32> to vector<8xf32>
    %76 = vector.shape_cast %75 : vector<8xf32> to vector<8x1xf32>
    %cst_27 = arith.constant 3.200000e+01 : f32
    %77 = vector.broadcast %cst_27 : f32 to vector<8x1xf32>
    %78 = arith.divf %76, %77 : vector<8x1xf32>
    %79 = vector.broadcast %71 : vector<8x1xf32> to vector<8x32xf32>
    %80 = arith.subf %67, %79 : vector<8x32xf32>
    %cst_28 = arith.constant 9.99999974E-6 : f32
    %81 = vector.broadcast %cst_28 : f32 to vector<8x1xf32>
    %82 = arith.addf %78, %81 : vector<8x1xf32>
    %83 = math.rsqrt %82 : vector<8x1xf32>
    %84 = vector.broadcast %83 : vector<8x1xf32> to vector<8x32xf32>
    %85 = arith.mulf %80, %84 : vector<8x32xf32>
    %c0_29 = arith.constant 0 : index
    %c0_30 = arith.constant 0 : index
    %86 = vector.load %arg9[%c0_29, %c0_30] : memref<1x32xf32, #tpu.memory_space<vmem>>, vector<1x32xf32>
    %87 = vector.broadcast %86 : vector<1x32xf32> to vector<8x32xf32>
    %88 = arith.mulf %85, %87 : vector<8x32xf32>
    %c0_31 = arith.constant 0 : index
    %c0_32 = arith.constant 0 : index
    %89 = vector.load %arg10[%c0_31, %c0_32] : memref<1x32xf32, #tpu.memory_space<vmem>>, vector<1x32xf32>
    %90 = vector.broadcast %89 : vector<1x32xf32> to vector<8x32xf32>
    %91 = arith.addf %88, %90 : vector<8x32xf32>
    %92 = arith.truncf %91 : vector<8x32xf32> to vector<8x32xbf16>
    %c0_33 = arith.constant 0 : index
    %c0_34 = arith.constant 0 : index
    %93 = vector.load %arg11[%c0_33, %c0_34] : memref<32x64xbf16, #tpu.memory_space<vmem>>, vector<32x64xbf16>
    %cst_35 = arith.constant dense<0.000000e+00> : vector<8x64xf32>
    %94 = tpu.matmul %92, %93, %cst_35 {dimension_numbers = #tpu.dot_dimension_numbers<[1], [0], [0], [1], [0, 0, 1, 1], [], []>} : vector<8x32xbf16>, vector<32x64xbf16>, vector<8x64xf32> -> vector<8x64xf32>
    %c0_36 = arith.constant 0 : index
    %c0_37 = arith.constant 0 : index
    %95 = vector.load %arg12[%c0_36, %c0_37] : memref<1x64xf32, #tpu.memory_space<vmem>>, vector<1x64xf32>
    %96 = vector.broadcast %95 : vector<1x64xf32> to vector<8x64xf32>
    %97 = arith.addf %94, %96 : vector<8x64xf32>
    %cst_38 = arith.constant 0.000000e+00 : f32
    %98 = vector.broadcast %cst_38 : f32 to vector<8x64xf32>
    %99 = arith.maximumf %97, %98 : vector<8x64xf32>
    %100 = arith.truncf %99 : vector<8x64xf32> to vector<8x64xbf16>
    %c0_39 = arith.constant 0 : index
    %c0_40 = arith.constant 0 : index
    %101 = vector.load %arg13[%c0_39, %c0_40] : memref<64x32xbf16, #tpu.memory_space<vmem>>, vector<64x32xbf16>
    %cst_41 = arith.constant dense<0.000000e+00> : vector<8x32xf32>
    %102 = tpu.matmul %100, %101, %cst_41 {dimension_numbers = #tpu.dot_dimension_numbers<[1], [0], [0], [1], [0, 0, 1, 1], [], []>} : vector<8x64xbf16>, vector<64x32xbf16>, vector<8x32xf32> -> vector<8x32xf32>
    %c0_42 = arith.constant 0 : index
    %c0_43 = arith.constant 0 : index
    %103 = vector.load %arg14[%c0_42, %c0_43] : memref<1x32xf32, #tpu.memory_space<vmem>>, vector<1x32xf32>
    %104 = vector.broadcast %103 : vector<1x32xf32> to vector<8x32xf32>
    %105 = arith.addf %102, %104 : vector<8x32xf32>
    %106 = arith.addf %91, %105 : vector<8x32xf32>
    %cst_44 = arith.constant dense<0.000000e+00> : vector<8xf32>
    %107 = vector.multi_reduction <add>, %106, %cst_44 [1] : vector<8x32xf32> to vector<8xf32>
    %108 = vector.shape_cast %107 : vector<8xf32> to vector<8x1xf32>
    %cst_45 = arith.constant 3.200000e+01 : f32
    %109 = vector.broadcast %cst_45 : f32 to vector<8x1xf32>
    %110 = arith.divf %108, %109 : vector<8x1xf32>
    %111 = vector.broadcast %110 : vector<8x1xf32> to vector<8x32xf32>
    %112 = arith.subf %106, %111 : vector<8x32xf32>
    %113 = arith.mulf %112, %112 : vector<8x32xf32>
    %cst_46 = arith.constant dense<0.000000e+00> : vector<8xf32>
    %114 = vector.multi_reduction <add>, %113, %cst_46 [1] : vector<8x32xf32> to vector<8xf32>
    %115 = vector.shape_cast %114 : vector<8xf32> to vector<8x1xf32>
    %cst_47 = arith.constant 3.200000e+01 : f32
    %116 = vector.broadcast %cst_47 : f32 to vector<8x1xf32>
    %117 = arith.divf %115, %116 : vector<8x1xf32>
    %118 = vector.broadcast %110 : vector<8x1xf32> to vector<8x32xf32>
    %119 = arith.subf %106, %118 : vector<8x32xf32>
    %cst_48 = arith.constant 9.99999974E-6 : f32
    %120 = vector.broadcast %cst_48 : f32 to vector<8x1xf32>
    %121 = arith.addf %117, %120 : vector<8x1xf32>
    %122 = math.rsqrt %121 : vector<8x1xf32>
    %123 = vector.broadcast %122 : vector<8x1xf32> to vector<8x32xf32>
    %124 = arith.mulf %119, %123 : vector<8x32xf32>
    %c0_49 = arith.constant 0 : index
    %c0_50 = arith.constant 0 : index
    %125 = vector.load %arg15[%c0_49, %c0_50] : memref<1x32xf32, #tpu.memory_space<vmem>>, vector<1x32xf32>
    %126 = vector.broadcast %125 : vector<1x32xf32> to vector<8x32xf32>
    %127 = arith.mulf %124, %126 : vector<8x32xf32>
    %c0_51 = arith.constant 0 : index
    %c0_52 = arith.constant 0 : index
    %128 = vector.load %arg16[%c0_51, %c0_52] : memref<1x32xf32, #tpu.memory_space<vmem>>, vector<1x32xf32>
    %129 = vector.broadcast %128 : vector<1x32xf32> to vector<8x32xf32>
    %130 = arith.addf %127, %129 : vector<8x32xf32>
    %131 = vector.shape_cast %130 : vector<8x32xf32> to vector<1x8x32xf32>
    %c0_53 = arith.constant 0 : index
    %c0_54 = arith.constant 0 : index
    %c0_55 = arith.constant 0 : index
    %132 = vector.load %arg17[%c0_53, %c0_54, %c0_55] : memref<1x8x32xf32, #tpu.memory_space<vmem>>, vector<1x8x32xf32>
    tpu.vector_store %arg17[%c0_53, %c0_54, %c0_55], %131 {strides = array<i32>} : memref<1x8x32xf32, #tpu.memory_space<vmem>>, vector<1x8x32xf32>,
    return
  }
  func.func @transform_0(%arg0: i32) -> (i32, i32, i32) {
    %c0_i32 = arith.constant 0 : i32
    %c0_i32_0 = arith.constant 0 : i32
    %c0_i32_1 = arith.constant 0 : i32
    return %arg0, %c0_i32, %c0_i32_0 : i32, i32, i32
  }
  func.func @transform_1(%arg0: i32) -> (i32, i32, i32) {
    %c0_i32 = arith.constant 0 : i32
    %c0_i32_0 = arith.constant 0 : i32
    %c0_i32_1 = arith.constant 0 : i32
    return %arg0, %c0_i32, %c0_i32_0 : i32, i32, i32
  }
  func.func @transform_2(%arg0: i32) -> (i32, i32) {
    %c0_i32 = arith.constant 0 : i32
    %c0_i32_0 = arith.constant 0 : i32
    %c0_i32_1 = arith.constant 0 : i32
    return %c0_i32, %c0_i32_0 : i32, i32
  }
  func.func @transform_3(%arg0: i32) -> (i32, i32) {
    %c0_i32 = arith.constant 0 : i32
    %c0_i32_0 = arith.constant 0 : i32
    %c0_i32_1 = arith.constant 0 : i32
    return %c0_i32, %c0_i32_0 : i32, i32
  }
  func.func @transform_4(%arg0: i32) -> (i32, i32) {
    %c0_i32 = arith.constant 0 : i32
    %c0_i32_0 = arith.constant 0 : i32
    %c0_i32_1 = arith.constant 0 : i32
    return %c0_i32, %c0_i32_0 : i32, i32
  }
  func.func @transform_5(%arg0: i32) -> (i32, i32) {
    %c0_i32 = arith.constant 0 : i32
    %c0_i32_0 = arith.constant 0 : i32
    %c0_i32_1 = arith.constant 0 : i32
    return %c0_i32, %c0_i32_0 : i32, i32
  }
  func.func @transform_6(%arg0: i32) -> (i32, i32) {
    %c0_i32 = arith.constant 0 : i32
    %c0_i32_0 = arith.constant 0 : i32
    %c0_i32_1 = arith.constant 0 : i32
    return %c0_i32, %c0_i32_0 : i32, i32
  }
  func.func @transform_7(%arg0: i32) -> (i32, i32) {
    %c0_i32 = arith.constant 0 : i32
    %c0_i32_0 = arith.constant 0 : i32
    %c0_i32_1 = arith.constant 0 : i32
    return %c0_i32, %c0_i32_0 : i32, i32
  }
  func.func @transform_8(%arg0: i32) -> (i32, i32) {
    %c0_i32 = arith.constant 0 : i32
    %c0_i32_0 = arith.constant 0 : i32
    %c0_i32_1 = arith.constant 0 : i32
    return %c0_i32, %c0_i32_0 : i32, i32
  }
  func.func @transform_9(%arg0: i32) -> (i32, i32) {
    %c0_i32 = arith.constant 0 : i32
    %c0_i32_0 = arith.constant 0 : i32
    %c0_i32_1 = arith.constant 0 : i32
    return %c0_i32, %c0_i32_0 : i32, i32
  }
  func.func @transform_10(%arg0: i32) -> (i32, i32) {
    %c0_i32 = arith.constant 0 : i32
    %c0_i32_0 = arith.constant 0 : i32
    %c0_i32_1 = arith.constant 0 : i32
    return %c0_i32, %c0_i32_0 : i32, i32
  }
  func.func @transform_11(%arg0: i32) -> (i32, i32) {
    %c0_i32 = arith.constant 0 : i32
    %c0_i32_0 = arith.constant 0 : i32
    %c0_i32_1 = arith.constant 0 : i32
    return %c0_i32, %c0_i32_0 : i32, i32
  }
  func.func @transform_12(%arg0: i32) -> (i32, i32) {
    %c0_i32 = arith.constant 0 : i32
    %c0_i32_0 = arith.constant 0 : i32
    %c0_i32_1 = arith.constant 0 : i32
    return %c0_i32, %c0_i32_0 : i32, i32
  }
  func.func @transform_13(%arg0: i32) -> (i32, i32) {
    %c0_i32 = arith.constant 0 : i32
    %c0_i32_0 = arith.constant 0 : i32
    %c0_i32_1 = arith.constant 0 : i32
    return %c0_i32, %c0_i32_0 : i32, i32
  }
  func.func @transform_14(%arg0: i32) -> (i32, i32) {
    %c0_i32 = arith.constant 0 : i32
    %c0_i32_0 = arith.constant 0 : i32
    %c0_i32_1 = arith.constant 0 : i32
    return %c0_i32, %c0_i32_0 : i32, i32
  }
  func.func @transform_15(%arg0: i32) -> (i32, i32) {
    %c0_i32 = arith.constant 0 : i32
    %c0_i32_0 = arith.constant 0 : i32
    %c0_i32_1 = arith.constant 0 : i32
    return %c0_i32, %c0_i32_0 : i32, i32
  }
  func.func @transform_16(%arg0: i32) -> (i32, i32, i32) {
    %c0_i32 = arith.constant 0 : i32
    %c0_i32_0 = arith.constant 0 : i32
    %c0_i32_1 = arith.constant 0 : i32
    return %arg0, %c0_i32, %c0_i32_0 : i32, i32, i32
  }
}

module attributes {stable_mosaic.version = 11 : i64} {
  func.func @encoder_layer_kernel(%arg0: i32, %arg1: memref<1x8x32xf32, #tpu.memory_space<vmem>>, %arg2: memref<1x8x32xf32, #tpu.memory_space<vmem>>, %arg3: memref<32x64xbf16, #tpu.memory_space<vmem>>, %arg4: memref<1x64xf32, #tpu.memory_space<vmem>>, %arg5: memref<32x32xbf16, #tpu.memory_space<vmem>>, %arg6: memref<1x32xf32, #tpu.memory_space<vmem>>, %arg7: memref<32x32xbf16, #tpu.memory_space<vmem>>, %arg8: memref<1x32xf32, #tpu.memory_space<vmem>>, %arg9: memref<1x32xf32, #tpu.memory_space<vmem>>, %arg10: memref<1x32xf32, #tpu.memory_space<vmem>>, %arg11: memref<32x64xbf16, #tpu.memory_space<vmem>>, %arg12: memref<1x64xf32, #tpu.memory_space<vmem>>, %arg13: memref<64x32xbf16, #tpu.memory_space<vmem>>, %arg14: memref<1x32xf32, #tpu.memory_space<vmem>>, %arg15: memref<1x32xf32, #tpu.memory_space<vmem>>, %arg16: memref<1x32xf32, #tpu.memory_space<vmem>>, %arg17: memref<1x8x32xf32, #tpu.memory_space<vmem>>) attributes {dimension_semantics = [#tpu.dimension_semantics<parallel>], iteration_bounds = array<i64: 2>, scalar_prefetch = 0 : i64, scratch_operands = 0 : i64, tpu.core_type = #tpu.core_type<tc>, window_params = [{transform_indices = @transform_0, window_bounds = array<i64: 1, 8, 32>}, {transform_indices = @transform_1, window_bounds = array<i64: 1, 8, 32>}, {pipeline_mode = #tpu.pipeline_mode<synchronous>, transform_indices = @transform_2, window_bounds = array<i64: 32, 64>}, {pipeline_mode = #tpu.pipeline_mode<synchronous>, transform_indices = @transform_3, window_bounds = array<i64: 1, 64>}, {pipeline_mode = #tpu.pipeline_mode<synchronous>, transform_indices = @transform_4, window_bounds = array<i64: 32, 32>}, {pipeline_mode = #tpu.pipeline_mode<synchronous>, transform_indices = @transform_5, window_bounds = array<i64: 1, 32>}, {pipeline_mode = #tpu.pipeline_mode<synchronous>, transform_indices = @transform_6, window_bounds = array<i64: 32, 32>}, {pipeline_mode = #tpu.pipeline_mode<synchronous>, transform_indices = @transform_7, window_bounds = array<i64: 1, 32>}, {pipeline_mode = #tpu.pipeline_mode<synchronous>, transform_indices = @transform_8, window_bounds = array<i64: 1, 32>}, {pipeline_mode = #tpu.pipeline_mode<synchronous>, transform_indices = @transform_9, window_bounds = array<i64: 1, 32>}, {pipeline_mode = #tpu.pipeline_mode<synchronous>, transform_indices = @transform_10, window_bounds = array<i64: 32, 64>}, {pipeline_mode = #tpu.pipeline_mode<synchronous>, transform_indices = @transform_11, window_bounds = array<i64: 1, 64>}, {pipeline_mode = #tpu.pipeline_mode<synchronous>, transform_indices = @transform_12, window_bounds = array<i64: 64, 32>}, {pipeline_mode = #tpu.pipeline_mode<synchronous>, transform_indices = @transform_13, window_bounds = array<i64: 1, 32>}, {pipeline_mode = #tpu.pipeline_mode<synchronous>, transform_indices = @transform_14, window_bounds = array<i64: 1, 32>}, {pipeline_mode = #tpu.pipeline_mode<synchronous>, transform_indices = @transform_15, window_bounds = array<i64: 1, 32>}, {transform_indices = @transform_16, window_bounds = array<i64: 1, 8, 32>}]} {
    %c0 = arith.constant 0 : index
    %c0_0 = arith.constant 0 : index
    %c0_1 = arith.constant 0 : index
    %0 = vector.load %arg1[%c0, %c0_0, %c0_1] : memref<1x8x32xf32, #tpu.memory_space<vmem>>, vector<1x8x32xf32>
    %c0_2 = arith.constant 0 : index
    %c0_3 = arith.constant 0 : index
    %c0_4 = arith.constant 0 : index
    %1 = vector.load %arg2[%c0_2, %c0_3, %c0_4] : memref<1x8x32xf32, #tpu.memory_space<vmem>>, vector<1x8x32xf32>
    %2 = arith.addf %0, %1 : vector<1x8x32xf32>
    %3 = vector.shape_cast %0 : vector<1x8x32xf32> to vector<8x32xf32>
    %4 = vector.shape_cast %2 : vector<1x8x32xf32> to vector<8x32xf32>
    %5 = arith.truncf %4 : vector<8x32xf32> to vector<8x32xbf16>
    %c0_5 = arith.constant 0 : index
    %c0_6 = arith.constant 0 : index
    %6 = vector.load %arg3[%c0_5, %c0_6] : memref<32x64xbf16, #tpu.memory_space<vmem>>, vector<32x64xbf16>
    %cst = arith.constant dense<0.000000e+00> : vector<8x64xf32>
    %7 = tpu.matmul %5, %6, %cst {dimension_numbers = #tpu.dot_dimension_numbers<[1], [0], [0], [1], [0, 0, 1, 1], [], []>} : vector<8x32xbf16>, vector<32x64xbf16>, vector<8x64xf32> -> vector<8x64xf32>
    %c0_7 = arith.constant 0 : index
    %c0_8 = arith.constant 0 : index
    %8 = vector.load %arg4[%c0_7, %c0_8] : memref<1x64xf32, #tpu.memory_space<vmem>>, vector<1x64xf32>
    %9 = vector.broadcast %8 : vector<1x64xf32> to vector<8x64xf32>
    %10 = arith.addf %7, %9 : vector<8x64xf32>
    %11 = arith.truncf %3 : vector<8x32xf32> to vector<8x32xbf16>
    %c0_9 = arith.constant 0 : index
    %c0_10 = arith.constant 0 : index
    %12 = vector.load %arg5[%c0_9, %c0_10] : memref<32x32xbf16, #tpu.memory_space<vmem>>, vector<32x32xbf16>
    %cst_11 = arith.constant dense<0.000000e+00> : vector<8x32xf32>
    %13 = tpu.matmul %11, %12, %cst_11 {dimension_numbers = #tpu.dot_dimension_numbers<[1], [0], [0], [1], [0, 0, 1, 1], [], []>} : vector<8x32xbf16>, vector<32x32xbf16>, vector<8x32xf32> -> vector<8x32xf32>
    %c0_12 = arith.constant 0 : index
    %c0_13 = arith.constant 0 : index
    %14 = vector.load %arg6[%c0_12, %c0_13] : memref<1x32xf32, #tpu.memory_space<vmem>>, vector<1x32xf32>
    %15 = vector.broadcast %14 : vector<1x32xf32> to vector<8x32xf32>
    %16 = arith.addf %13, %15 : vector<8x32xf32>
    %17 = vector.extract_strided_slice %10 {offsets = [0, 0], sizes = [8, 32], strides = [1, 1]} : vector<8x64xf32> to vector<8x32xf32>
    %cst_14 = arith.constant 0.353553385 : f32
    %18 = vector.broadcast %cst_14 : f32 to vector<8x32xf32>
    %19 = arith.mulf %17, %18 : vector<8x32xf32>
    %20 = arith.truncf %19 : vector<8x32xf32> to vector<8x32xbf16>
    %21 = vector.shape_cast %20 : vector<8x32xbf16> to vector<1x8x32xbf16>
    %22 = vector.extract_strided_slice %10 {offsets = [0, 32], sizes = [8, 32], strides = [1, 1]} : vector<8x64xf32> to vector<8x32xf32>
    %23 = arith.truncf %22 : vector<8x32xf32> to vector<8x32xbf16>
    %24 = vector.shape_cast %23 : vector<8x32xbf16> to vector<1x8x32xbf16>
    %25 = arith.truncf %16 : vector<8x32xf32> to vector<8x32xbf16>
    %26 = vector.shape_cast %25 : vector<8x32xbf16> to vector<1x8x32xbf16>
    %27 = vector.extract_strided_slice %21 {offsets = [0, 0, 0], sizes = [1, 8, 8], strides = [1, 1, 1]} : vector<1x8x32xbf16> to vector<1x8x8xbf16>
    %28 = vector.extract_strided_slice %21 {offsets = [0, 0, 8], sizes = [1, 8, 8], strides = [1, 1, 1]} : vector<1x8x32xbf16> to vector<1x8x8xbf16>
    %29 = vector.extract_strided_slice %21 {offsets = [0, 0, 16], sizes = [1, 8, 8], strides = [1, 1, 1]} : vector<1x8x32xbf16> to vector<1x8x8xbf16>
    %30 = vector.extract_strided_slice %21 {offsets = [0, 0, 24], sizes = [1, 8, 8], strides = [1, 1, 1]} : vector<1x8x32xbf16> to vector<1x8x8xbf16>
    %31 = tpu.concatenate %27, %28, %29, %30 in 0 : vector<1x8x8xbf16>, vector<1x8x8xbf16>, vector<1x8x8xbf16>, vector<1x8x8xbf16> -> vector<4x8x8xbf16>
    %32 = vector.extract_strided_slice %24 {offsets = [0, 0, 0], sizes = [1, 8, 8], strides = [1, 1, 1]} : vector<1x8x32xbf16> to vector<1x8x8xbf16>
    %33 = vector.extract_strided_slice %24 {offsets = [0, 0, 8], sizes = [1, 8, 8], strides = [1, 1, 1]} : vector<1x8x32xbf16> to vector<1x8x8xbf16>
    %34 = vector.extract_strided_slice %24 {offsets = [0, 0, 16], sizes = [1, 8, 8], strides = [1, 1, 1]} : vector<1x8x32xbf16> to vector<1x8x8xbf16>
    %35 = vector.extract_strided_slice %24 {offsets = [0, 0, 24], sizes = [1, 8, 8], strides = [1, 1, 1]} : vector<1x8x32xbf16> to vector<1x8x8xbf16>
    %36 = tpu.concatenate %32, %33, %34, %35 in 0 : vector<1x8x8xbf16>, vector<1x8x8xbf16>, vector<1x8x8xbf16>, vector<1x8x8xbf16> -> vector<4x8x8xbf16>
    %37 = vector.extract_strided_slice %26 {offsets = [0, 0, 0], sizes = [1, 8, 8], strides = [1, 1, 1]} : vector<1x8x32xbf16> to vector<1x8x8xbf16>
    %38 = vector.extract_strided_slice %26 {offsets = [0, 0, 8], sizes = [1, 8, 8], strides = [1, 1, 1]} : vector<1x8x32xbf16> to vector<1x8x8xbf16>
    %39 = vector.extract_strided_slice %26 {offsets = [0, 0, 16], sizes = [1, 8, 8], strides = [1, 1, 1]} : vector<1x8x32xbf16> to vector<1x8x8xbf16>
    %40 = vector.extract_strided_slice %26 {offsets = [0, 0, 24], sizes = [1, 8, 8], strides = [1, 1, 1]} : vector<1x8x32xbf16> to vector<1x8x8xbf16>
    %41 = tpu.concatenate %37, %38, %39, %40 in 0 : vector<1x8x8xbf16>, vector<1x8x8xbf16>, vector<1x8x8xbf16>, vector<1x8x8xbf16> -> vector<4x8x8xbf16>
    "tpu.trace_start"() <{level = 10 : i32, message = "bld,bmd->blm"}> : () -> ()
    %cst_15 = arith.constant dense<0.000000e+00> : vector<4x8x8xf32>
    %42 = tpu.matmul %31, %36, %cst_15 {dimension_numbers = #tpu.dot_dimension_numbers<[2], [2], [1], [1], [0, 0, 0, 1, 1, 1], [0], [0]>} : vector<4x8x8xbf16>, vector<4x8x8xbf16>, vector<4x8x8xf32> -> vector<4x8x8xf32>
    "tpu.trace_stop"() : () -> ()
    %cst_16 = arith.constant dense<0xFF800000> : vector<4x8xf32>
    %43 = vector.multi_reduction <maximumf>, %42, %cst_16 [2] : vector<4x8x8xf32> to vector<4x8xf32>
    %44 = vector.shape_cast %43 : vector<4x8xf32> to vector<4x8x1xf32>
    %45 = vector.broadcast %44 : vector<4x8x1xf32> to vector<4x8x8xf32>
    %46 = arith.subf %42, %45 : vector<4x8x8xf32>
    %47 = math.exp %46 : vector<4x8x8xf32>
    %cst_17 = arith.constant dense<0.000000e+00> : vector<4x8xf32>
    %48 = vector.multi_reduction <add>, %47, %cst_17 [2] : vector<4x8x8xf32> to vector<4x8xf32>
    %49 = vector.shape_cast %48 : vector<4x8xf32> to vector<4x8x1xf32>
    %50 = tpu.reciprocal %49 {approx = true} : vector<4x8x1xf32> -> vector<4x8x1xf32>
    %51 = vector.broadcast %50 : vector<4x8x1xf32> to vector<4x8x8xf32>
    %52 = arith.mulf %47, %51 : vector<4x8x8xf32>
    %53 = arith.truncf %52 : vector<4x8x8xf32> to vector<4x8x8xbf16>
    "tpu.trace_start"() <{level = 10 : i32, message = "blm,bmd->bld"}> : () -> ()
    %cst_18 = arith.constant dense<0.000000e+00> : vector<4x8x8xf32>
    %54 = tpu.matmul %53, %41, %cst_18 {dimension_numbers = #tpu.dot_dimension_numbers<[2], [1], [1], [2], [0, 0, 0, 1, 1, 2], [0], [0]>} : vector<4x8x8xbf16>, vector<4x8x8xbf16>, vector<4x8x8xf32> -> vector<4x8x8xf32>
    "tpu.trace_stop"() : () -> ()
    %55 = arith.truncf %54 : vector<4x8x8xf32> to vector<4x8x8xbf16>
    %56 = vector.extract_strided_slice %55 {offsets = [0, 0, 0], sizes = [1, 8, 8], strides = [1, 1, 1]} : vector<4x8x8xbf16> to vector<1x8x8xbf16>
    %57 = vector.extract_strided_slice %55 {offsets = [1, 0, 0], sizes = [1, 8, 8], strides = [1, 1, 1]} : vector<4x8x8xbf16> to vector<1x8x8xbf16>
    %58 = vector.extract_strided_slice %55 {offsets = [2, 0, 0], sizes = [1, 8, 8], strides = [1, 1, 1]} : vector<4x8x8xbf16> to vector<1x8x8xbf16>
    %59 = vector.extract_strided_slice %55 {offsets = [3, 0, 0], sizes = [1, 8, 8], strides = [1, 1, 1]} : vector<4x8x8xbf16> to vector<1x8x8xbf16>
    %60 = tpu.concatenate %56, %57, %58, %59 in 2 : vector<1x8x8xbf16>, vector<1x8x8xbf16>, vector<1x8x8xbf16>, vector<1x8x8xbf16> -> vector<1x8x32xbf16>
    %61 = vector.shape_cast %60 : vector<1x8x32xbf16> to vector<8x32xbf16>
    %c0_19 = arith.constant 0 : index
    %c0_20 = arith.constant 0 : index
    %62 = vector.load %arg7[%c0_19, %c0_20] : memref<32x32xbf16, #tpu.memory_space<vmem>>, vector<32x32xbf16>
    %cst_21 = arith.constant dense<0.000000e+00> : vector<8x32xf32>
    %63 = tpu.matmul %61, %62, %cst_21 {dimension_numbers = #tpu.dot_dimension_numbers<[1], [0], [0], [1], [0, 0, 1, 1], [], []>} : vector<8x32xbf16>, vector<32x32xbf16>, vector<8x32xf32> -> vector<8x32xf32>
    %c0_22 = arith.constant 0 : index
    %c0_23 = arith.constant 0 : index
    %64 = vector.load %arg8[%c0_22, %c0_23] : memref<1x32xf32, #tpu.memory_space<vmem>>, vector<1x32xf32>
    %65 = vector.broadcast %64 : vector<1x32xf32> to vector<8x32xf32>
    %66 = arith.addf %63, %65 : vector<8x32xf32>
    %67 = arith.addf %3, %66 : vector<8x32xf32>
    %cst_24 = arith.constant dense<0.000000e+00> : vector<8xf32>
    %68 = vector.multi_reduction <add>, %67, %cst_24 [1] : vector<8x32xf32> to vector<8xf32>
    %69 = vector.shape_cast %68 : vector<8xf32> to vector<8x1xf32>
    %cst_25 = arith.constant 3.200000e+01 : f32
    %70 = vector.broadcast %cst_25 : f32 to vector<8x1xf32>
    %71 = arith.divf %69, %70 : vector<8x1xf32>
    %72 = vector.broadcast %71 : vector<8x1xf32> to vector<8x32xf32>
    %73 = arith.subf %67, %72 : vector<8x32xf32>
    %74 = arith.mulf %73, %73 : vector<8x32xf32>
    %cst_26 = arith.constant dense<0.000000e+00> : vector<8xf32>
    %75 = vector.multi_reduction <add>, %74, %cst_26 [1] : vector<8x32xf32> to vector<8xf32>
    %76 = vector.shape_cast %75 : vector<8xf32> to vector<8x1xf32>
    %cst_27 = arith.constant 3.200000e+01 : f32
    %77 = vector.broadcast %cst_27 : f32 to vector<8x1xf32>
    %78 = arith.divf %76, %77 : vector<8x1xf32>
    %79 = vector.broadcast %71 : vector<8x1xf32> to vector<8x32xf32>
    %80 = arith.subf %67, %79 : vector<8x32xf32>
    %cst_28 = arith.constant 9.99999974E-6 : f32
    %81 = vector.broadcast %cst_28 : f32 to vector<8x1xf32>
    %82 = arith.addf %78, %81 : vector<8x1xf32>
    %83 = math.rsqrt %82 : vector<8x1xf32>
    %84 = vector.broadcast %83 : vector<8x1xf32> to vector<8x32xf32>
    %85 = arith.mulf %80, %84 : vector<8x32xf32>
    %c0_29 = arith.constant 0 : index
    %c0_30 = arith.constant 0 : index
    %86 = vector.load %arg9[%c0_29, %c0_30] : memref<1x32xf32, #tpu.memory_space<vmem>>, vector<1x32xf32>
    %87 = vector.broadcast %86 : vector<1x32xf32> to vector<8x32xf32>
    %88 = arith.mulf %85, %87 : vector<8x32xf32>
    %c0_31 = arith.constant 0 : index
    %c0_32 = arith.constant 0 : index
    %89 = vector.load %arg10[%c0_31, %c0_32] : memref<1x32xf32, #tpu.memory_space<vmem>>, vector<1x32xf32>
    %90 = vector.broadcast %89 : vector<1x32xf32> to vector<8x32xf32>
    %91 = arith.addf %88, %90 : vector<8x32xf32>
    %92 = arith.truncf %91 : vector<8x32xf32> to vector<8x32xbf16>
    %c0_33 = arith.constant 0 : index
    %c0_34 = arith.constant 0 : index
    %93 = vector.load %arg11[%c0_33, %c0_34] : memref<32x64xbf16, #tpu.memory_space<vmem>>, vector<32x64xbf16>
    %cst_35 = arith.constant dense<0.000000e+00> : vector<8x64xf32>
    %94 = tpu.matmul %92, %93, %cst_35 {dimension_numbers = #tpu.dot_dimension_numbers<[1], [0], [0], [1], [0, 0, 1, 1], [], []>} : vector<8x32xbf16>, vector<32x64xbf16>, vector<8x64xf32> -> vector<8x64xf32>
    %c0_36 = arith.constant 0 : index
    %c0_37 = arith.constant 0 : index
    %95 = vector.load %arg12[%c0_36, %c0_37] : memref<1x64xf32, #tpu.memory_space<vmem>>, vector<1x64xf32>
    %96 = vector.broadcast %95 : vector<1x64xf32> to vector<8x64xf32>
    %97 = arith.addf %94, %96 : vector<8x64xf32>
    %cst_38 = arith.constant 0.000000e+00 : f32
    %98 = vector.broadcast %cst_38 : f32 to vector<8x64xf32>
    %99 = arith.maximumf %97, %98 : vector<8x64xf32>
    %100 = arith.truncf %99 : vector<8x64xf32> to vector<8x64xbf16>
    %c0_39 = arith.constant 0 : index
    %c0_40 = arith.constant 0 : index
    %101 = vector.load %arg13[%c0_39, %c0_40] : memref<64x32xbf16, #tpu.memory_space<vmem>>, vector<64x32xbf16>
    %cst_41 = arith.constant dense<0.000000e+00> : vector<8x32xf32>
    %102 = tpu.matmul %100, %101, %cst_41 {dimension_numbers = #tpu.dot_dimension_numbers<[1], [0], [0], [1], [0, 0, 1, 1], [], []>} : vector<8x64xbf16>, vector<64x32xbf16>, vector<8x32xf32> -> vector<8x32xf32>
    %c0_42 = arith.constant 0 : index
    %c0_43 = arith.constant 0 : index
    %103 = vector.load %arg14[%c0_42, %c0_43] : memref<1x32xf32, #tpu.memory_space<vmem>>, vector<1x32xf32>
    %104 = vector.broadcast %103 : vector<1x32xf32> to vector<8x32xf32>
    %105 = arith.addf %102, %104 : vector<8x32xf32>
    %106 = arith.addf %91, %105 : vector<8x32xf32>
    %cst_44 = arith.constant dense<0.000000e+00> : vector<8xf32>
    %107 = vector.multi_reduction <add>, %106, %cst_44 [1] : vector<8x32xf32> to vector<8xf32>
    %108 = vector.shape_cast %107 : vector<8xf32> to vector<8x1xf32>
    %cst_45 = arith.constant 3.200000e+01 : f32
    %109 = vector.broadcast %cst_45 : f32 to vector<8x1xf32>
    %110 = arith.divf %108, %109 : vector<8x1xf32>
    %111 = vector.broadcast %110 : vector<8x1xf32> to vector<8x32xf32>
    %112 = arith.subf %106, %111 : vector<8x32xf32>
    %113 = arith.mulf %112, %112 : vector<8x32xf32>
    %cst_46 = arith.constant dense<0.000000e+00> : vector<8xf32>
    %114 = vector.multi_reduction <add>, %113, %cst_46 [1] : vector<8x32xf32> to vector<8xf32>
    %115 = vector.shape_cast %114 : vector<8xf32> to vector<8x1xf32>
    %cst_47 = arith.constant 3.200000e+01 : f32
    %116 = vector.broadcast %cst_47 : f32 to vector<8x1xf32>
    %117 = arith.divf %115, %116 : vector<8x1xf32>
    %118 = vector.broadcast %110 : vector<8x1xf32> to vector<8x32xf32>
    %119 = arith.subf %106, %118 : vector<8x32xf32>
    %cst_48 = arith.constant 9.99999974E-6 : f32
    %120 = vector.broadcast %cst_48 : f32 to vector<8x1xf32>
    %121 = arith.addf %117, %120 : vector<8x1xf32>
    %122 = math.rsqrt %121 : vector<8x1xf32>
    %123 = vector.broadcast %122 : vector<8x1xf32> to vector<8x32xf32>
    %124 = arith.mulf %119, %123 : vector<8x32xf32>
    %c0_49 = arith.constant 0 : index
    %c0_50 = arith.constant 0 : index
    %125 = vector.load %arg15[%c0_49, %c0_50] : memref<1x32xf32, #tpu.memory_space<vmem>>, vector<1x32xf32>
    %126 = vector.broadcast %125 : vector<1x32xf32> to vector<8x32xf32>
    %127 = arith.mulf %124, %126 : vector<8x32xf32>
    %c0_51 = arith.constant 0 : index
    %c0_52 = arith.constant 0 : index
    %128 = vector.load %arg16[%c0_51, %c0_52] : memref<1x32xf32, #tpu.memory_space<vmem>>, vector<1x32xf32>
    %129 = vector.broadcast %128 : vector<1x32xf32> to vector<8x32xf32>
    %130 = arith.addf %127, %129 : vector<8x32xf32>
    %131 = vector.shape_cast %130 : vector<8x32xf32> to vector<1x8x32xf32>
    %c0_53 = arith.constant 0 : index
    %c0_54 = arith.constant 0 : index
    %c0_55 = arith.constant 0 : index
    %132 = vector.load %arg17[%c0_53, %c0_54, %c0_55] : memref<1x8x32xf32, #tpu.memory_space<vmem>>, vector<1x8x32xf32>
    tpu.vector_store %arg17[%c0_53, %c0_54, %c0_55], %131 {strides = array<i32>} : memref<1x8x32xf32, #tpu.memory_space<vmem>>, vector<1x8x32xf32>,
    return
  }
  func.func @transform_0(%arg0: i32) -> (i32, i32, i32) {
    %c0_i32 = arith.constant 0 : i32
    %c0_i32_0 = arith.constant 0 : i32
    %c0_i32_1 = arith.constant 0 : i32
    return %arg0, %c0_i32, %c0_i32_0 : i32, i32, i32
  }
  func.func @transform_1(%arg0: i32) -> (i32, i32, i32) {
    %c0_i32 = arith.constant 0 : i32
    %c0_i32_0 = arith.constant 0 : i32
    %c0_i32_1 = arith.constant 0 : i32
    return %arg0, %c0_i32, %c0_i32_0 : i32, i32, i32
  }
  func.func @transform_2(%arg0: i32) -> (i32, i32) {
    %c0_i32 = arith.constant 0 : i32
    %c0_i32_0 = arith.constant 0 : i32
    %c0_i32_1 = arith.constant 0 : i32
    return %c0_i32, %c0_i32_0 : i32, i32
  }
  func.func @transform_3(%arg0: i32) -> (i32, i32) {
    %c0_i32 = arith.constant 0 : i32
    %c0_i32_0 = arith.constant 0 : i32
    %c0_i32_1 = arith.constant 0 : i32
    return %c0_i32, %c0_i32_0 : i32, i32
  }
  func.func @transform_4(%arg0: i32) -> (i32, i32) {
    %c0_i32 = arith.constant 0 : i32
    %c0_i32_0 = arith.constant 0 : i32
    %c0_i32_1 = arith.constant 0 : i32
    return %c0_i32, %c0_i32_0 : i32, i32
  }
  func.func @transform_5(%arg0: i32) -> (i32, i32) {
    %c0_i32 = arith.constant 0 : i32
    %c0_i32_0 = arith.constant 0 : i32
    %c0_i32_1 = arith.constant 0 : i32
    return %c0_i32, %c0_i32_0 : i32, i32
  }
  func.func @transform_6(%arg0: i32) -> (i32, i32) {
    %c0_i32 = arith.constant 0 : i32
    %c0_i32_0 = arith.constant 0 : i32
    %c0_i32_1 = arith.constant 0 : i32
    return %c0_i32, %c0_i32_0 : i32, i32
  }
  func.func @transform_7(%arg0: i32) -> (i32, i32) {
    %c0_i32 = arith.constant 0 : i32
    %c0_i32_0 = arith.constant 0 : i32
    %c0_i32_1 = arith.constant 0 : i32
    return %c0_i32, %c0_i32_0 : i32, i32
  }
  func.func @transform_8(%arg0: i32) -> (i32, i32) {
    %c0_i32 = arith.constant 0 : i32
    %c0_i32_0 = arith.constant 0 : i32
    %c0_i32_1 = arith.constant 0 : i32
    return %c0_i32, %c0_i32_0 : i32, i32
  }
  func.func @transform_9(%arg0: i32) -> (i32, i32) {
    %c0_i32 = arith.constant 0 : i32
    %c0_i32_0 = arith.constant 0 : i32
    %c0_i32_1 = arith.constant 0 : i32
    return %c0_i32, %c0_i32_0 : i32, i32
  }
  func.func @transform_10(%arg0: i32) -> (i32, i32) {
    %c0_i32 = arith.constant 0 : i32
    %c0_i32_0 = arith.constant 0 : i32
    %c0_i32_1 = arith.constant 0 : i32
    return %c0_i32, %c0_i32_0 : i32, i32
  }
  func.func @transform_11(%arg0: i32) -> (i32, i32) {
    %c0_i32 = arith.constant 0 : i32
    %c0_i32_0 = arith.constant 0 : i32
    %c0_i32_1 = arith.constant 0 : i32
    return %c0_i32, %c0_i32_0 : i32, i32
  }
  func.func @transform_12(%arg0: i32) -> (i32, i32) {
    %c0_i32 = arith.constant 0 : i32
    %c0_i32_0 = arith.constant 0 : i32
    %c0_i32_1 = arith.constant 0 : i32
    return %c0_i32, %c0_i32_0 : i32, i32
  }
  func.func @transform_13(%arg0: i32) -> (i32, i32) {
    %c0_i32 = arith.constant 0 : i32
    %c0_i32_0 = arith.constant 0 : i32
    %c0_i32_1 = arith.constant 0 : i32
    return %c0_i32, %c0_i32_0 : i32, i32
  }
  func.func @transform_14(%arg0: i32) -> (i32, i32) {
    %c0_i32 = arith.constant 0 : i32
    %c0_i32_0 = arith.constant 0 : i32
    %c0_i32_1 = arith.constant 0 : i32
    return %c0_i32, %c0_i32_0 : i32, i32
  }
  func.func @transform_15(%arg0: i32) -> (i32, i32) {
    %c0_i32 = arith.constant 0 : i32
    %c0_i32_0 = arith.constant 0 : i32
    %c0_i32_1 = arith.constant 0 : i32
    return %c0_i32, %c0_i32_0 : i32, i32
  }
  func.func @transform_16(%arg0: i32) -> (i32, i32, i32) {
    %c0_i32 = arith.constant 0 : i32
    %c0_i32_0 = arith.constant 0 : i32
    %c0_i32_1 = arith.constant 0 : i32
    return %arg0, %c0_i32, %c0_i32_0 : i32, i32, i32
  }
}

</mosaic_0001>

<llo_original>
// kernel: tpu_custom_call.1
$region0: #{tpu_custom_call.1}
  #allocation0 [shape = 'u32[]', space=smem, size = 0x4, offset = 0x4, fixed_abs, tag = 'smem constant byte address 0x4 - core index']
  #allocation1 [shape = 'u32[144,128]{1,0:T(1,128)}', space=vmem, size = 0x12000, scoped, tag = 'internal scratch']
  %s0 = inlined_call_operand.vmem [shape: f32[2,8,32], index: 0, kind: input, shape index: {}]
  %s1 = inlined_call_operand.vmem [shape: f32[2,8,32], index: 1, kind: input, shape index: {}]
  %s2 = inlined_call_operand.vmem [shape: bf16[32,64], index: 2, kind: input, shape index: {}]
  %s3 = inlined_call_operand.vmem [shape: f32[1,64], index: 3, kind: input, shape index: {}]
  %s4 = inlined_call_operand.hbm [shape: bf16[32,32], index: 4, kind: input, shape index: {}]
  %s5 = inlined_call_operand.vmem [shape: f32[1,32], index: 5, kind: input, shape index: {}]
  %s6 = inlined_call_operand.hbm [shape: bf16[32,32], index: 6, kind: input, shape index: {}]
  %s7 = inlined_call_operand.hbm [shape: f32[1,32], index: 7, kind: input, shape index: {}]
  %s8 = inlined_call_operand.hbm [shape: f32[1,32], index: 8, kind: input, shape index: {}]
  %s9 = inlined_call_operand.hbm [shape: f32[1,32], index: 9, kind: input, shape index: {}]
  %s10 = inlined_call_operand.vmem [shape: bf16[32,64], index: 10, kind: input, shape index: {}]
  %s11 = inlined_call_operand.vmem [shape: f32[1,64], index: 11, kind: input, shape index: {}]
  %s12 = inlined_call_operand.vmem [shape: bf16[64,32], index: 12, kind: input, shape index: {}]
  %s13 = inlined_call_operand.vmem [shape: f32[1,32], index: 13, kind: input, shape index: {}]
  %s14 = inlined_call_operand.vmem [shape: f32[1,32], index: 14, kind: input, shape index: {}]
  %s15 = inlined_call_operand.vmem [shape: f32[1,32], index: 15, kind: input, shape index: {}]
  %s16 = inlined_call_operand.hbm [shape: f32[2,8,32], index: 16, kind: output, shape index: {}]
  %s17 = sld [smem:[#allocation0]]
  $region117: #{tpu_custom_call.1} parent=0
    _
  %s19 = ssub.s32 1, %s17
  %s20 = scalar_select 0, %s19, %s17
  $region1: #{tpu_custom_call.1} parent=0
    #allocation2 [shape = 'u8[8192]{0}', space=vmem, size = 0x2000, scoped, tag = 'input window, operand 4, single buffered']
    #allocation3 [shape = 's32[2]{0}', space=sflag, size = 0x8, scoped, tag = 'scoped memory for tpu_custom_call.1']
    #allocation4 [shape = 's32[2]{0}', space=sflag, size = 0x8, scoped, tag = 'scoped memory for tpu_custom_call.1']
    #allocation5 [shape = 'u8[8192]{0}', space=vmem, size = 0x2000, scoped, tag = 'input window, operand 6, single buffered']
    #allocation6 [shape = 's32[1]{0}', space=sflag, size = 0x4, scoped, tag = 'scoped memory for tpu_custom_call.1']
    #allocation7 [shape = 'u8[512]{0}', space=vmem, size = 0x400, scoped, tag = 'input window, operand 7, single buffered']
    #allocation8 [shape = 'u8[512]{0}', space=vmem, size = 0x400, scoped, tag = 'input window, operand 8, single buffered']
    #allocation9 [shape = 's32[1]{0}', space=sflag, size = 0x4, scoped, tag = 'scoped memory for tpu_custom_call.1']
    #allocation10 [shape = 'u8[512]{0}', space=vmem, size = 0x400, scoped, tag = 'input window, operand 9, single buffered']
    #allocation11 [shape = 'u8[8192]{0}', space=vmem, size = 0x2000, scoped, tag = 'output window, operand 0']
    %21 = vsyncpa [#allocation3], 0
    %22 = vsyncpa [#allocation6], 0
    %23 = vsyncpa [#allocation9], 0
    %24 = vsyncpa [#allocation4], 0
    %s25 = scalar_lea.sflag [#allocation4], 1
    %26 = vsyncpa %s25, 0
    loop: start=0, step=1, limit=4
    $region2: #{tpu_custom_call.1} parent=1 // loop_pre_header
      _
    $region3: #{tpu_custom_call.1} parent=1 // loop_header
      %s28 = sphi 0, %s32
      %p29 = scmp.ge.s32.totalorder %s28, 4
      %s38 = sphi 0, %s40
      %s41 = sphi 0, %s38
      %s42 = sphi 0, %s41
      %s58 = sphi 0, %s42
      %s64 = sphi 0, %s66
      %s67 = sphi 0, %s64
      %s68 = sphi 0, %s67
      %s84 = sphi 0, %s68
      %s88 = sphi 0, %s88
      %s90 = sphi 0, %s88
      %s91 = sphi 0, %s90
      %s105 = sphi 0, %s91
      %s109 = sphi 0, %s109
      %s111 = sphi 0, %s109
      %s112 = sphi 0, %s111
      %s126 = sphi 0, %s112
      %s130 = sphi 0, %s130
      %s132 = sphi 0, %s130
      %s133 = sphi 0, %s132
      %s147 = sphi 0, %s133
      %s151 = sphi 0, %s151
      %s153 = sphi 0, %s151
      %s154 = sphi 0, %s153
      %s168 = sphi 0, %s154
      %s172 = sphi 0, %s172
      %s174 = sphi 0, %s172
      %s175 = sphi 0, %s174
      %s189 = sphi 0, %s175
      %s193 = sphi 0, %s193
      %s195 = sphi 0, %s193
      %s196 = sphi 0, %s195
      %s210 = sphi 0, %s196
      %s214 = sphi 0, %s214
      %s216 = sphi 0, %s214
      %s217 = sphi 0, %s216
      %s231 = sphi 0, %s217
      %s235 = sphi 0, %s235
      %s237 = sphi 0, %s235
      %s238 = sphi 0, %s237
      %s252 = sphi 0, %s238
      %s256 = sphi 0, %s256
      %s258 = sphi 0, %s256
      %s259 = sphi 0, %s258
      %s273 = sphi 0, %s259
      %s277 = sphi 0, %s277
      %s279 = sphi 0, %s277
      %s280 = sphi 0, %s279
      %s294 = sphi 0, %s280
      %s298 = sphi 0, %s298
      %s300 = sphi 0, %s298
      %s301 = sphi 0, %s300
      %s315 = sphi 0, %s301
      %s319 = sphi 0, %s319
      %s321 = sphi 0, %s319
      %s322 = sphi 0, %s321
      %s336 = sphi 0, %s322
      %s340 = sphi 0, %s340
      %s342 = sphi 0, %s340
      %s343 = sphi 0, %s342
      %s357 = sphi 0, %s343
      %s361 = sphi 0, %s361
      %s363 = sphi 0, %s361
      %s364 = sphi 0, %s363
      %s378 = sphi 0, %s364
      %s384 = sphi 0, %s386
      %s387 = sphi 0, %s384
      %s388 = sphi 0, %s387
      %s404 = sphi 0, %s388
    $region4: #{tpu_custom_call.1} parent=1 // loop_header_branch
      %31 = sbr.rel (%p29) target = $region8
    $region5: #{tpu_custom_call.1} parent=1 // loop_body
      %s33 = ssub.s32 %s28, 1
      %s34 = ssub.s32 %s28, 2
      %s35 = sadd.s32 %s28, 1
      %s36 = ssub.s32 %s28, %s35
      %p37 = scmp.eq.s32.totalorder %s36, 0
      %s39 = sadd.s32 %s38, 1
      %s40 = scalar_select %p37, %s38, %s39
      %p43 = pneg %p37
      %p44 = scmp.eq.s32.totalorder %s28, 1
      %p45 = por %p43, %p44
      %p46 = scmp.ne.s32.totalorder %s38, %s41
      %p47 = scmp.eq.s32.totalorder %s28, 0
      %p48 = por %p46, %p47
      %p49 = scmp.ne.s32.totalorder %s38, %s41
      %p50 = scmp.eq.s32.totalorder %s33, 1
      %p51 = por %p49, %p50
      %p52 = scmp.ne.s32.totalorder %s41, %s42
      %p53 = scmp.eq.s32.totalorder %s33, 0
      %p54 = por %p52, %p53
      %p55 = scmp.ne.s32.totalorder %s41, %s42
      %p56 = scmp.eq.s32.totalorder %s34, 1
      %p57 = por %p55, %p56
      %p59 = scmp.ne.s32.totalorder %s42, %s58
      %p60 = scmp.eq.s32.totalorder %s34, 0
      %p61 = por %p59, %p60
      %s62 = ssub.s32 %s28, %s35
      %p63 = scmp.eq.s32.totalorder %s62, 0
      %s65 = sadd.s32 %s64, 1
      %s66 = scalar_select %p63, %s64, %s65
      %p69 = pneg %p63
      %p70 = scmp.eq.s32.totalorder %s28, 1
      %p71 = por %p69, %p70
      %p72 = scmp.ne.s32.totalorder %s64, %s67
      %p73 = scmp.eq.s32.totalorder %s28, 0
      %p74 = por %p72, %p73
      %p75 = scmp.ne.s32.totalorder %s64, %s67
      %p76 = scmp.eq.s32.totalorder %s33, 1
      %p77 = por %p75, %p76
      %p78 = scmp.ne.s32.totalorder %s67, %s68
      %p79 = scmp.eq.s32.totalorder %s33, 0
      %p80 = por %p78, %p79
      %p81 = scmp.ne.s32.totalorder %s67, %s68
      %p82 = scmp.eq.s32.totalorder %s34, 1
      %p83 = por %p81, %p82
      %p85 = scmp.ne.s32.totalorder %s68, %s84
      %p86 = scmp.eq.s32.totalorder %s34, 0
      %p87 = por %p85, %p86
      %s89 = sadd.s32 %s88, 1
      %p92 = scmp.eq.s32.totalorder %s28, 1
      %p93 = scmp.ne.s32.totalorder %s88, %s90
      %p94 = scmp.eq.s32.totalorder %s28, 0
      %p95 = por %p93, %p94
      %p96 = scmp.ne.s32.totalorder %s88, %s90
      %p97 = scmp.eq.s32.totalorder %s33, 1
      %p98 = por %p96, %p97
      %p99 = scmp.ne.s32.totalorder %s90, %s91
      %p100 = scmp.eq.s32.totalorder %s33, 0
      %p101 = por %p99, %p100
      %p102 = scmp.ne.s32.totalorder %s90, %s91
      %p103 = scmp.eq.s32.totalorder %s34, 1
      %p104 = por %p102, %p103
      %p106 = scmp.ne.s32.totalorder %s91, %s105
      %p107 = scmp.eq.s32.totalorder %s34, 0
      %p108 = por %p106, %p107
      %s110 = sadd.s32 %s109, 1
      %p113 = scmp.eq.s32.totalorder %s28, 1
      %p114 = scmp.ne.s32.totalorder %s109, %s111
      %p115 = scmp.eq.s32.totalorder %s28, 0
      %p116 = por %p114, %p115
      %p117 = scmp.ne.s32.totalorder %s109, %s111
      %p118 = scmp.eq.s32.totalorder %s33, 1
      %p119 = por %p117, %p118
      %p120 = scmp.ne.s32.totalorder %s111, %s112
      %p121 = scmp.eq.s32.totalorder %s33, 0
      %p122 = por %p120, %p121
      %p123 = scmp.ne.s32.totalorder %s111, %s112
      %p124 = scmp.eq.s32.totalorder %s34, 1
      %p125 = por %p123, %p124
      %p127 = scmp.ne.s32.totalorder %s112, %s126
      %p128 = scmp.eq.s32.totalorder %s34, 0
      %p129 = por %p127, %p128
      %s131 = sadd.s32 %s130, 1
      %p134 = scmp.eq.s32.totalorder %s28, 1
      %p135 = scmp.ne.s32.totalorder %s130, %s132
      %p136 = scmp.eq.s32.totalorder %s28, 0
      %p137 = por %p135, %p136
      %p138 = scmp.ne.s32.totalorder %s130, %s132
      %p139 = scmp.eq.s32.totalorder %s33, 1
      %p140 = por %p138, %p139
      %p141 = scmp.ne.s32.totalorder %s132, %s133
      %p142 = scmp.eq.s32.totalorder %s33, 0
      %p143 = por %p141, %p142
      %p144 = scmp.ne.s32.totalorder %s132, %s133
      %p145 = scmp.eq.s32.totalorder %s34, 1
      %p146 = por %p144, %p145
      %p148 = scmp.ne.s32.totalorder %s133, %s147
      %p149 = scmp.eq.s32.totalorder %s34, 0
      %p150 = por %p148, %p149
      %s152 = sadd.s32 %s151, 1
      %p155 = scmp.eq.s32.totalorder %s28, 1
      %p156 = scmp.ne.s32.totalorder %s151, %s153
      %p157 = scmp.eq.s32.totalorder %s28, 0
      %p158 = por %p156, %p157
      %p159 = scmp.ne.s32.totalorder %s151, %s153
      %p160 = scmp.eq.s32.totalorder %s33, 1
      %p161 = por %p159, %p160
      %p162 = scmp.ne.s32.totalorder %s153, %s154
      %p163 = scmp.eq.s32.totalorder %s33, 0
      %p164 = por %p162, %p163
      %p165 = scmp.ne.s32.totalorder %s153, %s154
      %p166 = scmp.eq.s32.totalorder %s34, 1
      %p167 = por %p165, %p166
      %p169 = scmp.ne.s32.totalorder %s154, %s168
      %p170 = scmp.eq.s32.totalorder %s34, 0
      %p171 = por %p169, %p170
      %s173 = sadd.s32 %s172, 1
      %p176 = scmp.eq.s32.totalorder %s28, 1
      %p177 = scmp.ne.s32.totalorder %s172, %s174
      %p178 = scmp.eq.s32.totalorder %s28, 0
      %p179 = por %p177, %p178
      %p180 = scmp.ne.s32.totalorder %s172, %s174
      %p181 = scmp.eq.s32.totalorder %s33, 1
      %p182 = por %p180, %p181
      %p183 = scmp.ne.s32.totalorder %s174, %s175
      %p184 = scmp.eq.s32.totalorder %s33, 0
      %p185 = por %p183, %p184
      %p186 = scmp.ne.s32.totalorder %s174, %s175
      %p187 = scmp.eq.s32.totalorder %s34, 1
      %p188 = por %p186, %p187
      %p190 = scmp.ne.s32.totalorder %s175, %s189
      %p191 = scmp.eq.s32.totalorder %s34, 0
      %p192 = por %p190, %p191
      %s194 = sadd.s32 %s193, 1
      %p197 = scmp.eq.s32.totalorder %s28, 1
      %p198 = scmp.ne.s32.totalorder %s193, %s195
      %p199 = scmp.eq.s32.totalorder %s28, 0
      %p200 = por %p198, %p199
      %p201 = scmp.ne.s32.totalorder %s193, %s195
      %p202 = scmp.eq.s32.totalorder %s33, 1
      %p203 = por %p201, %p202
      %p204 = scmp.ne.s32.totalorder %s195, %s196
      %p205 = scmp.eq.s32.totalorder %s33, 0
      %p206 = por %p204, %p205
      %p207 = scmp.ne.s32.totalorder %s195, %s196
      %p208 = scmp.eq.s32.totalorder %s34, 1
      %p209 = por %p207, %p208
      %p211 = scmp.ne.s32.totalorder %s196, %s210
      %p212 = scmp.eq.s32.totalorder %s34, 0
      %p213 = por %p211, %p212
      %s215 = sadd.s32 %s214, 1
      %p218 = scmp.eq.s32.totalorder %s28, 1
      %p219 = scmp.ne.s32.totalorder %s214, %s216
      %p220 = scmp.eq.s32.totalorder %s28, 0
      %p221 = por %p219, %p220
      %p222 = scmp.ne.s32.totalorder %s214, %s216
      %p223 = scmp.eq.s32.totalorder %s33, 1
      %p224 = por %p222, %p223
      %p225 = scmp.ne.s32.totalorder %s216, %s217
      %p226 = scmp.eq.s32.totalorder %s33, 0
      %p227 = por %p225, %p226
      %p228 = scmp.ne.s32.totalorder %s216, %s217
      %p229 = scmp.eq.s32.totalorder %s34, 1
      %p230 = por %p228, %p229
      %p232 = scmp.ne.s32.totalorder %s217, %s231
      %p233 = scmp.eq.s32.totalorder %s34, 0
      %p234 = por %p232, %p233
      %s236 = sadd.s32 %s235, 1
      %p239 = scmp.eq.s32.totalorder %s28, 1
      %p240 = scmp.ne.s32.totalorder %s235, %s237
      %p241 = scmp.eq.s32.totalorder %s28, 0
      %p242 = por %p240, %p241
      %p243 = scmp.ne.s32.totalorder %s235, %s237
      %p244 = scmp.eq.s32.totalorder %s33, 1
      %p245 = por %p243, %p244
      %p246 = scmp.ne.s32.totalorder %s237, %s238
      %p247 = scmp.eq.s32.totalorder %s33, 0
      %p248 = por %p246, %p247
      %p249 = scmp.ne.s32.totalorder %s237, %s238
      %p250 = scmp.eq.s32.totalorder %s34, 1
      %p251 = por %p249, %p250
      %p253 = scmp.ne.s32.totalorder %s238, %s252
      %p254 = scmp.eq.s32.totalorder %s34, 0
      %p255 = por %p253, %p254
      %s257 = sadd.s32 %s256, 1
      %p260 = scmp.eq.s32.totalorder %s28, 1
      %p261 = scmp.ne.s32.totalorder %s256, %s258
      %p262 = scmp.eq.s32.totalorder %s28, 0
      %p263 = por %p261, %p262
      %p264 = scmp.ne.s32.totalorder %s256, %s258
      %p265 = scmp.eq.s32.totalorder %s33, 1
      %p266 = por %p264, %p265
      %p267 = scmp.ne.s32.totalorder %s258, %s259
      %p268 = scmp.eq.s32.totalorder %s33, 0
      %p269 = por %p267, %p268
      %p270 = scmp.ne.s32.totalorder %s258, %s259
      %p271 = scmp.eq.s32.totalorder %s34, 1
      %p272 = por %p270, %p271
      %p274 = scmp.ne.s32.totalorder %s259, %s273
      %p275 = scmp.eq.s32.totalorder %s34, 0
      %p276 = por %p274, %p275
      %s278 = sadd.s32 %s277, 1
      %p281 = scmp.eq.s32.totalorder %s28, 1
      %p282 = scmp.ne.s32.totalorder %s277, %s279
      %p283 = scmp.eq.s32.totalorder %s28, 0
      %p284 = por %p282, %p283
      %p285 = scmp.ne.s32.totalorder %s277, %s279
      %p286 = scmp.eq.s32.totalorder %s33, 1
      %p287 = por %p285, %p286
      %p288 = scmp.ne.s32.totalorder %s279, %s280
      %p289 = scmp.eq.s32.totalorder %s33, 0
      %p290 = por %p288, %p289
      %p291 = scmp.ne.s32.totalorder %s279, %s280
      %p292 = scmp.eq.s32.totalorder %s34, 1
      %p293 = por %p291, %p292
      %p295 = scmp.ne.s32.totalorder %s280, %s294
      %p296 = scmp.eq.s32.totalorder %s34, 0
      %p297 = por %p295, %p296
      %s299 = sadd.s32 %s298, 1
      %p302 = scmp.eq.s32.totalorder %s28, 1
      %p303 = scmp.ne.s32.totalorder %s298, %s300
      %p304 = scmp.eq.s32.totalorder %s28, 0
      %p305 = por %p303, %p304
      %p306 = scmp.ne.s32.totalorder %s298, %s300
      %p307 = scmp.eq.s32.totalorder %s33, 1
      %p308 = por %p306, %p307
      %p309 = scmp.ne.s32.totalorder %s300, %s301
      %p310 = scmp.eq.s32.totalorder %s33, 0
      %p311 = por %p309, %p310
      %p312 = scmp.ne.s32.totalorder %s300, %s301
      %p313 = scmp.eq.s32.totalorder %s34, 1
      %p314 = por %p312, %p313
      %p316 = scmp.ne.s32.totalorder %s301, %s315
      %p317 = scmp.eq.s32.totalorder %s34, 0
      %p318 = por %p316, %p317
      %s320 = sadd.s32 %s319, 1
      %p323 = scmp.eq.s32.totalorder %s28, 1
      %p324 = scmp.ne.s32.totalorder %s319, %s321
      %p325 = scmp.eq.s32.totalorder %s28, 0
      %p326 = por %p324, %p325
      %p327 = scmp.ne.s32.totalorder %s319, %s321
      %p328 = scmp.eq.s32.totalorder %s33, 1
      %p329 = por %p327, %p328
      %p330 = scmp.ne.s32.totalorder %s321, %s322
      %p331 = scmp.eq.s32.totalorder %s33, 0
      %p332 = por %p330, %p331
      %p333 = scmp.ne.s32.totalorder %s321, %s322
      %p334 = scmp.eq.s32.totalorder %s34, 1
      %p335 = por %p333, %p334
      %p337 = scmp.ne.s32.totalorder %s322, %s336
      %p338 = scmp.eq.s32.totalorder %s34, 0
      %p339 = por %p337, %p338
      %s341 = sadd.s32 %s340, 1
      %p344 = scmp.eq.s32.totalorder %s28, 1
      %p345 = scmp.ne.s32.totalorder %s340, %s342
      %p346 = scmp.eq.s32.totalorder %s28, 0
      %p347 = por %p345, %p346
      %p348 = scmp.ne.s32.totalorder %s340, %s342
      %p349 = scmp.eq.s32.totalorder %s33, 1
      %p350 = por %p348, %p349
      %p351 = scmp.ne.s32.totalorder %s342, %s343
      %p352 = scmp.eq.s32.totalorder %s33, 0
      %p353 = por %p351, %p352
      %p354 = scmp.ne.s32.totalorder %s342, %s343
      %p355 = scmp.eq.s32.totalorder %s34, 1
      %p356 = por %p354, %p355
      %p358 = scmp.ne.s32.totalorder %s343, %s357
      %p359 = scmp.eq.s32.totalorder %s34, 0
      %p360 = por %p358, %p359
      %s362 = sadd.s32 %s361, 1
      %p365 = scmp.eq.s32.totalorder %s28, 1
      %p366 = scmp.ne.s32.totalorder %s361, %s363
      %p367 = scmp.eq.s32.totalorder %s28, 0
      %p368 = por %p366, %p367
      %p369 = scmp.ne.s32.totalorder %s361, %s363
      %p370 = scmp.eq.s32.totalorder %s33, 1
      %p371 = por %p369, %p370
      %p372 = scmp.ne.s32.totalorder %s363, %s364
      %p373 = scmp.eq.s32.totalorder %s33, 0
      %p374 = por %p372, %p373
      %p375 = scmp.ne.s32.totalorder %s363, %s364
      %p376 = scmp.eq.s32.totalorder %s34, 1
      %p377 = por %p375, %p376
      %p379 = scmp.ne.s32.totalorder %s364, %s378
      %p380 = scmp.eq.s32.totalorder %s34, 0
      %p381 = por %p379, %p380
      %s382 = ssub.s32 %s28, %s35
      %p383 = scmp.eq.s32.totalorder %s382, 0
      %s385 = sadd.s32 %s384, 1
      %s386 = scalar_select %p383, %s384, %s385
      %p389 = pneg %p383
      %p390 = scmp.eq.s32.totalorder %s28, 1
      %p391 = por %p389, %p390
      %p392 = scmp.ne.s32.totalorder %s384, %s387
      %p393 = scmp.eq.s32.totalorder %s28, 0
      %p394 = por %p392, %p393
      %p395 = scmp.ne.s32.totalorder %s384, %s387
      %p396 = scmp.eq.s32.totalorder %s33, 1
      %p397 = por %p395, %p396
      %p398 = scmp.ne.s32.totalorder %s387, %s388
      %p399 = scmp.eq.s32.totalorder %s33, 0
      %p400 = por %p398, %p399
      %p401 = scmp.ne.s32.totalorder %s387, %s388
      %p402 = scmp.eq.s32.totalorder %s34, 1
      %p403 = por %p401, %p402
      %p405 = scmp.ne.s32.totalorder %s388, %s404
      %p406 = scmp.eq.s32.totalorder %s34, 0
      %p407 = por %p405, %p406
      %p408 = scmp.le.s32.totalorder 1, %s28
      %p409 = scmp.lt.s32.totalorder %s28, 3
      %p410 = pnand %p408, %p409
      %p411 = pneg %p410
      // Predicated region
      $region9: #{tpu_custom_call.1} parent=5 // pred_check
        _
      $region10: #{tpu_custom_call.1} parent=5 // pred_check_branch
        %413 = sbr.rel (%p410) target = $region12
      $region11: #{tpu_custom_call.1} parent=5 // pred_region
        %s414 = ssub.s32 %s28, 1
        // Predicated region
        $region13: #{tpu_custom_call.1} parent=11 // pred_check
          %p415 = pneg %p101
        $region14: #{tpu_custom_call.1} parent=11 // pred_check_branch
          %417 = sbr.rel (%p415) target = $region16
        $region15: #{tpu_custom_call.1} parent=11 // pred_region
          _
        $region16: #{tpu_custom_call.1} parent=11 // pred_fallthru
          _
        // Predicated region
        $region17: #{tpu_custom_call.1} parent=11 // pred_check
          %p418 = pneg %p122
        $region18: #{tpu_custom_call.1} parent=11 // pred_check_branch
          %420 = sbr.rel (%p418) target = $region20
        $region19: #{tpu_custom_call.1} parent=11 // pred_region
          _
        $region20: #{tpu_custom_call.1} parent=11 // pred_fallthru
          _
        // Predicated region
        $region21: #{tpu_custom_call.1} parent=11 // pred_check
          %p421 = pneg %p143
        $region22: #{tpu_custom_call.1} parent=11 // pred_check_branch
          %423 = sbr.rel (%p421) target = $region24
        $region23: #{tpu_custom_call.1} parent=11 // pred_region
          %s425 = ssub.s32 256, 256
          %426 = vsyncadd [#allocation3], %s425
          %s427 = sshll.u32 [#allocation2], 4
          %s428 = int_to_ptr.vmem [resolvable:$true] %s427
          %433 = dma.hbm_to_vmem [thread:$0]  %s4, 256, %s428, [#allocation3], 64, 64, 4
        $region24: #{tpu_custom_call.1} parent=11 // pred_fallthru
          _
        // Predicated region
        $region25: #{tpu_custom_call.1} parent=11 // pred_check
          %p434 = pneg %p164
        $region26: #{tpu_custom_call.1} parent=11 // pred_check_branch
          %436 = sbr.rel (%p434) target = $region28
        $region27: #{tpu_custom_call.1} parent=11 // pred_region
          _
        $region28: #{tpu_custom_call.1} parent=11 // pred_fallthru
          _
        // Predicated region
        $region29: #{tpu_custom_call.1} parent=11 // pred_check
          %p437 = pneg %p185
        $region30: #{tpu_custom_call.1} parent=11 // pred_check_branch
          %439 = sbr.rel (%p437) target = $region32
        $region31: #{tpu_custom_call.1} parent=11 // pred_region
          %s441 = ssub.s32 256, 256
          %442 = vsyncadd [#allocation6], %s441
          %s443 = sshll.u32 [#allocation5], 4
          %s444 = int_to_ptr.vmem [resolvable:$true] %s443
          %449 = dma.hbm_to_vmem [thread:$0]  %s6, 256, %s444, [#allocation6], 64, 64, 4
        $region32: #{tpu_custom_call.1} parent=11 // pred_fallthru
          _
        // Predicated region
        $region33: #{tpu_custom_call.1} parent=11 // pred_check
          %p450 = pneg %p206
        $region34: #{tpu_custom_call.1} parent=11 // pred_check_branch
          %452 = sbr.rel (%p450) target = $region36
        $region35: #{tpu_custom_call.1} parent=11 // pred_region
          %s454 = ssub.s32 16, 16
          %455 = vsyncadd [#allocation6], %s454
          %s457 = sshll.u32 [#allocation7], 4
          %s458 = int_to_ptr.vmem [resolvable:$true] %s457
          %460 = dma.hbm_to_vmem [thread:$0]  %s7, 16, %s458, [#allocation6]
        $region36: #{tpu_custom_call.1} parent=11 // pred_fallthru
          _
        // Predicated region
        $region37: #{tpu_custom_call.1} parent=11 // pred_check
          %p461 = pneg %p227
        $region38: #{tpu_custom_call.1} parent=11 // pred_check_branch
          %463 = sbr.rel (%p461) target = $region40
        $region39: #{tpu_custom_call.1} parent=11 // pred_region
          %s465 = ssub.s32 16, 16
          %466 = vsyncadd [#allocation9], %s465
          %s468 = sshll.u32 [#allocation8], 4
          %s469 = int_to_ptr.vmem [resolvable:$true] %s468
          %471 = dma.hbm_to_vmem [thread:$0]  %s8, 16, %s469, [#allocation9]
        $region40: #{tpu_custom_call.1} parent=11 // pred_fallthru
          _
        // Predicated region
        $region41: #{tpu_custom_call.1} parent=11 // pred_check
          %p472 = pneg %p248
        $region42: #{tpu_custom_call.1} parent=11 // pred_check_branch
          %474 = sbr.rel (%p472) target = $region44
        $region43: #{tpu_custom_call.1} parent=11 // pred_region
          %s476 = ssub.s32 16, 16
          %477 = vsyncadd [#allocation9], %s476
          %s479 = sshll.u32 [#allocation10], 4
          %s480 = int_to_ptr.vmem [resolvable:$true] %s479
          %482 = dma.hbm_to_vmem [thread:$0]  %s9, 16, %s480, [#allocation9]
        $region44: #{tpu_custom_call.1} parent=11 // pred_fallthru
          _
        // Predicated region
        $region45: #{tpu_custom_call.1} parent=11 // pred_check
          %p483 = pneg %p269
        $region46: #{tpu_custom_call.1} parent=11 // pred_check_branch
          %485 = sbr.rel (%p483) target = $region48
        $region47: #{tpu_custom_call.1} parent=11 // pred_region
          _
        $region48: #{tpu_custom_call.1} parent=11 // pred_fallthru
          _
        // Predicated region
        $region49: #{tpu_custom_call.1} parent=11 // pred_check
          %p486 = pneg %p290
        $region50: #{tpu_custom_call.1} parent=11 // pred_check_branch
          %488 = sbr.rel (%p486) target = $region52
        $region51: #{tpu_custom_call.1} parent=11 // pred_region
          _
        $region52: #{tpu_custom_call.1} parent=11 // pred_fallthru
          _
        // Predicated region
        $region53: #{tpu_custom_call.1} parent=11 // pred_check
          %p489 = pneg %p311
        $region54: #{tpu_custom_call.1} parent=11 // pred_check_branch
          %491 = sbr.rel (%p489) target = $region56
        $region55: #{tpu_custom_call.1} parent=11 // pred_region
          _
        $region56: #{tpu_custom_call.1} parent=11 // pred_fallthru
          _
        // Predicated region
        $region57: #{tpu_custom_call.1} parent=11 // pred_check
          %p492 = pneg %p332
        $region58: #{tpu_custom_call.1} parent=11 // pred_check_branch
          %494 = sbr.rel (%p492) target = $region60
        $region59: #{tpu_custom_call.1} parent=11 // pred_region
          _
        $region60: #{tpu_custom_call.1} parent=11 // pred_fallthru
          _
        // Predicated region
        $region61: #{tpu_custom_call.1} parent=11 // pred_check
          %p495 = pneg %p353
        $region62: #{tpu_custom_call.1} parent=11 // pred_check_branch
          %497 = sbr.rel (%p495) target = $region64
        $region63: #{tpu_custom_call.1} parent=11 // pred_region
          _
        $region64: #{tpu_custom_call.1} parent=11 // pred_fallthru
          _
        // Predicated region
        $region65: #{tpu_custom_call.1} parent=11 // pred_check
          %p498 = pneg %p374
        $region66: #{tpu_custom_call.1} parent=11 // pred_check_branch
          %500 = sbr.rel (%p498) target = $region68
        $region67: #{tpu_custom_call.1} parent=11 // pred_region
          _
        $region68: #{tpu_custom_call.1} parent=11 // pred_fallthru
          _
      $region12: #{tpu_custom_call.1} parent=5 // pred_fallthru
        _
      %p501 = scmp.lt.s32.totalorder %s28, 2
      // Predicated region
      $region69: #{tpu_custom_call.1} parent=5 // pred_check
        %p502 = pneg %p501
      $region70: #{tpu_custom_call.1} parent=5 // pred_check_branch
        %504 = sbr.rel (%p502) target = $region72
      $region71: #{tpu_custom_call.1} parent=5 // pred_region
        // Predicated region
        $region73: #{tpu_custom_call.1} parent=71 // pred_check
          %p505 = pneg %p48
        $region74: #{tpu_custom_call.1} parent=71 // pred_check_branch
          %507 = sbr.rel (%p505) target = $region76
        $region75: #{tpu_custom_call.1} parent=71 // pred_region
          %p508 = scmp.lt.s32.totalorder %s28, 1
          %s509 = scalar_select %p508, %s28, 1
          %s510 = smul.addr %s509, 8
          %s511 = scalar_lea.vmem %s0, %s510
        $region76: #{tpu_custom_call.1} parent=71 // pred_fallthru
          _
        // Predicated region
        $region77: #{tpu_custom_call.1} parent=71 // pred_check
          %p512 = pneg %p74
        $region78: #{tpu_custom_call.1} parent=71 // pred_check_branch
          %514 = sbr.rel (%p512) target = $region80
        $region79: #{tpu_custom_call.1} parent=71 // pred_region
          %p515 = scmp.lt.s32.totalorder %s28, 1
          %s516 = scalar_select %p515, %s28, 1
          %s517 = smul.addr %s516, 8
          %s518 = scalar_lea.vmem %s1, %s517
        $region80: #{tpu_custom_call.1} parent=71 // pred_fallthru
          _
      $region72: #{tpu_custom_call.1} parent=5 // pred_fallthru
        _
      %p519 = scmp.le.s32.totalorder 1, %s28
      %p520 = scmp.lt.s32.totalorder %s28, 3
      %p521 = pnand %p519, %p520
      %p522 = pneg %p521
      // Predicated region
      $region81: #{tpu_custom_call.1} parent=5 // pred_check
        _
      $region82: #{tpu_custom_call.1} parent=5 // pred_check_branch
        %524 = sbr.rel (%p521) target = $region84
      $region83: #{tpu_custom_call.1} parent=5 // pred_region
        %s525 = ssub.s32 %s28, 1
        // Predicated region
        $region85: #{tpu_custom_call.1} parent=83 // pred_check
          %p526 = pneg %p143
        $region86: #{tpu_custom_call.1} parent=83 // pred_check_branch
          %528 = sbr.rel (%p526) target = $region88
        $region87: #{tpu_custom_call.1} parent=83 // pred_region
          %529 = dma.done [#allocation3], 256
        $region88: #{tpu_custom_call.1} parent=83 // pred_fallthru
          _
        // Predicated region
        $region89: #{tpu_custom_call.1} parent=83 // pred_check
          %p530 = pneg %p185
        $region90: #{tpu_custom_call.1} parent=83 // pred_check_branch
          %532 = sbr.rel (%p530) target = $region92
        $region91: #{tpu_custom_call.1} parent=83 // pred_region
          %533 = dma.done [#allocation6], 256
        $region92: #{tpu_custom_call.1} parent=83 // pred_fallthru
          _
        // Predicated region
        $region93: #{tpu_custom_call.1} parent=83 // pred_check
          %p534 = pneg %p206
        $region94: #{tpu_custom_call.1} parent=83 // pred_check_branch
          %536 = sbr.rel (%p534) target = $region96
        $region95: #{tpu_custom_call.1} parent=83 // pred_region
          %537 = dma.done [#allocation6], 16
        $region96: #{tpu_custom_call.1} parent=83 // pred_fallthru
          _
        // Predicated region
        $region97: #{tpu_custom_call.1} parent=83 // pred_check
          %p538 = pneg %p227
        $region98: #{tpu_custom_call.1} parent=83 // pred_check_branch
          %540 = sbr.rel (%p538) target = $region100
        $region99: #{tpu_custom_call.1} parent=83 // pred_region
          %541 = dma.done [#allocation9], 16
        $region100: #{tpu_custom_call.1} parent=83 // pred_fallthru
          _
        // Predicated region
        $region101: #{tpu_custom_call.1} parent=83 // pred_check
          %p542 = pneg %p248
        $region102: #{tpu_custom_call.1} parent=83 // pred_check_branch
          %544 = sbr.rel (%p542) target = $region104
        $region103: #{tpu_custom_call.1} parent=83 // pred_region
          %545 = dma.done [#allocation9], 16
        $region104: #{tpu_custom_call.1} parent=83 // pred_fallthru
          _
        %p546 = scmp.lt.s32.totalorder %s33, 1
        %s547 = scalar_select %p546, %s33, 1
        %s548 = smul.addr %s547, 8
        %s549 = scalar_lea.vmem %s0, %s548
        %p550 = pneg %p54
        %p551 = pneg %p51
        %p552 = scmp.lt.s32.totalorder %s33, 1
        %s553 = scalar_select %p552, %s33, 1
        %s554 = smul.addr %s553, 8
        %s555 = scalar_lea.vmem %s1, %s554
        %p556 = pneg %p80
        %p557 = pneg %p77
        %p558 = pneg %p101
        %p559 = pneg %p98
        %p560 = pneg %p122
        %p561 = pneg %p119
        %p562 = pneg %p143
        %p563 = pneg %p140
        %p564 = pneg %p164
        %p565 = pneg %p161
        %p566 = pneg %p185
        %p567 = pneg %p182
        %p568 = pneg %p206
        %p569 = pneg %p203
        %p570 = pneg %p227
        %p571 = pneg %p224
        %p572 = pneg %p248
        %p573 = pneg %p245
        %p574 = pneg %p269
        %p575 = pneg %p266
        %p576 = pneg %p290
        %p577 = pneg %p287
        %p578 = pneg %p311
        %p579 = pneg %p308
        %p580 = pneg %p332
        %p581 = pneg %p329
        %p582 = pneg %p353
        %p583 = pneg %p350
        %p584 = pneg %p374
        %p585 = pneg %p371
        %p586 = pneg %p400
        %p587 = pneg %p397
        %s588 = sand.u32 %s387, 1
        %s589 = scalar_lea.sflag [#allocation4], %s588
        %s590 = sand.u32 %s387, 1
        %s591 = smul.addr %s590, 8
        %s592 = scalar_lea.vmem [#allocation11], %s591
        %p593 = scmp.lt.s32.totalorder %s33, 1
        %s594 = scalar_select %p593, %s33, 1
        %s595 = smul.addr %s594, 8
        %s596 = scalar_lea.vmem %s0, %s595
        %p597 = scmp.lt.s32.totalorder %s33, 1
        %s598 = scalar_select %p597, %s33, 1
        %s599 = smul.addr %s598, 8
        %s600 = scalar_lea.vmem %s1, %s599
        %v602 = vld [vmem:[%s596] sm:$0xff]
        %v603 = vld [vmem:[%s600] sm:$0xff]
        %v604 = vadd.f32 %v602, %v603
        %v605 = vpack.c.bf16 %v604, %v604
        %v606 = vld [vmem:[%s2] sm:$0xf]
        %v607 = vld [vmem:[%s2 + $0x4] sm:$0xf]
        %v608 = vld [vmem:[%s2 + $0x8] sm:$0xf]
        %v609 = vld [vmem:[%s2 + $0xc] sm:$0xf]
        %v610 = vld [vmem:[%s3] sm:$0x1]
        %v612 = vlaneseq
        %v613 = vshrl.u32 %v612, 7
        %v614 = vsub.s32 0, %v613
        %v615 = vrot.slane %v610, %v614
        %v621 = vunpack.c.l.b16 %v606
        %v622 = vunpack.c.l.b16 %v607
        %v623 = vunpack.c.l.b16 %v608
        %v624 = vunpack.c.l.b16 %v609
        %v625 = vpack.c.b16 %v622, %v621
        %v626 = vpack.c.b16 %v624, %v623
        %vm629 = vcmask 261120
        %v631 = vsel %vm629, %v605, 0
        %633 = vmatprep.subr.bf16.mxu0 0
        %634 = vmatpush1.bf16.msra.mxu0 %v625
        %635 = vmatprep.subr.bf16.mxu0 0
        %636 = vmatpush1.bf16.msra.mxu0 %v626
        %637 = vmatprep.subr.bf16.mxu0 0
        %638 = vmatpush1.bf16.msra.mxu0 0
        %639 = vmatprep.subr.bf16.mxu0 0
        %640 = vmatpush1.bf16.msra.mxu0 0
        %641 = vmatprep.subr.bf16.mxu0 0
        %642 = vmatpush1.bf16.msra.mxu0 0
        %643 = vmatprep.subr.bf16.mxu0 0
        %644 = vmatpush1.bf16.msra.mxu0 0
        %645 = vmatprep.subr.bf16.mxu0 0
        %646 = vmatpush1.bf16.msra.mxu0 0
        %647 = vmatprep.subr.bf16.mxu0 0
        %648 = vmatpush1.bf16.msra.mxu0 0
        %649 = vmatprep.subr.bf16.mxu0 0
        %650 = vmatpush1.bf16.msra.mxu0 0
        %651 = vmatprep.subr.bf16.mxu0 0
        %652 = vmatpush1.bf16.msra.mxu0 0
        %653 = vmatprep.subr.bf16.mxu0 0
        %654 = vmatpush1.bf16.msra.mxu0 0
        %655 = vmatprep.subr.bf16.mxu0 0
        %656 = vmatpush1.bf16.msra.mxu0 0
        %657 = vmatprep.subr.bf16.mxu0 0
        %658 = vmatpush1.bf16.msra.mxu0 0
        %659 = vmatprep.subr.bf16.mxu0 0
        %660 = vmatpush1.bf16.msra.mxu0 0
        %661 = vmatprep.subr.bf16.mxu0 0
        %662 = vmatpush1.bf16.msra.mxu0 0
        %663 = vmatprep.subr.bf16.mxu0 0
        %664 = vmatpush1.bf16.msra.mxu0 0
        %665 = vmatprep.mubr.bf16.mxu0 0
        %666 = vmatmul.mubr.bf16.gmra.mrb[0].mxu0 %v631
        %v667 = vpop.f32.mrb[0].mxu0
        %v668 = vadd.f32 %v615, %v667
        %v669 = vpop.f32.mrb[0].mxu0
        %v670 = vpop.f32.mrb[0].mxu0
        %v671 = vpop.f32.mrb[0].mxu0
        %672 = vdwg.mxu0
        %v673 = vpack.c.bf16 %v602, %v602
        %v674 = vld [vmem:[#allocation2] sm:$0xf]
        %v675 = vld [vmem:[#allocation2 + $0x4] sm:$0xf]
        %v676 = vld [vmem:[#allocation2 + $0x8] sm:$0xf]
        %v677 = vld [vmem:[#allocation2 + $0xc] sm:$0xf]
        %v678 = vld [vmem:[%s5] sm:$0x1]
        %v680 = vlaneseq
        %v681 = vshrl.u32 %v680, 7
        %v682 = vsub.s32 0, %v681
        %v683 = vrot.slane %v678, %v682
        %v689 = vunpack.c.l.b16 %v674
        %v690 = vunpack.c.l.b16 %v675
        %v691 = vunpack.c.l.b16 %v676
        %v692 = vunpack.c.l.b16 %v677
        %v693 = vpack.c.b16 %v690, %v689
        %v694 = vpack.c.b16 %v692, %v691
        %v698 = vsel %vm629, %v673, 0
        %700 = vmatprep.subr.bf16.mxu0 0
        %701 = vmatpush1.bf16.msra.mxu0 %v693
        %702 = vmatprep.subr.bf16.mxu0 0
        %703 = vmatpush1.bf16.msra.mxu0 %v694
        %704 = vmatprep.subr.bf16.mxu0 0
        %705 = vmatpush1.bf16.msra.mxu0 0
        %706 = vmatprep.subr.bf16.mxu0 0
        %707 = vmatpush1.bf16.msra.mxu0 0
        %708 = vmatprep.subr.bf16.mxu0 0
        %709 = vmatpush1.bf16.msra.mxu0 0
        %710 = vmatprep.subr.bf16.mxu0 0
        %711 = vmatpush1.bf16.msra.mxu0 0
        %712 = vmatprep.subr.bf16.mxu0 0
        %713 = vmatpush1.bf16.msra.mxu0 0
        %714 = vmatprep.subr.bf16.mxu0 0
        %715 = vmatpush1.bf16.msra.mxu0 0
        %716 = vmatprep.subr.bf16.mxu0 0
        %717 = vmatpush1.bf16.msra.mxu0 0
        %718 = vmatprep.subr.bf16.mxu0 0
        %719 = vmatpush1.bf16.msra.mxu0 0
        %720 = vmatprep.subr.bf16.mxu0 0
        %721 = vmatpush1.bf16.msra.mxu0 0
        %722 = vmatprep.subr.bf16.mxu0 0
        %723 = vmatpush1.bf16.msra.mxu0 0
        %724 = vmatprep.subr.bf16.mxu0 0
        %725 = vmatpush1.bf16.msra.mxu0 0
        %726 = vmatprep.subr.bf16.mxu0 0
        %727 = vmatpush1.bf16.msra.mxu0 0
        %728 = vmatprep.subr.bf16.mxu0 0
        %729 = vmatpush1.bf16.msra.mxu0 0
        %730 = vmatprep.subr.bf16.mxu0 0
        %731 = vmatpush1.bf16.msra.mxu0 0
        %732 = vmatprep.mubr.bf16.mxu0 0
        %733 = vmatmul.mubr.bf16.gmra.mrb[0].mxu0 %v698
        %v734 = vpop.f32.mrb[0].mxu0
        %v735 = vadd.f32 %v683, %v734
        %v736 = vpop.f32.mrb[0].mxu0
        %v737 = vpop.f32.mrb[0].mxu0
        %v738 = vpop.f32.mrb[0].mxu0
        %739 = vdwg.mxu0
        %v740 = vmul.f32 %v668, 0.35355338
        %v741 = vpack.c.bf16 %v740, %v740
        %v742 = vpack.c.bf16 %v668, %v668
        %v743 = vpack.c.bf16 %v735, %v735
        %745 = vrot.lane.b32.xlu0 %v741, 120
        %v746 = vpop.permute.xlu0 %745
        %747 = vrot.lane.b32.xlu0 %v741, 112
        %v748 = vpop.permute.xlu0 %747
        %749 = vrot.lane.b32.xlu0 %v741, 104
        %v750 = vpop.permute.xlu0 %749
        %752 = vrot.lane.b32.xlu0 %v742, 120
        %v753 = vpop.permute.xlu0 %752
        %754 = vrot.lane.b32.xlu0 %v742, 112
        %v755 = vpop.permute.xlu0 %754
        %756 = vrot.lane.b32.xlu0 %v742, 104
        %v757 = vpop.permute.xlu0 %756
        %759 = vrot.lane.b32.xlu0 %v743, 120
        %v760 = vpop.permute.xlu0 %759
        %761 = vrot.lane.b32.xlu0 %v743, 112
        %v762 = vpop.permute.xlu0 %761
        %763 = vrot.lane.b32.xlu0 %v743, 104
        %v764 = vpop.permute.xlu0 %763
        %765 = vrot.lane.b32.xlu0 %v742, 96
        %v766 = vpop.permute.xlu0 %765
        %vm767 = vcmask 64512
        %v769 = vsel %vm767, %v741, 0
        %v772 = vsel %vm767, %v766, 0
        %774 = vmatprep.subr.bf16.mxu0 0
        %775 = vmatpush1.bf16.xpose.msra.mxu0 %v772
        %776 = vmatprep.subr.bf16.mxu0 0
        %777 = vmatpush1.bf16.xpose.msra.mxu0 0
        %778 = vmatprep.subr.bf16.mxu0 0
        %779 = vmatpush1.bf16.xpose.msra.mxu0 0
        %780 = vmatprep.subr.bf16.mxu0 0
        %781 = vmatpush1.bf16.xpose.msra.mxu0 0
        %782 = vmatprep.subr.bf16.mxu0 0
        %783 = vmatpush1.bf16.xpose.msra.mxu0 0
        %784 = vmatprep.subr.bf16.mxu0 0
        %785 = vmatpush1.bf16.xpose.msra.mxu0 0
        %786 = vmatprep.subr.bf16.mxu0 0
        %787 = vmatpush1.bf16.xpose.msra.mxu0 0
        %788 = vmatprep.subr.bf16.mxu0 0
        %789 = vmatpush1.bf16.xpose.msra.mxu0 0
        %790 = vmatprep.subr.bf16.mxu0 0
        %791 = vmatpush1.bf16.xpose.msra.mxu0 0
        %792 = vmatprep.subr.bf16.mxu0 0
        %793 = vmatpush1.bf16.xpose.msra.mxu0 0
        %794 = vmatprep.subr.bf16.mxu0 0
        %795 = vmatpush1.bf16.xpose.msra.mxu0 0
        %796 = vmatprep.subr.bf16.mxu0 0
        %797 = vmatpush1.bf16.xpose.msra.mxu0 0
        %798 = vmatprep.subr.bf16.mxu0 0
        %799 = vmatpush1.bf16.xpose.msra.mxu0 0
        %800 = vmatprep.subr.bf16.mxu0 0
        %801 = vmatpush1.bf16.xpose.msra.mxu0 0
        %802 = vmatprep.subr.bf16.mxu0 0
        %803 = vmatpush1.bf16.xpose.msra.mxu0 0
        %804 = vmatprep.subr.bf16.mxu0 0
        %805 = vmatpush1.bf16.xpose.msra.mxu0 0
        %806 = vmatprep.mubr.bf16.mxu0 0
        %807 = vmatmul.mubr.bf16.gmra.mrb[0].mxu0 %v769
        %v808 = vpop.f32.mrb[0].mxu0
        %v809 = vadd.f32 0.0, %v808
        %v810 = vpop.f32.mrb[0].mxu0
        %v811 = vpop.f32.mrb[0].mxu0
        %v812 = vpop.f32.mrb[0].mxu0
        %813 = vdwg.mxu0
        %814 = vrot.lane.b32.xlu0 %v753, 96
        %v815 = vpop.permute.xlu0 %814
        %v817 = vsel %vm767, %v746, 0
        %v820 = vsel %vm767, %v815, 0
        %822 = vmatprep.subr.bf16.mxu0 0
        %823 = vmatpush1.bf16.xpose.msra.mxu0 %v820
        %824 = vmatprep.subr.bf16.mxu0 0
        %825 = vmatpush1.bf16.xpose.msra.mxu0 0
        %826 = vmatprep.subr.bf16.mxu0 0
        %827 = vmatpush1.bf16.xpose.msra.mxu0 0
        %828 = vmatprep.subr.bf16.mxu0 0
        %829 = vmatpush1.bf16.xpose.msra.mxu0 0
        %830 = vmatprep.subr.bf16.mxu0 0
        %831 = vmatpush1.bf16.xpose.msra.mxu0 0
        %832 = vmatprep.subr.bf16.mxu0 0
        %833 = vmatpush1.bf16.xpose.msra.mxu0 0
        %834 = vmatprep.subr.bf16.mxu0 0
        %835 = vmatpush1.bf16.xpose.msra.mxu0 0
        %836 = vmatprep.subr.bf16.mxu0 0
        %837 = vmatpush1.bf16.xpose.msra.mxu0 0
        %838 = vmatprep.subr.bf16.mxu0 0
        %839 = vmatpush1.bf16.xpose.msra.mxu0 0
        %840 = vmatprep.subr.bf16.mxu0 0
        %841 = vmatpush1.bf16.xpose.msra.mxu0 0
        %842 = vmatprep.subr.bf16.mxu0 0
        %843 = vmatpush1.bf16.xpose.msra.mxu0 0
        %844 = vmatprep.subr.bf16.mxu0 0
        %845 = vmatpush1.bf16.xpose.msra.mxu0 0
        %846 = vmatprep.subr.bf16.mxu0 0
        %847 = vmatpush1.bf16.xpose.msra.mxu0 0
        %848 = vmatprep.subr.bf16.mxu0 0
        %849 = vmatpush1.bf16.xpose.msra.mxu0 0
        %850 = vmatprep.subr.bf16.mxu0 0
        %851 = vmatpush1.bf16.xpose.msra.mxu0 0
        %852 = vmatprep.subr.bf16.mxu0 0
        %853 = vmatpush1.bf16.xpose.msra.mxu0 0
        %854 = vmatprep.mubr.bf16.mxu0 0
        %855 = vmatmul.mubr.bf16.gmra.mrb[0].mxu0 %v817
        %v856 = vpop.f32.mrb[0].mxu0
        %v857 = vadd.f32 0.0, %v856
        %v858 = vpop.f32.mrb[0].mxu0
        %v859 = vpop.f32.mrb[0].mxu0
        %v860 = vpop.f32.mrb[0].mxu0
        %861 = vdwg.mxu0
        %862 = vrot.lane.b32.xlu0 %v755, 96
        %v863 = vpop.permute.xlu0 %862
        %v865 = vsel %vm767, %v748, 0
        %v868 = vsel %vm767, %v863, 0
        %870 = vmatprep.subr.bf16.mxu0 0
        %871 = vmatpush1.bf16.xpose.msra.mxu0 %v868
        %872 = vmatprep.subr.bf16.mxu0 0
        %873 = vmatpush1.bf16.xpose.msra.mxu0 0
        %874 = vmatprep.subr.bf16.mxu0 0
        %875 = vmatpush1.bf16.xpose.msra.mxu0 0
        %876 = vmatprep.subr.bf16.mxu0 0
        %877 = vmatpush1.bf16.xpose.msra.mxu0 0
        %878 = vmatprep.subr.bf16.mxu0 0
        %879 = vmatpush1.bf16.xpose.msra.mxu0 0
        %880 = vmatprep.subr.bf16.mxu0 0
        %881 = vmatpush1.bf16.xpose.msra.mxu0 0
        %882 = vmatprep.subr.bf16.mxu0 0
        %883 = vmatpush1.bf16.xpose.msra.mxu0 0
        %884 = vmatprep.subr.bf16.mxu0 0
        %885 = vmatpush1.bf16.xpose.msra.mxu0 0
        %886 = vmatprep.subr.bf16.mxu0 0
        %887 = vmatpush1.bf16.xpose.msra.mxu0 0
        %888 = vmatprep.subr.bf16.mxu0 0
        %889 = vmatpush1.bf16.xpose.msra.mxu0 0
        %890 = vmatprep.subr.bf16.mxu0 0
        %891 = vmatpush1.bf16.xpose.msra.mxu0 0
        %892 = vmatprep.subr.bf16.mxu0 0
        %893 = vmatpush1.bf16.xpose.msra.mxu0 0
        %894 = vmatprep.subr.bf16.mxu0 0
        %895 = vmatpush1.bf16.xpose.msra.mxu0 0
        %896 = vmatprep.subr.bf16.mxu0 0
        %897 = vmatpush1.bf16.xpose.msra.mxu0 0
        %898 = vmatprep.subr.bf16.mxu0 0
        %899 = vmatpush1.bf16.xpose.msra.mxu0 0
        %900 = vmatprep.subr.bf16.mxu0 0
        %901 = vmatpush1.bf16.xpose.msra.mxu0 0
        %902 = vmatprep.mubr.bf16.mxu0 0
        %903 = vmatmul.mubr.bf16.gmra.mrb[0].mxu0 %v865
        %v904 = vpop.f32.mrb[0].mxu0
        %v905 = vadd.f32 0.0, %v904
        %v906 = vpop.f32.mrb[0].mxu0
        %v907 = vpop.f32.mrb[0].mxu0
        %v908 = vpop.f32.mrb[0].mxu0
        %909 = vdwg.mxu0
        %910 = vrot.lane.b32.xlu0 %v757, 96
        %v911 = vpop.permute.xlu0 %910
        %v913 = vsel %vm767, %v750, 0
        %v916 = vsel %vm767, %v911, 0
        %918 = vmatprep.subr.bf16.mxu0 0
        %919 = vmatpush1.bf16.xpose.msra.mxu0 %v916
        %920 = vmatprep.subr.bf16.mxu0 0
        %921 = vmatpush1.bf16.xpose.msra.mxu0 0
        %922 = vmatprep.subr.bf16.mxu0 0
        %923 = vmatpush1.bf16.xpose.msra.mxu0 0
        %924 = vmatprep.subr.bf16.mxu0 0
        %925 = vmatpush1.bf16.xpose.msra.mxu0 0
        %926 = vmatprep.subr.bf16.mxu0 0
        %927 = vmatpush1.bf16.xpose.msra.mxu0 0
        %928 = vmatprep.subr.bf16.mxu0 0
        %929 = vmatpush1.bf16.xpose.msra.mxu0 0
        %930 = vmatprep.subr.bf16.mxu0 0
        %931 = vmatpush1.bf16.xpose.msra.mxu0 0
        %932 = vmatprep.subr.bf16.mxu0 0
        %933 = vmatpush1.bf16.xpose.msra.mxu0 0
        %934 = vmatprep.subr.bf16.mxu0 0
        %935 = vmatpush1.bf16.xpose.msra.mxu0 0
        %936 = vmatprep.subr.bf16.mxu0 0
        %937 = vmatpush1.bf16.xpose.msra.mxu0 0
        %938 = vmatprep.subr.bf16.mxu0 0
        %939 = vmatpush1.bf16.xpose.msra.mxu0 0
        %940 = vmatprep.subr.bf16.mxu0 0
        %941 = vmatpush1.bf16.xpose.msra.mxu0 0
        %942 = vmatprep.subr.bf16.mxu0 0
        %943 = vmatpush1.bf16.xpose.msra.mxu0 0
        %944 = vmatprep.subr.bf16.mxu0 0
        %945 = vmatpush1.bf16.xpose.msra.mxu0 0
        %946 = vmatprep.subr.bf16.mxu0 0
        %947 = vmatpush1.bf16.xpose.msra.mxu0 0
        %948 = vmatprep.subr.bf16.mxu0 0
        %949 = vmatpush1.bf16.xpose.msra.mxu0 0
        %950 = vmatprep.mubr.bf16.mxu0 0
        %951 = vmatmul.mubr.bf16.gmra.mrb[0].mxu0 %v913
        %v952 = vpop.f32.mrb[0].mxu0
        %v953 = vadd.f32 0.0, %v952
        %v954 = vpop.f32.mrb[0].mxu0
        %v955 = vpop.f32.mrb[0].mxu0
        %v956 = vpop.f32.mrb[0].mxu0
        %957 = vdwg.mxu0
        %v958 = vsel %vm767, %v809, -inf
        %959 = vmax.xlane.f32.xlu0 %v958
        %v960 = vpop.xlane.xlu0 %959
        %v961 = vsel %vm767, %v857, -inf
        %962 = vmax.xlane.f32.xlu0 %v961
        %v963 = vpop.xlane.xlu0 %962
        %v964 = vsel %vm767, %v905, -inf
        %965 = vmax.xlane.f32.xlu0 %v964
        %v966 = vpop.xlane.xlu0 %965
        %v967 = vsel %vm767, %v953, -inf
        %968 = vmax.xlane.f32.xlu0 %v967
        %v969 = vpop.xlane.xlu0 %968
        %v970 = vsub.f32 %v809, %v960
        %v971 = vsub.f32 %v857, %v963
        %v972 = vsub.f32 %v905, %v966
        %v973 = vsub.f32 %v953, %v969
        %v974 = vmul.f32 %v970, 1.442695
        %v975 = vpow.pop %v974
        %v976 = vmul.f32 %v971, 1.442695
        %v977 = vpow.pop %v976
        %v978 = vmul.f32 %v972, 1.442695
        %v979 = vpow.pop %v978
        %v980 = vmul.f32 %v973, 1.442695
        %v981 = vpow.pop %v980
        %v982 = vsel %vm767, %v975, 0.0
        %983 = vadd.xlane.f32.xlu0 %v982
        %v984 = vpop.xlane.xlu0 %983
        %v985 = vsel %vm767, %v977, 0.0
        %986 = vadd.xlane.f32.xlu0 %v985
        %v987 = vpop.xlane.xlu0 %986
        %v988 = vsel %vm767, %v979, 0.0
        %989 = vadd.xlane.f32.xlu0 %v988
        %v990 = vpop.xlane.xlu0 %989
        %v991 = vsel %vm767, %v981, 0.0
        %992 = vadd.xlane.f32.xlu0 %v991
        %v993 = vpop.xlane.xlu0 %992
        %v994 = vrcp.pop %v984
        %v995 = vrcp.pop %v987
        %v996 = vrcp.pop %v990
        %v997 = vrcp.pop %v993
        %v998 = vmul.f32 %v975, %v994
        %v999 = vmul.f32 %v977, %v995
        %v1000 = vmul.f32 %v979, %v996
        %v1001 = vmul.f32 %v981, %v997
        %v1002 = vpack.c.bf16 %v998, %v998
        %v1003 = vpack.c.bf16 %v999, %v999
        %v1004 = vpack.c.bf16 %v1000, %v1000
        %v1005 = vpack.c.bf16 %v1001, %v1001
        %v1007 = vsel %vm767, %v1002, 0
        %vm1009 = vcmask 1043456
        %v1011 = vsel %vm1009, %v743, 0
        %1013 = vmatprep.subr.bf16.mxu0 0
        %1014 = vmatpush1.bf16.msra.mxu0 %v1011
        %1015 = vmatprep.subr.bf16.mxu0 0
        %1016 = vmatpush1.bf16.msra.mxu0 0
        %1017 = vmatprep.subr.bf16.mxu0 0
        %1018 = vmatpush1.bf16.msra.mxu0 0
        %1019 = vmatprep.subr.bf16.mxu0 0
        %1020 = vmatpush1.bf16.msra.mxu0 0
        %1021 = vmatprep.subr.bf16.mxu0 0
        %1022 = vmatpush1.bf16.msra.mxu0 0
        %1023 = vmatprep.subr.bf16.mxu0 0
        %1024 = vmatpush1.bf16.msra.mxu0 0
        %1025 = vmatprep.subr.bf16.mxu0 0
        %1026 = vmatpush1.bf16.msra.mxu0 0
        %1027 = vmatprep.subr.bf16.mxu0 0
        %1028 = vmatpush1.bf16.msra.mxu0 0
        %1029 = vmatprep.subr.bf16.mxu0 0
        %1030 = vmatpush1.bf16.msra.mxu0 0
        %1031 = vmatprep.subr.bf16.mxu0 0
        %1032 = vmatpush1.bf16.msra.mxu0 0
        %1033 = vmatprep.subr.bf16.mxu0 0
        %1034 = vmatpush1.bf16.msra.mxu0 0
        %1035 = vmatprep.subr.bf16.mxu0 0
        %1036 = vmatpush1.bf16.msra.mxu0 0
        %1037 = vmatprep.subr.bf16.mxu0 0
        %1038 = vmatpush1.bf16.msra.mxu0 0
        %1039 = vmatprep.subr.bf16.mxu0 0
        %1040 = vmatpush1.bf16.msra.mxu0 0
        %1041 = vmatprep.subr.bf16.mxu0 0
        %1042 = vmatpush1.bf16.msra.mxu0 0
        %1043 = vmatprep.subr.bf16.mxu0 0
        %1044 = vmatpush1.bf16.msra.mxu0 0
        %1045 = vmatprep.mubr.bf16.mxu0 0
        %1046 = vmatmul.mubr.bf16.gmra.mrb[0].mxu0 %v1007
        %v1047 = vpop.f32.mrb[0].mxu0
        %v1048 = vadd.f32 0.0, %v1047
        %v1049 = vpop.f32.mrb[0].mxu0
        %v1050 = vpop.f32.mrb[0].mxu0
        %v1051 = vpop.f32.mrb[0].mxu0
        %1052 = vdwg.mxu0
        %v1054 = vsel %vm767, %v1003, 0
        %v1057 = vsel %vm1009, %v760, 0
        %1059 = vmatprep.subr.bf16.mxu0 0
        %1060 = vmatpush1.bf16.msra.mxu0 %v1057
        %1061 = vmatprep.subr.bf16.mxu0 0
        %1062 = vmatpush1.bf16.msra.mxu0 0
        %1063 = vmatprep.subr.bf16.mxu0 0
        %1064 = vmatpush1.bf16.msra.mxu0 0
        %1065 = vmatprep.subr.bf16.mxu0 0
        %1066 = vmatpush1.bf16.msra.mxu0 0
        %1067 = vmatprep.subr.bf16.mxu0 0
        %1068 = vmatpush1.bf16.msra.mxu0 0
        %1069 = vmatprep.subr.bf16.mxu0 0
        %1070 = vmatpush1.bf16.msra.mxu0 0
        %1071 = vmatprep.subr.bf16.mxu0 0
        %1072 = vmatpush1.bf16.msra.mxu0 0
        %1073 = vmatprep.subr.bf16.mxu0 0
        %1074 = vmatpush1.bf16.msra.mxu0 0
        %1075 = vmatprep.subr.bf16.mxu0 0
        %1076 = vmatpush1.bf16.msra.mxu0 0
        %1077 = vmatprep.subr.bf16.mxu0 0
        %1078 = vmatpush1.bf16.msra.mxu0 0
        %1079 = vmatprep.subr.bf16.mxu0 0
        %1080 = vmatpush1.bf16.msra.mxu0 0
        %1081 = vmatprep.subr.bf16.mxu0 0
        %1082 = vmatpush1.bf16.msra.mxu0 0
        %1083 = vmatprep.subr.bf16.mxu0 0
        %1084 = vmatpush1.bf16.msra.mxu0 0
        %1085 = vmatprep.subr.bf16.mxu0 0
        %1086 = vmatpush1.bf16.msra.mxu0 0
        %1087 = vmatprep.subr.bf16.mxu0 0
        %1088 = vmatpush1.bf16.msra.mxu0 0
        %1089 = vmatprep.subr.bf16.mxu0 0
        %1090 = vmatpush1.bf16.msra.mxu0 0
        %1091 = vmatprep.mubr.bf16.mxu0 0
        %1092 = vmatmul.mubr.bf16.gmra.mrb[0].mxu0 %v1054
        %v1093 = vpop.f32.mrb[0].mxu0
        %v1094 = vadd.f32 0.0, %v1093
        %v1095 = vpop.f32.mrb[0].mxu0
        %v1096 = vpop.f32.mrb[0].mxu0
        %v1097 = vpop.f32.mrb[0].mxu0
        %1098 = vdwg.mxu0
        %v1100 = vsel %vm767, %v1004, 0
        %v1103 = vsel %vm1009, %v762, 0
        %1105 = vmatprep.subr.bf16.mxu0 0
        %1106 = vmatpush1.bf16.msra.mxu0 %v1103
        %1107 = vmatprep.subr.bf16.mxu0 0
        %1108 = vmatpush1.bf16.msra.mxu0 0
        %1109 = vmatprep.subr.bf16.mxu0 0
        %1110 = vmatpush1.bf16.msra.mxu0 0
        %1111 = vmatprep.subr.bf16.mxu0 0
        %1112 = vmatpush1.bf16.msra.mxu0 0
        %1113 = vmatprep.subr.bf16.mxu0 0
        %1114 = vmatpush1.bf16.msra.mxu0 0
        %1115 = vmatprep.subr.bf16.mxu0 0
        %1116 = vmatpush1.bf16.msra.mxu0 0
        %1117 = vmatprep.subr.bf16.mxu0 0
        %1118 = vmatpush1.bf16.msra.mxu0 0
        %1119 = vmatprep.subr.bf16.mxu0 0
        %1120 = vmatpush1.bf16.msra.mxu0 0
        %1121 = vmatprep.subr.bf16.mxu0 0
        %1122 = vmatpush1.bf16.msra.mxu0 0
        %1123 = vmatprep.subr.bf16.mxu0 0
        %1124 = vmatpush1.bf16.msra.mxu0 0
        %1125 = vmatprep.subr.bf16.mxu0 0
        %1126 = vmatpush1.bf16.msra.mxu0 0
        %1127 = vmatprep.subr.bf16.mxu0 0
        %1128 = vmatpush1.bf16.msra.mxu0 0
        %1129 = vmatprep.subr.bf16.mxu0 0
        %1130 = vmatpush1.bf16.msra.mxu0 0
        %1131 = vmatprep.subr.bf16.mxu0 0
        %1132 = vmatpush1.bf16.msra.mxu0 0
        %1133 = vmatprep.subr.bf16.mxu0 0
        %1134 = vmatpush1.bf16.msra.mxu0 0
        %1135 = vmatprep.subr.bf16.mxu0 0
        %1136 = vmatpush1.bf16.msra.mxu0 0
        %1137 = vmatprep.mubr.bf16.mxu0 0
        %1138 = vmatmul.mubr.bf16.gmra.mrb[0].mxu0 %v1100
        %v1139 = vpop.f32.mrb[0].mxu0
        %v1140 = vadd.f32 0.0, %v1139
        %v1141 = vpop.f32.mrb[0].mxu0
        %v1142 = vpop.f32.mrb[0].mxu0
        %v1143 = vpop.f32.mrb[0].mxu0
        %1144 = vdwg.mxu0
        %v1146 = vsel %vm767, %v1005, 0
        %v1149 = vsel %vm1009, %v764, 0
        %1151 = vmatprep.subr.bf16.mxu0 0
        %1152 = vmatpush1.bf16.msra.mxu0 %v1149
        %1153 = vmatprep.subr.bf16.mxu0 0
        %1154 = vmatpush1.bf16.msra.mxu0 0
        %1155 = vmatprep.subr.bf16.mxu0 0
        %1156 = vmatpush1.bf16.msra.mxu0 0
        %1157 = vmatprep.subr.bf16.mxu0 0
        %1158 = vmatpush1.bf16.msra.mxu0 0
        %1159 = vmatprep.subr.bf16.mxu0 0
        %1160 = vmatpush1.bf16.msra.mxu0 0
        %1161 = vmatprep.subr.bf16.mxu0 0
        %1162 = vmatpush1.bf16.msra.mxu0 0
        %1163 = vmatprep.subr.bf16.mxu0 0
        %1164 = vmatpush1.bf16.msra.mxu0 0
        %1165 = vmatprep.subr.bf16.mxu0 0
        %1166 = vmatpush1.bf16.msra.mxu0 0
        %1167 = vmatprep.subr.bf16.mxu0 0
        %1168 = vmatpush1.bf16.msra.mxu0 0
        %1169 = vmatprep.subr.bf16.mxu0 0
        %1170 = vmatpush1.bf16.msra.mxu0 0
        %1171 = vmatprep.subr.bf16.mxu0 0
        %1172 = vmatpush1.bf16.msra.mxu0 0
        %1173 = vmatprep.subr.bf16.mxu0 0
        %1174 = vmatpush1.bf16.msra.mxu0 0
        %1175 = vmatprep.subr.bf16.mxu0 0
        %1176 = vmatpush1.bf16.msra.mxu0 0
        %1177 = vmatprep.subr.bf16.mxu0 0
        %1178 = vmatpush1.bf16.msra.mxu0 0
        %1179 = vmatprep.subr.bf16.mxu0 0
        %1180 = vmatpush1.bf16.msra.mxu0 0
        %1181 = vmatprep.subr.bf16.mxu0 0
        %1182 = vmatpush1.bf16.msra.mxu0 0
        %1183 = vmatprep.mubr.bf16.mxu0 0
        %1184 = vmatmul.mubr.bf16.gmra.mrb[0].mxu0 %v1146
        %v1185 = vpop.f32.mrb[0].mxu0
        %v1186 = vadd.f32 0.0, %v1185
        %v1187 = vpop.f32.mrb[0].mxu0
        %v1188 = vpop.f32.mrb[0].mxu0
        %v1189 = vpop.f32.mrb[0].mxu0
        %1190 = vdwg.mxu0
        %v1191 = vpack.c.bf16 %v1048, %v1048
        %v1192 = vpack.c.bf16 %v1094, %v1094
        %v1193 = vpack.c.bf16 %v1140, %v1140
        %v1194 = vpack.c.bf16 %v1186, %v1186
        %1196 = vrot.lane.b32.xlu0 %v1192, 8
        %v1197 = vpop.permute.xlu0 %1196
        %1199 = vrot.lane.b32.xlu0 %v1193, 16
        %v1200 = vpop.permute.xlu0 %1199
        %1202 = vrot.lane.b32.xlu0 %v1194, 24
        %v1203 = vpop.permute.xlu0 %1202
        %v1206 = vsel %vm767, %v1191, %v1197
        %vm1207 = vcmask 130048
        %v1209 = vsel %vm1207, %v1206, %v1200
        %vm1210 = vcmask 195584
        %v1212 = vsel %vm1210, %v1209, %v1203
        %v1213 = vld [vmem:[#allocation5] sm:$0xf]
        %v1214 = vld [vmem:[#allocation5 + $0x4] sm:$0xf]
        %v1215 = vld [vmem:[#allocation5 + $0x8] sm:$0xf]
        %v1216 = vld [vmem:[#allocation5 + $0xc] sm:$0xf]
        %v1217 = vld [vmem:[#allocation7] sm:$0x1]
        %v1219 = vlaneseq
        %v1220 = vshrl.u32 %v1219, 7
        %v1221 = vsub.s32 0, %v1220
        %v1222 = vrot.slane %v1217, %v1221
        %v1228 = vunpack.c.l.b16 %v1213
        %v1229 = vunpack.c.l.b16 %v1214
        %v1230 = vunpack.c.l.b16 %v1215
        %v1231 = vunpack.c.l.b16 %v1216
        %v1232 = vpack.c.b16 %v1229, %v1228
        %v1233 = vpack.c.b16 %v1231, %v1230
        %v1236 = vsel %vm629, %v1212, 0
        %1238 = vmatprep.subr.bf16.mxu0 0
        %1239 = vmatpush1.bf16.msra.mxu0 %v1232
        %1240 = vmatprep.subr.bf16.mxu0 0
        %1241 = vmatpush1.bf16.msra.mxu0 %v1233
        %1242 = vmatprep.subr.bf16.mxu0 0
        %1243 = vmatpush1.bf16.msra.mxu0 0
        %1244 = vmatprep.subr.bf16.mxu0 0
        %1245 = vmatpush1.bf16.msra.mxu0 0
        %1246 = vmatprep.subr.bf16.mxu0 0
        %1247 = vmatpush1.bf16.msra.mxu0 0
        %1248 = vmatprep.subr.bf16.mxu0 0
        %1249 = vmatpush1.bf16.msra.mxu0 0
        %1250 = vmatprep.subr.bf16.mxu0 0
        %1251 = vmatpush1.bf16.msra.mxu0 0
        %1252 = vmatprep.subr.bf16.mxu0 0
        %1253 = vmatpush1.bf16.msra.mxu0 0
        %1254 = vmatprep.subr.bf16.mxu0 0
        %1255 = vmatpush1.bf16.msra.mxu0 0
        %1256 = vmatprep.subr.bf16.mxu0 0
        %1257 = vmatpush1.bf16.msra.mxu0 0
        %1258 = vmatprep.subr.bf16.mxu0 0
        %1259 = vmatpush1.bf16.msra.mxu0 0
        %1260 = vmatprep.subr.bf16.mxu0 0
        %1261 = vmatpush1.bf16.msra.mxu0 0
        %1262 = vmatprep.subr.bf16.mxu0 0
        %1263 = vmatpush1.bf16.msra.mxu0 0
        %1264 = vmatprep.subr.bf16.mxu0 0
        %1265 = vmatpush1.bf16.msra.mxu0 0
        %1266 = vmatprep.subr.bf16.mxu0 0
        %1267 = vmatpush1.bf16.msra.mxu0 0
        %1268 = vmatprep.subr.bf16.mxu0 0
        %1269 = vmatpush1.bf16.msra.mxu0 0
        %1270 = vmatprep.mubr.bf16.mxu0 0
        %1271 = vmatmul.mubr.bf16.gmra.mrb[0].mxu0 %v1236
        %v1272 = vpop.f32.mrb[0].mxu0
        %v1273 = vadd.f32 %v1222, %v1272
        %v1274 = vpop.f32.mrb[0].mxu0
        %v1275 = vpop.f32.mrb[0].mxu0
        %v1276 = vpop.f32.mrb[0].mxu0
        %1277 = vdwg.mxu0
        %v1278 = vadd.f32 %v602, %v1273
        %v1279 = vsel %vm629, %v1278, 0.0
        %1280 = vadd.xlane.f32.xlu0 %v1279
        %v1281 = vpop.xlane.xlu0 %1280
        %v1282 = vrcp.pop 32.0
        %v1283 = vmul.f32 %v1281, %v1282
        %v1284 = vsub.f32 %v1278, %v1283
        %v1285 = vmul.f32 %v1284, %v1284
        %v1286 = vsel %vm629, %v1285, 0.0
        %1287 = vadd.xlane.f32.xlu0 %v1286
        %v1288 = vpop.xlane.xlu0 %1287
        %v1289 = vmul.f32 %v1288, %v1282
        %v1290 = vadd.f32 %v1289, 1e-05
        %v1291 = vrsqrt.pop %v1290
        %v1292 = vmul.f32 %v1284, %v1291
        %v1293 = vld [vmem:[#allocation8] sm:$0x1]
        %v1295 = vlaneseq
        %v1296 = vshrl.u32 %v1295, 7
        %v1297 = vsub.s32 0, %v1296
        %v1298 = vrot.slane %v1293, %v1297
        %v1300 = vmul.f32 %v1292, %v1298
        %v1301 = vld [vmem:[#allocation10] sm:$0x1]
        %v1303 = vlaneseq
        %v1304 = vshrl.u32 %v1303, 7
        %v1305 = vsub.s32 0, %v1304
        %v1306 = vrot.slane %v1301, %v1305
        %v1308 = vadd.f32 %v1300, %v1306
        %v1309 = vpack.c.bf16 %v1308, %v1308
        %v1310 = vld [vmem:[%s10] sm:$0xf]
        %v1311 = vld [vmem:[%s10 + $0x4] sm:$0xf]
        %v1312 = vld [vmem:[%s10 + $0x8] sm:$0xf]
        %v1313 = vld [vmem:[%s10 + $0xc] sm:$0xf]
        %v1314 = vld [vmem:[%s11] sm:$0x1]
        %v1316 = vlaneseq
        %v1317 = vshrl.u32 %v1316, 7
        %v1318 = vsub.s32 0, %v1317
        %v1319 = vrot.slane %v1314, %v1318
        %v1325 = vunpack.c.l.b16 %v1310
        %v1326 = vunpack.c.l.b16 %v1311
        %v1327 = vunpack.c.l.b16 %v1312
        %v1328 = vunpack.c.l.b16 %v1313
        %v1329 = vpack.c.b16 %v1326, %v1325
        %v1330 = vpack.c.b16 %v1328, %v1327
        %v1334 = vsel %vm629, %v1309, 0
        %1336 = vmatprep.subr.bf16.mxu0 0
        %1337 = vmatpush1.bf16.msra.mxu0 %v1329
        %1338 = vmatprep.subr.bf16.mxu0 0
        %1339 = vmatpush1.bf16.msra.mxu0 %v1330
        %1340 = vmatprep.subr.bf16.mxu0 0
        %1341 = vmatpush1.bf16.msra.mxu0 0
        %1342 = vmatprep.subr.bf16.mxu0 0
        %1343 = vmatpush1.bf16.msra.mxu0 0
        %1344 = vmatprep.subr.bf16.mxu0 0
        %1345 = vmatpush1.bf16.msra.mxu0 0
        %1346 = vmatprep.subr.bf16.mxu0 0
        %1347 = vmatpush1.bf16.msra.mxu0 0
        %1348 = vmatprep.subr.bf16.mxu0 0
        %1349 = vmatpush1.bf16.msra.mxu0 0
        %1350 = vmatprep.subr.bf16.mxu0 0
        %1351 = vmatpush1.bf16.msra.mxu0 0
        %1352 = vmatprep.subr.bf16.mxu0 0
        %1353 = vmatpush1.bf16.msra.mxu0 0
        %1354 = vmatprep.subr.bf16.mxu0 0
        %1355 = vmatpush1.bf16.msra.mxu0 0
        %1356 = vmatprep.subr.bf16.mxu0 0
        %1357 = vmatpush1.bf16.msra.mxu0 0
        %1358 = vmatprep.subr.bf16.mxu0 0
        %1359 = vmatpush1.bf16.msra.mxu0 0
        %1360 = vmatprep.subr.bf16.mxu0 0
        %1361 = vmatpush1.bf16.msra.mxu0 0
        %1362 = vmatprep.subr.bf16.mxu0 0
        %1363 = vmatpush1.bf16.msra.mxu0 0
        %1364 = vmatprep.subr.bf16.mxu0 0
        %1365 = vmatpush1.bf16.msra.mxu0 0
        %1366 = vmatprep.subr.bf16.mxu0 0
        %1367 = vmatpush1.bf16.msra.mxu0 0
        %1368 = vmatprep.mubr.bf16.mxu0 0
        %1369 = vmatmul.mubr.bf16.gmra.mrb[0].mxu0 %v1334
        %v1370 = vpop.f32.mrb[0].mxu0
        %v1371 = vadd.f32 %v1319, %v1370
        %v1372 = vpop.f32.mrb[0].mxu0
        %v1373 = vpop.f32.mrb[0].mxu0
        %v1374 = vpop.f32.mrb[0].mxu0
        %1375 = vdwg.mxu0
        %v1376 = vmax.f32 %v1371, 0.0
        %v1377 = vpack.c.bf16 %v1376, %v1376
        %v1378 = vld [vmem:[%s12] sm:$0xf]
        %v1379 = vld [vmem:[%s12 + $0x4] sm:$0xf]
        %v1380 = vld [vmem:[%s12 + $0x8] sm:$0xf]
        %v1381 = vld [vmem:[%s12 + $0xc] sm:$0xf]
        %v1382 = vld [vmem:[%s12 + $0x10] sm:$0xf]
        %v1383 = vld [vmem:[%s12 + $0x14] sm:$0xf]
        %v1384 = vld [vmem:[%s12 + $0x18] sm:$0xf]
        %v1385 = vld [vmem:[%s12 + $0x1c] sm:$0xf]
        %v1386 = vld [vmem:[%s13] sm:$0x1]
        %v1388 = vlaneseq
        %v1389 = vshrl.u32 %v1388, 7
        %v1390 = vsub.s32 0, %v1389
        %v1391 = vrot.slane %v1386, %v1390
        %v1401 = vunpack.c.l.b16 %v1378
        %v1402 = vunpack.c.l.b16 %v1379
        %v1403 = vunpack.c.l.b16 %v1380
        %v1404 = vunpack.c.l.b16 %v1381
        %v1405 = vunpack.c.l.b16 %v1382
        %v1406 = vunpack.c.l.b16 %v1383
        %v1407 = vunpack.c.l.b16 %v1384
        %v1408 = vunpack.c.l.b16 %v1385
        %v1409 = vpack.c.b16 %v1402, %v1401
        %v1410 = vpack.c.b16 %v1404, %v1403
        %v1411 = vpack.c.b16 %v1406, %v1405
        %v1412 = vpack.c.b16 %v1408, %v1407
        %vm1417 = vcmask 523264
        %v1419 = vsel %vm1417, %v1377, 0
        %1421 = vmatprep.subr.bf16.mxu0 0
        %1422 = vmatpush1.bf16.msra.mxu0 %v1409
        %1423 = vmatprep.subr.bf16.mxu0 0
        %1424 = vmatpush1.bf16.msra.mxu0 %v1410
        %1425 = vmatprep.subr.bf16.mxu0 0
        %1426 = vmatpush1.bf16.msra.mxu0 %v1411
        %1427 = vmatprep.subr.bf16.mxu0 0
        %1428 = vmatpush1.bf16.msra.mxu0 %v1412
        %1429 = vmatprep.subr.bf16.mxu0 0
        %1430 = vmatpush1.bf16.msra.mxu0 0
        %1431 = vmatprep.subr.bf16.mxu0 0
        %1432 = vmatpush1.bf16.msra.mxu0 0
        %1433 = vmatprep.subr.bf16.mxu0 0
        %1434 = vmatpush1.bf16.msra.mxu0 0
        %1435 = vmatprep.subr.bf16.mxu0 0
        %1436 = vmatpush1.bf16.msra.mxu0 0
        %1437 = vmatprep.subr.bf16.mxu0 0
        %1438 = vmatpush1.bf16.msra.mxu0 0
        %1439 = vmatprep.subr.bf16.mxu0 0
        %1440 = vmatpush1.bf16.msra.mxu0 0
        %1441 = vmatprep.subr.bf16.mxu0 0
        %1442 = vmatpush1.bf16.msra.mxu0 0
        %1443 = vmatprep.subr.bf16.mxu0 0
        %1444 = vmatpush1.bf16.msra.mxu0 0
        %1445 = vmatprep.subr.bf16.mxu0 0
        %1446 = vmatpush1.bf16.msra.mxu0 0
        %1447 = vmatprep.subr.bf16.mxu0 0
        %1448 = vmatpush1.bf16.msra.mxu0 0
        %1449 = vmatprep.subr.bf16.mxu0 0
        %1450 = vmatpush1.bf16.msra.mxu0 0
        %1451 = vmatprep.subr.bf16.mxu0 0
        %1452 = vmatpush1.bf16.msra.mxu0 0
        %1453 = vmatprep.mubr.bf16.mxu0 0
        %1454 = vmatmul.mubr.bf16.gmra.mrb[0].mxu0 %v1419
        %v1455 = vpop.f32.mrb[0].mxu0
        %v1456 = vadd.f32 %v1391, %v1455
        %v1457 = vpop.f32.mrb[0].mxu0
        %v1458 = vpop.f32.mrb[0].mxu0
        %v1459 = vpop.f32.mrb[0].mxu0
        %1460 = vdwg.mxu0
        %v1461 = vadd.f32 %v1308, %v1456
        %v1462 = vsel %vm629, %v1461, 0.0
        %1463 = vadd.xlane.f32.xlu0 %v1462
        %v1464 = vpop.xlane.xlu0 %1463
        %v1465 = vmul.f32 %v1464, %v1282
        %v1466 = vsub.f32 %v1461, %v1465
        %v1467 = vmul.f32 %v1466, %v1466
        %v1468 = vsel %vm629, %v1467, 0.0
        %1469 = vadd.xlane.f32.xlu0 %v1468
        %v1470 = vpop.xlane.xlu0 %1469
        %v1471 = vmul.f32 %v1470, %v1282
        %v1472 = vadd.f32 %v1471, 1e-05
        %v1473 = vrsqrt.pop %v1472
        %v1474 = vmul.f32 %v1466, %v1473
        %v1475 = vld [vmem:[%s14] sm:$0x1]
        %v1477 = vlaneseq
        %v1478 = vshrl.u32 %v1477, 7
        %v1479 = vsub.s32 0, %v1478
        %v1480 = vrot.slane %v1475, %v1479
        %v1482 = vmul.f32 %v1474, %v1480
        %v1483 = vld [vmem:[%s15] sm:$0x1]
        %v1485 = vlaneseq
        %v1486 = vshrl.u32 %v1485, 7
        %v1487 = vsub.s32 0, %v1486
        %v1488 = vrot.slane %v1483, %v1487
        %v1490 = vadd.f32 %v1482, %v1488
        %1491 = vst.msk [vmem:[%s592] sm:$0xff] %vm629, %v1490
        %s1492 = sand.u32 %s387, 1
        %s1493 = scalar_lea.sflag [#allocation4], %s1492
        %s1494 = sand.u32 %s387, 1
        %s1495 = smul.addr %s1494, 8
        %s1496 = scalar_lea.vmem [#allocation11], %s1495
        // Predicated region
        $region105: #{tpu_custom_call.1} parent=83 // pred_check
          %p1497 = pneg %p397
        $region106: #{tpu_custom_call.1} parent=83 // pred_check_branch
          %1499 = sbr.rel (%p1497) target = $region108
        $region107: #{tpu_custom_call.1} parent=83 // pred_region
          %s1501 = ssub.s32 128, 128
          %1502 = vsyncadd %s1493, %s1501
          %s1503 = smul.addr %s33, 128
          %s1504 = scalar_lea.hbm %s16, %s1503
          %s1506 = sshll.u32 %s1496, 4
          %s1507 = int_to_ptr.vmem [resolvable:$true] %s1506
          %1509 = dma.vmem_to_hbm [thread:$0]  %s1507, 128, %s1504, %s1493
        $region108: #{tpu_custom_call.1} parent=83 // pred_fallthru
          _
      $region84: #{tpu_custom_call.1} parent=5 // pred_fallthru
        _
      %p1510 = scmp.le.s32.totalorder 2, %s28
      // Predicated region
      $region109: #{tpu_custom_call.1} parent=5 // pred_check
        %p1511 = pneg %p1510
      $region110: #{tpu_custom_call.1} parent=5 // pred_check_branch
        %1513 = sbr.rel (%p1511) target = $region112
      $region111: #{tpu_custom_call.1} parent=5 // pred_region
        %s1514 = ssub.s32 %s28, 2
        // Predicated region
        $region113: #{tpu_custom_call.1} parent=111 // pred_check
          %p1515 = pneg %p403
        $region114: #{tpu_custom_call.1} parent=111 // pred_check_branch
          %1517 = sbr.rel (%p1515) target = $region116
        $region115: #{tpu_custom_call.1} parent=111 // pred_region
          %s1518 = sand.u32 %s388, 1
          %s1519 = scalar_lea.sflag [#allocation4], %s1518
          %s1520 = sand.u32 %s388, 1
          %s1521 = smul.addr %s1520, 8
          %s1522 = scalar_lea.vmem [#allocation11], %s1521
          %1523 = dma.done %s1519, 128
        $region116: #{tpu_custom_call.1} parent=111 // pred_fallthru
          _
      $region112: #{tpu_custom_call.1} parent=5 // pred_fallthru
        _
    $region6: #{tpu_custom_call.1} parent=1 // loop_footer
      %s32 = sadd.s32 1, %s28
    $region7: #{tpu_custom_call.1} parent=1 // loop_footer_branch
      %27 = sbr.rel target = $region3
    $region8: #{tpu_custom_call.1} parent=1 // loop_exit
      _
    %1524 = vsyncpa [#allocation3], 1
    %s1525 = scalar_lea.sflag [#allocation3], 1
    %1526 = vsyncpa %s1525, 1
    %1527 = vsyncpa [#allocation6], 1
    %1528 = vsyncpa [#allocation9], 1
    %1529 = vsyncpa [#allocation4], 1
    %s1530 = scalar_lea.sflag [#allocation4], 1
    %1531 = vsyncpa %s1530, 1

// kernel: tpu_custom_call.1
$region0: #{tpu_custom_call.1}
  #allocation0 [shape = 'u32[]', space=smem, size = 0x4, offset = 0x4, fixed_abs, tag = 'smem constant byte address 0x4 - core index']
  #allocation1 [shape = 'u32[144,128]{1,0:T(1,128)}', space=vmem, size = 0x12000, scoped, tag = 'internal scratch']
  %s0 = inlined_call_operand.vmem [shape: f32[2,8,32], index: 0, kind: input, shape index: {}]
  %s1 = inlined_call_operand.vmem [shape: f32[2,8,32], index: 1, kind: input, shape index: {}]
  %s2 = inlined_call_operand.vmem [shape: bf16[32,64], index: 2, kind: input, shape index: {}]
  %s3 = inlined_call_operand.vmem [shape: f32[1,64], index: 3, kind: input, shape index: {}]
  %s4 = inlined_call_operand.hbm [shape: bf16[32,32], index: 4, kind: input, shape index: {}]
  %s5 = inlined_call_operand.vmem [shape: f32[1,32], index: 5, kind: input, shape index: {}]
  %s6 = inlined_call_operand.hbm [shape: bf16[32,32], index: 6, kind: input, shape index: {}]
  %s7 = inlined_call_operand.hbm [shape: f32[1,32], index: 7, kind: input, shape index: {}]
  %s8 = inlined_call_operand.hbm [shape: f32[1,32], index: 8, kind: input, shape index: {}]
  %s9 = inlined_call_operand.hbm [shape: f32[1,32], index: 9, kind: input, shape index: {}]
  %s10 = inlined_call_operand.vmem [shape: bf16[32,64], index: 10, kind: input, shape index: {}]
  %s11 = inlined_call_operand.vmem [shape: f32[1,64], index: 11, kind: input, shape index: {}]
  %s12 = inlined_call_operand.vmem [shape: bf16[64,32], index: 12, kind: input, shape index: {}]
  %s13 = inlined_call_operand.vmem [shape: f32[1,32], index: 13, kind: input, shape index: {}]
  %s14 = inlined_call_operand.vmem [shape: f32[1,32], index: 14, kind: input, shape index: {}]
  %s15 = inlined_call_operand.vmem [shape: f32[1,32], index: 15, kind: input, shape index: {}]
  %s16 = inlined_call_operand.hbm [shape: f32[2,8,32], index: 16, kind: output, shape index: {}]
  %s17 = sld [smem:[#allocation0]]
  $region117: #{tpu_custom_call.1} parent=0
    _
  %s19 = ssub.s32 1, %s17
  %s20 = scalar_select 0, %s19, %s17
  $region1: #{tpu_custom_call.1} parent=0
    #allocation2 [shape = 'u8[8192]{0}', space=vmem, size = 0x2000, scoped, tag = 'input window, operand 4, single buffered']
    #allocation3 [shape = 's32[2]{0}', space=sflag, size = 0x8, scoped, tag = 'scoped memory for tpu_custom_call.1']
    #allocation4 [shape = 's32[2]{0}', space=sflag, size = 0x8, scoped, tag = 'scoped memory for tpu_custom_call.1']
    #allocation5 [shape = 'u8[8192]{0}', space=vmem, size = 0x2000, scoped, tag = 'input window, operand 6, single buffered']
    #allocation6 [shape = 's32[1]{0}', space=sflag, size = 0x4, scoped, tag = 'scoped memory for tpu_custom_call.1']
    #allocation7 [shape = 'u8[512]{0}', space=vmem, size = 0x400, scoped, tag = 'input window, operand 7, single buffered']
    #allocation8 [shape = 'u8[512]{0}', space=vmem, size = 0x400, scoped, tag = 'input window, operand 8, single buffered']
    #allocation9 [shape = 's32[1]{0}', space=sflag, size = 0x4, scoped, tag = 'scoped memory for tpu_custom_call.1']
    #allocation10 [shape = 'u8[512]{0}', space=vmem, size = 0x400, scoped, tag = 'input window, operand 9, single buffered']
    #allocation11 [shape = 'u8[8192]{0}', space=vmem, size = 0x2000, scoped, tag = 'output window, operand 0']
    %21 = vsyncpa [#allocation3], 0
    %22 = vsyncpa [#allocation6], 0
    %23 = vsyncpa [#allocation9], 0
    %24 = vsyncpa [#allocation4], 0
    %s25 = scalar_lea.sflag [#allocation4], 1
    %26 = vsyncpa %s25, 0
    loop: start=0, step=1, limit=4
    $region2: #{tpu_custom_call.1} parent=1 // loop_pre_header
      _
    $region3: #{tpu_custom_call.1} parent=1 // loop_header
      %s28 = sphi 0, %s32
      %p29 = scmp.ge.s32.totalorder %s28, 4
      %s38 = sphi 0, %s40
      %s41 = sphi 0, %s38
      %s42 = sphi 0, %s41
      %s58 = sphi 0, %s42
      %s64 = sphi 0, %s66
      %s67 = sphi 0, %s64
      %s68 = sphi 0, %s67
      %s84 = sphi 0, %s68
      %s88 = sphi 0, %s88
      %s90 = sphi 0, %s88
      %s91 = sphi 0, %s90
      %s105 = sphi 0, %s91
      %s109 = sphi 0, %s109
      %s111 = sphi 0, %s109
      %s112 = sphi 0, %s111
      %s126 = sphi 0, %s112
      %s130 = sphi 0, %s130
      %s132 = sphi 0, %s130
      %s133 = sphi 0, %s132
      %s147 = sphi 0, %s133
      %s151 = sphi 0, %s151
      %s153 = sphi 0, %s151
      %s154 = sphi 0, %s153
      %s168 = sphi 0, %s154
      %s172 = sphi 0, %s172
      %s174 = sphi 0, %s172
      %s175 = sphi 0, %s174
      %s189 = sphi 0, %s175
      %s193 = sphi 0, %s193
      %s195 = sphi 0, %s193
      %s196 = sphi 0, %s195
      %s210 = sphi 0, %s196
      %s214 = sphi 0, %s214
      %s216 = sphi 0, %s214
      %s217 = sphi 0, %s216
      %s231 = sphi 0, %s217
      %s235 = sphi 0, %s235
      %s237 = sphi 0, %s235
      %s238 = sphi 0, %s237
      %s252 = sphi 0, %s238
      %s256 = sphi 0, %s256
      %s258 = sphi 0, %s256
      %s259 = sphi 0, %s258
      %s273 = sphi 0, %s259
      %s277 = sphi 0, %s277
      %s279 = sphi 0, %s277
      %s280 = sphi 0, %s279
      %s294 = sphi 0, %s280
      %s298 = sphi 0, %s298
      %s300 = sphi 0, %s298
      %s301 = sphi 0, %s300
      %s315 = sphi 0, %s301
      %s319 = sphi 0, %s319
      %s321 = sphi 0, %s319
      %s322 = sphi 0, %s321
      %s336 = sphi 0, %s322
      %s340 = sphi 0, %s340
      %s342 = sphi 0, %s340
      %s343 = sphi 0, %s342
      %s357 = sphi 0, %s343
      %s361 = sphi 0, %s361
      %s363 = sphi 0, %s361
      %s364 = sphi 0, %s363
      %s378 = sphi 0, %s364
      %s384 = sphi 0, %s386
      %s387 = sphi 0, %s384
      %s388 = sphi 0, %s387
      %s404 = sphi 0, %s388
    $region4: #{tpu_custom_call.1} parent=1 // loop_header_branch
      %31 = sbr.rel (%p29) target = $region8
    $region5: #{tpu_custom_call.1} parent=1 // loop_body
      %s33 = ssub.s32 %s28, 1
      %s34 = ssub.s32 %s28, 2
      %s35 = sadd.s32 %s28, 1
      %s36 = ssub.s32 %s28, %s35
      %p37 = scmp.eq.s32.totalorder %s36, 0
      %s39 = sadd.s32 %s38, 1
      %s40 = scalar_select %p37, %s38, %s39
      %p43 = pneg %p37
      %p44 = scmp.eq.s32.totalorder %s28, 1
      %p45 = por %p43, %p44
      %p46 = scmp.ne.s32.totalorder %s38, %s41
      %p47 = scmp.eq.s32.totalorder %s28, 0
      %p48 = por %p46, %p47
      %p49 = scmp.ne.s32.totalorder %s38, %s41
      %p50 = scmp.eq.s32.totalorder %s33, 1
      %p51 = por %p49, %p50
      %p52 = scmp.ne.s32.totalorder %s41, %s42
      %p53 = scmp.eq.s32.totalorder %s33, 0
      %p54 = por %p52, %p53
      %p55 = scmp.ne.s32.totalorder %s41, %s42
      %p56 = scmp.eq.s32.totalorder %s34, 1
      %p57 = por %p55, %p56
      %p59 = scmp.ne.s32.totalorder %s42, %s58
      %p60 = scmp.eq.s32.totalorder %s34, 0
      %p61 = por %p59, %p60
      %s62 = ssub.s32 %s28, %s35
      %p63 = scmp.eq.s32.totalorder %s62, 0
      %s65 = sadd.s32 %s64, 1
      %s66 = scalar_select %p63, %s64, %s65
      %p69 = pneg %p63
      %p70 = scmp.eq.s32.totalorder %s28, 1
      %p71 = por %p69, %p70
      %p72 = scmp.ne.s32.totalorder %s64, %s67
      %p73 = scmp.eq.s32.totalorder %s28, 0
      %p74 = por %p72, %p73
      %p75 = scmp.ne.s32.totalorder %s64, %s67
      %p76 = scmp.eq.s32.totalorder %s33, 1
      %p77 = por %p75, %p76
      %p78 = scmp.ne.s32.totalorder %s67, %s68
      %p79 = scmp.eq.s32.totalorder %s33, 0
      %p80 = por %p78, %p79
      %p81 = scmp.ne.s32.totalorder %s67, %s68
      %p82 = scmp.eq.s32.totalorder %s34, 1
      %p83 = por %p81, %p82
      %p85 = scmp.ne.s32.totalorder %s68, %s84
      %p86 = scmp.eq.s32.totalorder %s34, 0
      %p87 = por %p85, %p86
      %s89 = sadd.s32 %s88, 1
      %p92 = scmp.eq.s32.totalorder %s28, 1
      %p93 = scmp.ne.s32.totalorder %s88, %s90
      %p94 = scmp.eq.s32.totalorder %s28, 0
      %p95 = por %p93, %p94
      %p96 = scmp.ne.s32.totalorder %s88, %s90
      %p97 = scmp.eq.s32.totalorder %s33, 1
      %p98 = por %p96, %p97
      %p99 = scmp.ne.s32.totalorder %s90, %s91
      %p100 = scmp.eq.s32.totalorder %s33, 0
      %p101 = por %p99, %p100
      %p102 = scmp.ne.s32.totalorder %s90, %s91
      %p103 = scmp.eq.s32.totalorder %s34, 1
      %p104 = por %p102, %p103
      %p106 = scmp.ne.s32.totalorder %s91, %s105
      %p107 = scmp.eq.s32.totalorder %s34, 0
      %p108 = por %p106, %p107
      %s110 = sadd.s32 %s109, 1
      %p113 = scmp.eq.s32.totalorder %s28, 1
      %p114 = scmp.ne.s32.totalorder %s109, %s111
      %p115 = scmp.eq.s32.totalorder %s28, 0
      %p116 = por %p114, %p115
      %p117 = scmp.ne.s32.totalorder %s109, %s111
      %p118 = scmp.eq.s32.totalorder %s33, 1
      %p119 = por %p117, %p118
      %p120 = scmp.ne.s32.totalorder %s111, %s112
      %p121 = scmp.eq.s32.totalorder %s33, 0
      %p122 = por %p120, %p121
      %p123 = scmp.ne.s32.totalorder %s111, %s112
      %p124 = scmp.eq.s32.totalorder %s34, 1
      %p125 = por %p123, %p124
      %p127 = scmp.ne.s32.totalorder %s112, %s126
      %p128 = scmp.eq.s32.totalorder %s34, 0
      %p129 = por %p127, %p128
      %s131 = sadd.s32 %s130, 1
      %p134 = scmp.eq.s32.totalorder %s28, 1
      %p135 = scmp.ne.s32.totalorder %s130, %s132
      %p136 = scmp.eq.s32.totalorder %s28, 0
      %p137 = por %p135, %p136
      %p138 = scmp.ne.s32.totalorder %s130, %s132
      %p139 = scmp.eq.s32.totalorder %s33, 1
      %p140 = por %p138, %p139
      %p141 = scmp.ne.s32.totalorder %s132, %s133
      %p142 = scmp.eq.s32.totalorder %s33, 0
      %p143 = por %p141, %p142
      %p144 = scmp.ne.s32.totalorder %s132, %s133
      %p145 = scmp.eq.s32.totalorder %s34, 1
      %p146 = por %p144, %p145
      %p148 = scmp.ne.s32.totalorder %s133, %s147
      %p149 = scmp.eq.s32.totalorder %s34, 0
      %p150 = por %p148, %p149
      %s152 = sadd.s32 %s151, 1
      %p155 = scmp.eq.s32.totalorder %s28, 1
      %p156 = scmp.ne.s32.totalorder %s151, %s153
      %p157 = scmp.eq.s32.totalorder %s28, 0
      %p158 = por %p156, %p157
      %p159 = scmp.ne.s32.totalorder %s151, %s153
      %p160 = scmp.eq.s32.totalorder %s33, 1
      %p161 = por %p159, %p160
      %p162 = scmp.ne.s32.totalorder %s153, %s154
      %p163 = scmp.eq.s32.totalorder %s33, 0
      %p164 = por %p162, %p163
      %p165 = scmp.ne.s32.totalorder %s153, %s154
      %p166 = scmp.eq.s32.totalorder %s34, 1
      %p167 = por %p165, %p166
      %p169 = scmp.ne.s32.totalorder %s154, %s168
      %p170 = scmp.eq.s32.totalorder %s34, 0
      %p171 = por %p169, %p170
      %s173 = sadd.s32 %s172, 1
      %p176 = scmp.eq.s32.totalorder %s28, 1
      %p177 = scmp.ne.s32.totalorder %s172, %s174
      %p178 = scmp.eq.s32.totalorder %s28, 0
      %p179 = por %p177, %p178
      %p180 = scmp.ne.s32.totalorder %s172, %s174
      %p181 = scmp.eq.s32.totalorder %s33, 1
      %p182 = por %p180, %p181
      %p183 = scmp.ne.s32.totalorder %s174, %s175
      %p184 = scmp.eq.s32.totalorder %s33, 0
      %p185 = por %p183, %p184
      %p186 = scmp.ne.s32.totalorder %s174, %s175
      %p187 = scmp.eq.s32.totalorder %s34, 1
      %p188 = por %p186, %p187
      %p190 = scmp.ne.s32.totalorder %s175, %s189
      %p191 = scmp.eq.s32.totalorder %s34, 0
      %p192 = por %p190, %p191
      %s194 = sadd.s32 %s193, 1
      %p197 = scmp.eq.s32.totalorder %s28, 1
      %p198 = scmp.ne.s32.totalorder %s193, %s195
      %p199 = scmp.eq.s32.totalorder %s28, 0
      %p200 = por %p198, %p199
      %p201 = scmp.ne.s32.totalorder %s193, %s195
      %p202 = scmp.eq.s32.totalorder %s33, 1
      %p203 = por %p201, %p202
      %p204 = scmp.ne.s32.totalorder %s195, %s196
      %p205 = scmp.eq.s32.totalorder %s33, 0
      %p206 = por %p204, %p205
      %p207 = scmp.ne.s32.totalorder %s195, %s196
      %p208 = scmp.eq.s32.totalorder %s34, 1
      %p209 = por %p207, %p208
      %p211 = scmp.ne.s32.totalorder %s196, %s210
      %p212 = scmp.eq.s32.totalorder %s34, 0
      %p213 = por %p211, %p212
      %s215 = sadd.s32 %s214, 1
      %p218 = scmp.eq.s32.totalorder %s28, 1
      %p219 = scmp.ne.s32.totalorder %s214, %s216
      %p220 = scmp.eq.s32.totalorder %s28, 0
      %p221 = por %p219, %p220
      %p222 = scmp.ne.s32.totalorder %s214, %s216
      %p223 = scmp.eq.s32.totalorder %s33, 1
      %p224 = por %p222, %p223
      %p225 = scmp.ne.s32.totalorder %s216, %s217
      %p226 = scmp.eq.s32.totalorder %s33, 0
      %p227 = por %p225, %p226
      %p228 = scmp.ne.s32.totalorder %s216, %s217
      %p229 = scmp.eq.s32.totalorder %s34, 1
      %p230 = por %p228, %p229
      %p232 = scmp.ne.s32.totalorder %s217, %s231
      %p233 = scmp.eq.s32.totalorder %s34, 0
      %p234 = por %p232, %p233
      %s236 = sadd.s32 %s235, 1
      %p239 = scmp.eq.s32.totalorder %s28, 1
      %p240 = scmp.ne.s32.totalorder %s235, %s237
      %p241 = scmp.eq.s32.totalorder %s28, 0
      %p242 = por %p240, %p241
      %p243 = scmp.ne.s32.totalorder %s235, %s237
      %p244 = scmp.eq.s32.totalorder %s33, 1
      %p245 = por %p243, %p244
      %p246 = scmp.ne.s32.totalorder %s237, %s238
      %p247 = scmp.eq.s32.totalorder %s33, 0
      %p248 = por %p246, %p247
      %p249 = scmp.ne.s32.totalorder %s237, %s238
      %p250 = scmp.eq.s32.totalorder %s34, 1
      %p251 = por %p249, %p250
      %p253 = scmp.ne.s32.totalorder %s238, %s252
      %p254 = scmp.eq.s32.totalorder %s34, 0
      %p255 = por %p253, %p254
      %s257 = sadd.s32 %s256, 1
      %p260 = scmp.eq.s32.totalorder %s28, 1
      %p261 = scmp.ne.s32.totalorder %s256, %s258
      %p262 = scmp.eq.s32.totalorder %s28, 0
      %p263 = por %p261, %p262
      %p264 = scmp.ne.s32.totalorder %s256, %s258
      %p265 = scmp.eq.s32.totalorder %s33, 1
      %p266 = por %p264, %p265
      %p267 = scmp.ne.s32.totalorder %s258, %s259
      %p268 = scmp.eq.s32.totalorder %s33, 0
      %p269 = por %p267, %p268
      %p270 = scmp.ne.s32.totalorder %s258, %s259
      %p271 = scmp.eq.s32.totalorder %s34, 1
      %p272 = por %p270, %p271
      %p274 = scmp.ne.s32.totalorder %s259, %s273
      %p275 = scmp.eq.s32.totalorder %s34, 0
      %p276 = por %p274, %p275
      %s278 = sadd.s32 %s277, 1
      %p281 = scmp.eq.s32.totalorder %s28, 1
      %p282 = scmp.ne.s32.totalorder %s277, %s279
      %p283 = scmp.eq.s32.totalorder %s28, 0
      %p284 = por %p282, %p283
      %p285 = scmp.ne.s32.totalorder %s277, %s279
      %p286 = scmp.eq.s32.totalorder %s33, 1
      %p287 = por %p285, %p286
      %p288 = scmp.ne.s32.totalorder %s279, %s280
      %p289 = scmp.eq.s32.totalorder %s33, 0
      %p290 = por %p288, %p289
      %p291 = scmp.ne.s32.totalorder %s279, %s280
      %p292 = scmp.eq.s32.totalorder %s34, 1
      %p293 = por %p291, %p292
      %p295 = scmp.ne.s32.totalorder %s280, %s294
      %p296 = scmp.eq.s32.totalorder %s34, 0
      %p297 = por %p295, %p296
      %s299 = sadd.s32 %s298, 1
      %p302 = scmp.eq.s32.totalorder %s28, 1
      %p303 = scmp.ne.s32.totalorder %s298, %s300
      %p304 = scmp.eq.s32.totalorder %s28, 0
      %p305 = por %p303, %p304
      %p306 = scmp.ne.s32.totalorder %s298, %s300
      %p307 = scmp.eq.s32.totalorder %s33, 1
      %p308 = por %p306, %p307
      %p309 = scmp.ne.s32.totalorder %s300, %s301
      %p310 = scmp.eq.s32.totalorder %s33, 0
      %p311 = por %p309, %p310
      %p312 = scmp.ne.s32.totalorder %s300, %s301
      %p313 = scmp.eq.s32.totalorder %s34, 1
      %p314 = por %p312, %p313
      %p316 = scmp.ne.s32.totalorder %s301, %s315
      %p317 = scmp.eq.s32.totalorder %s34, 0
      %p318 = por %p316, %p317
      %s320 = sadd.s32 %s319, 1
      %p323 = scmp.eq.s32.totalorder %s28, 1
      %p324 = scmp.ne.s32.totalorder %s319, %s321
      %p325 = scmp.eq.s32.totalorder %s28, 0
      %p326 = por %p324, %p325
      %p327 = scmp.ne.s32.totalorder %s319, %s321
      %p328 = scmp.eq.s32.totalorder %s33, 1
      %p329 = por %p327, %p328
      %p330 = scmp.ne.s32.totalorder %s321, %s322
      %p331 = scmp.eq.s32.totalorder %s33, 0
      %p332 = por %p330, %p331
      %p333 = scmp.ne.s32.totalorder %s321, %s322
      %p334 = scmp.eq.s32.totalorder %s34, 1
      %p335 = por %p333, %p334
      %p337 = scmp.ne.s32.totalorder %s322, %s336
      %p338 = scmp.eq.s32.totalorder %s34, 0
      %p339 = por %p337, %p338
      %s341 = sadd.s32 %s340, 1
      %p344 = scmp.eq.s32.totalorder %s28, 1
      %p345 = scmp.ne.s32.totalorder %s340, %s342
      %p346 = scmp.eq.s32.totalorder %s28, 0
      %p347 = por %p345, %p346
      %p348 = scmp.ne.s32.totalorder %s340, %s342
      %p349 = scmp.eq.s32.totalorder %s33, 1
      %p350 = por %p348, %p349
      %p351 = scmp.ne.s32.totalorder %s342, %s343
      %p352 = scmp.eq.s32.totalorder %s33, 0
      %p353 = por %p351, %p352
      %p354 = scmp.ne.s32.totalorder %s342, %s343
      %p355 = scmp.eq.s32.totalorder %s34, 1
      %p356 = por %p354, %p355
      %p358 = scmp.ne.s32.totalorder %s343, %s357
      %p359 = scmp.eq.s32.totalorder %s34, 0
      %p360 = por %p358, %p359
      %s362 = sadd.s32 %s361, 1
      %p365 = scmp.eq.s32.totalorder %s28, 1
      %p366 = scmp.ne.s32.totalorder %s361, %s363
      %p367 = scmp.eq.s32.totalorder %s28, 0
      %p368 = por %p366, %p367
      %p369 = scmp.ne.s32.totalorder %s361, %s363
      %p370 = scmp.eq.s32.totalorder %s33, 1
      %p371 = por %p369, %p370
      %p372 = scmp.ne.s32.totalorder %s363, %s364
      %p373 = scmp.eq.s32.totalorder %s33, 0
      %p374 = por %p372, %p373
      %p375 = scmp.ne.s32.totalorder %s363, %s364
      %p376 = scmp.eq.s32.totalorder %s34, 1
      %p377 = por %p375, %p376
      %p379 = scmp.ne.s32.totalorder %s364, %s378
      %p380 = scmp.eq.s32.totalorder %s34, 0
      %p381 = por %p379, %p380
      %s382 = ssub.s32 %s28, %s35
      %p383 = scmp.eq.s32.totalorder %s382, 0
      %s385 = sadd.s32 %s384, 1
      %s386 = scalar_select %p383, %s384, %s385
      %p389 = pneg %p383
      %p390 = scmp.eq.s32.totalorder %s28, 1
      %p391 = por %p389, %p390
      %p392 = scmp.ne.s32.totalorder %s384, %s387
      %p393 = scmp.eq.s32.totalorder %s28, 0
      %p394 = por %p392, %p393
      %p395 = scmp.ne.s32.totalorder %s384, %s387
      %p396 = scmp.eq.s32.totalorder %s33, 1
      %p397 = por %p395, %p396
      %p398 = scmp.ne.s32.totalorder %s387, %s388
      %p399 = scmp.eq.s32.totalorder %s33, 0
      %p400 = por %p398, %p399
      %p401 = scmp.ne.s32.totalorder %s387, %s388
      %p402 = scmp.eq.s32.totalorder %s34, 1
      %p403 = por %p401, %p402
      %p405 = scmp.ne.s32.totalorder %s388, %s404
      %p406 = scmp.eq.s32.totalorder %s34, 0
      %p407 = por %p405, %p406
      %p408 = scmp.le.s32.totalorder 1, %s28
      %p409 = scmp.lt.s32.totalorder %s28, 3
      %p410 = pnand %p408, %p409
      %p411 = pneg %p410
      // Predicated region
      $region9: #{tpu_custom_call.1} parent=5 // pred_check
        _
      $region10: #{tpu_custom_call.1} parent=5 // pred_check_branch
        %413 = sbr.rel (%p410) target = $region12
      $region11: #{tpu_custom_call.1} parent=5 // pred_region
        %s414 = ssub.s32 %s28, 1
        // Predicated region
        $region13: #{tpu_custom_call.1} parent=11 // pred_check
          %p415 = pneg %p101
        $region14: #{tpu_custom_call.1} parent=11 // pred_check_branch
          %417 = sbr.rel (%p415) target = $region16
        $region15: #{tpu_custom_call.1} parent=11 // pred_region
          _
        $region16: #{tpu_custom_call.1} parent=11 // pred_fallthru
          _
        // Predicated region
        $region17: #{tpu_custom_call.1} parent=11 // pred_check
          %p418 = pneg %p122
        $region18: #{tpu_custom_call.1} parent=11 // pred_check_branch
          %420 = sbr.rel (%p418) target = $region20
        $region19: #{tpu_custom_call.1} parent=11 // pred_region
          _
        $region20: #{tpu_custom_call.1} parent=11 // pred_fallthru
          _
        // Predicated region
        $region21: #{tpu_custom_call.1} parent=11 // pred_check
          %p421 = pneg %p143
        $region22: #{tpu_custom_call.1} parent=11 // pred_check_branch
          %423 = sbr.rel (%p421) target = $region24
        $region23: #{tpu_custom_call.1} parent=11 // pred_region
          %s425 = ssub.s32 256, 256
          %426 = vsyncadd [#allocation3], %s425
          %s427 = sshll.u32 [#allocation2], 4
          %s428 = int_to_ptr.vmem [resolvable:$true] %s427
          %433 = dma.hbm_to_vmem [thread:$0]  %s4, 256, %s428, [#allocation3], 64, 64, 4
        $region24: #{tpu_custom_call.1} parent=11 // pred_fallthru
          _
        // Predicated region
        $region25: #{tpu_custom_call.1} parent=11 // pred_check
          %p434 = pneg %p164
        $region26: #{tpu_custom_call.1} parent=11 // pred_check_branch
          %436 = sbr.rel (%p434) target = $region28
        $region27: #{tpu_custom_call.1} parent=11 // pred_region
          _
        $region28: #{tpu_custom_call.1} parent=11 // pred_fallthru
          _
        // Predicated region
        $region29: #{tpu_custom_call.1} parent=11 // pred_check
          %p437 = pneg %p185
        $region30: #{tpu_custom_call.1} parent=11 // pred_check_branch
          %439 = sbr.rel (%p437) target = $region32
        $region31: #{tpu_custom_call.1} parent=11 // pred_region
          %s441 = ssub.s32 256, 256
          %442 = vsyncadd [#allocation6], %s441
          %s443 = sshll.u32 [#allocation5], 4
          %s444 = int_to_ptr.vmem [resolvable:$true] %s443
          %449 = dma.hbm_to_vmem [thread:$0]  %s6, 256, %s444, [#allocation6], 64, 64, 4
        $region32: #{tpu_custom_call.1} parent=11 // pred_fallthru
          _
        // Predicated region
        $region33: #{tpu_custom_call.1} parent=11 // pred_check
          %p450 = pneg %p206
        $region34: #{tpu_custom_call.1} parent=11 // pred_check_branch
          %452 = sbr.rel (%p450) target = $region36
        $region35: #{tpu_custom_call.1} parent=11 // pred_region
          %s454 = ssub.s32 16, 16
          %455 = vsyncadd [#allocation6], %s454
          %s457 = sshll.u32 [#allocation7], 4
          %s458 = int_to_ptr.vmem [resolvable:$true] %s457
          %460 = dma.hbm_to_vmem [thread:$0]  %s7, 16, %s458, [#allocation6]
        $region36: #{tpu_custom_call.1} parent=11 // pred_fallthru
          _
        // Predicated region
        $region37: #{tpu_custom_call.1} parent=11 // pred_check
          %p461 = pneg %p227
        $region38: #{tpu_custom_call.1} parent=11 // pred_check_branch
          %463 = sbr.rel (%p461) target = $region40
        $region39: #{tpu_custom_call.1} parent=11 // pred_region
          %s465 = ssub.s32 16, 16
          %466 = vsyncadd [#allocation9], %s465
          %s468 = sshll.u32 [#allocation8], 4
          %s469 = int_to_ptr.vmem [resolvable:$true] %s468
          %471 = dma.hbm_to_vmem [thread:$0]  %s8, 16, %s469, [#allocation9]
        $region40: #{tpu_custom_call.1} parent=11 // pred_fallthru
          _
        // Predicated region
        $region41: #{tpu_custom_call.1} parent=11 // pred_check
          %p472 = pneg %p248
        $region42: #{tpu_custom_call.1} parent=11 // pred_check_branch
          %474 = sbr.rel (%p472) target = $region44
        $region43: #{tpu_custom_call.1} parent=11 // pred_region
          %s476 = ssub.s32 16, 16
          %477 = vsyncadd [#allocation9], %s476
          %s479 = sshll.u32 [#allocation10], 4
          %s480 = int_to_ptr.vmem [resolvable:$true] %s479
          %482 = dma.hbm_to_vmem [thread:$0]  %s9, 16, %s480, [#allocation9]
        $region44: #{tpu_custom_call.1} parent=11 // pred_fallthru
          _
        // Predicated region
        $region45: #{tpu_custom_call.1} parent=11 // pred_check
          %p483 = pneg %p269
        $region46: #{tpu_custom_call.1} parent=11 // pred_check_branch
          %485 = sbr.rel (%p483) target = $region48
        $region47: #{tpu_custom_call.1} parent=11 // pred_region
          _
        $region48: #{tpu_custom_call.1} parent=11 // pred_fallthru
          _
        // Predicated region
        $region49: #{tpu_custom_call.1} parent=11 // pred_check
          %p486 = pneg %p290
        $region50: #{tpu_custom_call.1} parent=11 // pred_check_branch
          %488 = sbr.rel (%p486) target = $region52
        $region51: #{tpu_custom_call.1} parent=11 // pred_region
          _
        $region52: #{tpu_custom_call.1} parent=11 // pred_fallthru
          _
        // Predicated region
        $region53: #{tpu_custom_call.1} parent=11 // pred_check
          %p489 = pneg %p311
        $region54: #{tpu_custom_call.1} parent=11 // pred_check_branch
          %491 = sbr.rel (%p489) target = $region56
        $region55: #{tpu_custom_call.1} parent=11 // pred_region
          _
        $region56: #{tpu_custom_call.1} parent=11 // pred_fallthru
          _
        // Predicated region
        $region57: #{tpu_custom_call.1} parent=11 // pred_check
          %p492 = pneg %p332
        $region58: #{tpu_custom_call.1} parent=11 // pred_check_branch
          %494 = sbr.rel (%p492) target = $region60
        $region59: #{tpu_custom_call.1} parent=11 // pred_region
          _
        $region60: #{tpu_custom_call.1} parent=11 // pred_fallthru
          _
        // Predicated region
        $region61: #{tpu_custom_call.1} parent=11 // pred_check
          %p495 = pneg %p353
        $region62: #{tpu_custom_call.1} parent=11 // pred_check_branch
          %497 = sbr.rel (%p495) target = $region64
        $region63: #{tpu_custom_call.1} parent=11 // pred_region
          _
        $region64: #{tpu_custom_call.1} parent=11 // pred_fallthru
          _
        // Predicated region
        $region65: #{tpu_custom_call.1} parent=11 // pred_check
          %p498 = pneg %p374
        $region66: #{tpu_custom_call.1} parent=11 // pred_check_branch
          %500 = sbr.rel (%p498) target = $region68
        $region67: #{tpu_custom_call.1} parent=11 // pred_region
          _
        $region68: #{tpu_custom_call.1} parent=11 // pred_fallthru
          _
      $region12: #{tpu_custom_call.1} parent=5 // pred_fallthru
        _
      %p501 = scmp.lt.s32.totalorder %s28, 2
      // Predicated region
      $region69: #{tpu_custom_call.1} parent=5 // pred_check
        %p502 = pneg %p501
      $region70: #{tpu_custom_call.1} parent=5 // pred_check_branch
        %504 = sbr.rel (%p502) target = $region72
      $region71: #{tpu_custom_call.1} parent=5 // pred_region
        // Predicated region
        $region73: #{tpu_custom_call.1} parent=71 // pred_check
          %p505 = pneg %p48
        $region74: #{tpu_custom_call.1} parent=71 // pred_check_branch
          %507 = sbr.rel (%p505) target = $region76
        $region75: #{tpu_custom_call.1} parent=71 // pred_region
          %p508 = scmp.lt.s32.totalorder %s28, 1
          %s509 = scalar_select %p508, %s28, 1
          %s510 = smul.addr %s509, 8
          %s511 = scalar_lea.vmem %s0, %s510
        $region76: #{tpu_custom_call.1} parent=71 // pred_fallthru
          _
        // Predicated region
        $region77: #{tpu_custom_call.1} parent=71 // pred_check
          %p512 = pneg %p74
        $region78: #{tpu_custom_call.1} parent=71 // pred_check_branch
          %514 = sbr.rel (%p512) target = $region80
        $region79: #{tpu_custom_call.1} parent=71 // pred_region
          %p515 = scmp.lt.s32.totalorder %s28, 1
          %s516 = scalar_select %p515, %s28, 1
          %s517 = smul.addr %s516, 8
          %s518 = scalar_lea.vmem %s1, %s517
        $region80: #{tpu_custom_call.1} parent=71 // pred_fallthru
          _
      $region72: #{tpu_custom_call.1} parent=5 // pred_fallthru
        _
      %p519 = scmp.le.s32.totalorder 1, %s28
      %p520 = scmp.lt.s32.totalorder %s28, 3
      %p521 = pnand %p519, %p520
      %p522 = pneg %p521
      // Predicated region
      $region81: #{tpu_custom_call.1} parent=5 // pred_check
        _
      $region82: #{tpu_custom_call.1} parent=5 // pred_check_branch
        %524 = sbr.rel (%p521) target = $region84
      $region83: #{tpu_custom_call.1} parent=5 // pred_region
        %s525 = ssub.s32 %s28, 1
        // Predicated region
        $region85: #{tpu_custom_call.1} parent=83 // pred_check
          %p526 = pneg %p143
        $region86: #{tpu_custom_call.1} parent=83 // pred_check_branch
          %528 = sbr.rel (%p526) target = $region88
        $region87: #{tpu_custom_call.1} parent=83 // pred_region
          %529 = dma.done [#allocation3], 256
        $region88: #{tpu_custom_call.1} parent=83 // pred_fallthru
          _
        // Predicated region
        $region89: #{tpu_custom_call.1} parent=83 // pred_check
          %p530 = pneg %p185
        $region90: #{tpu_custom_call.1} parent=83 // pred_check_branch
          %532 = sbr.rel (%p530) target = $region92
        $region91: #{tpu_custom_call.1} parent=83 // pred_region
          %533 = dma.done [#allocation6], 256
        $region92: #{tpu_custom_call.1} parent=83 // pred_fallthru
          _
        // Predicated region
        $region93: #{tpu_custom_call.1} parent=83 // pred_check
          %p534 = pneg %p206
        $region94: #{tpu_custom_call.1} parent=83 // pred_check_branch
          %536 = sbr.rel (%p534) target = $region96
        $region95: #{tpu_custom_call.1} parent=83 // pred_region
          %537 = dma.done [#allocation6], 16
        $region96: #{tpu_custom_call.1} parent=83 // pred_fallthru
          _
        // Predicated region
        $region97: #{tpu_custom_call.1} parent=83 // pred_check
          %p538 = pneg %p227
        $region98: #{tpu_custom_call.1} parent=83 // pred_check_branch
          %540 = sbr.rel (%p538) target = $region100
        $region99: #{tpu_custom_call.1} parent=83 // pred_region
          %541 = dma.done [#allocation9], 16
        $region100: #{tpu_custom_call.1} parent=83 // pred_fallthru
          _
        // Predicated region
        $region101: #{tpu_custom_call.1} parent=83 // pred_check
          %p542 = pneg %p248
        $region102: #{tpu_custom_call.1} parent=83 // pred_check_branch
          %544 = sbr.rel (%p542) target = $region104
        $region103: #{tpu_custom_call.1} parent=83 // pred_region
          %545 = dma.done [#allocation9], 16
        $region104: #{tpu_custom_call.1} parent=83 // pred_fallthru
          _
        %p546 = scmp.lt.s32.totalorder %s33, 1
        %s547 = scalar_select %p546, %s33, 1
        %s548 = smul.addr %s547, 8
        %s549 = scalar_lea.vmem %s0, %s548
        %p550 = pneg %p54
        %p551 = pneg %p51
        %p552 = scmp.lt.s32.totalorder %s33, 1
        %s553 = scalar_select %p552, %s33, 1
        %s554 = smul.addr %s553, 8
        %s555 = scalar_lea.vmem %s1, %s554
        %p556 = pneg %p80
        %p557 = pneg %p77
        %p558 = pneg %p101
        %p559 = pneg %p98
        %p560 = pneg %p122
        %p561 = pneg %p119
        %p562 = pneg %p143
        %p563 = pneg %p140
        %p564 = pneg %p164
        %p565 = pneg %p161
        %p566 = pneg %p185
        %p567 = pneg %p182
        %p568 = pneg %p206
        %p569 = pneg %p203
        %p570 = pneg %p227
        %p571 = pneg %p224
        %p572 = pneg %p248
        %p573 = pneg %p245
        %p574 = pneg %p269
        %p575 = pneg %p266
        %p576 = pneg %p290
        %p577 = pneg %p287
        %p578 = pneg %p311
        %p579 = pneg %p308
        %p580 = pneg %p332
        %p581 = pneg %p329
        %p582 = pneg %p353
        %p583 = pneg %p350
        %p584 = pneg %p374
        %p585 = pneg %p371
        %p586 = pneg %p400
        %p587 = pneg %p397
        %s588 = sand.u32 %s387, 1
        %s589 = scalar_lea.sflag [#allocation4], %s588
        %s590 = sand.u32 %s387, 1
        %s591 = smul.addr %s590, 8
        %s592 = scalar_lea.vmem [#allocation11], %s591
        %p593 = scmp.lt.s32.totalorder %s33, 1
        %s594 = scalar_select %p593, %s33, 1
        %s595 = smul.addr %s594, 8
        %s596 = scalar_lea.vmem %s0, %s595
        %p597 = scmp.lt.s32.totalorder %s33, 1
        %s598 = scalar_select %p597, %s33, 1
        %s599 = smul.addr %s598, 8
        %s600 = scalar_lea.vmem %s1, %s599
        %v602 = vld [vmem:[%s596] sm:$0xff]
        %v603 = vld [vmem:[%s600] sm:$0xff]
        %v604 = vadd.f32 %v602, %v603
        %v605 = vpack.c.bf16 %v604, %v604
        %v606 = vld [vmem:[%s2] sm:$0xf]
        %v607 = vld [vmem:[%s2 + $0x4] sm:$0xf]
        %v608 = vld [vmem:[%s2 + $0x8] sm:$0xf]
        %v609 = vld [vmem:[%s2 + $0xc] sm:$0xf]
        %v610 = vld [vmem:[%s3] sm:$0x1]
        %v612 = vlaneseq
        %v613 = vshrl.u32 %v612, 7
        %v614 = vsub.s32 0, %v613
        %v615 = vrot.slane %v610, %v614
        %v621 = vunpack.c.l.b16 %v606
        %v622 = vunpack.c.l.b16 %v607
        %v623 = vunpack.c.l.b16 %v608
        %v624 = vunpack.c.l.b16 %v609
        %v625 = vpack.c.b16 %v622, %v621
        %v626 = vpack.c.b16 %v624, %v623
        %vm629 = vcmask 261120
        %v631 = vsel %vm629, %v605, 0
        %633 = vmatprep.subr.bf16.mxu0 0
        %634 = vmatpush1.bf16.msra.mxu0 %v625
        %635 = vmatprep.subr.bf16.mxu0 0
        %636 = vmatpush1.bf16.msra.mxu0 %v626
        %637 = vmatprep.subr.bf16.mxu0 0
        %638 = vmatpush1.bf16.msra.mxu0 0
        %639 = vmatprep.subr.bf16.mxu0 0
        %640 = vmatpush1.bf16.msra.mxu0 0
        %641 = vmatprep.subr.bf16.mxu0 0
        %642 = vmatpush1.bf16.msra.mxu0 0
        %643 = vmatprep.subr.bf16.mxu0 0
        %644 = vmatpush1.bf16.msra.mxu0 0
        %645 = vmatprep.subr.bf16.mxu0 0
        %646 = vmatpush1.bf16.msra.mxu0 0
        %647 = vmatprep.subr.bf16.mxu0 0
        %648 = vmatpush1.bf16.msra.mxu0 0
        %649 = vmatprep.subr.bf16.mxu0 0
        %650 = vmatpush1.bf16.msra.mxu0 0
        %651 = vmatprep.subr.bf16.mxu0 0
        %652 = vmatpush1.bf16.msra.mxu0 0
        %653 = vmatprep.subr.bf16.mxu0 0
        %654 = vmatpush1.bf16.msra.mxu0 0
        %655 = vmatprep.subr.bf16.mxu0 0
        %656 = vmatpush1.bf16.msra.mxu0 0
        %657 = vmatprep.subr.bf16.mxu0 0
        %658 = vmatpush1.bf16.msra.mxu0 0
        %659 = vmatprep.subr.bf16.mxu0 0
        %660 = vmatpush1.bf16.msra.mxu0 0
        %661 = vmatprep.subr.bf16.mxu0 0
        %662 = vmatpush1.bf16.msra.mxu0 0
        %663 = vmatprep.subr.bf16.mxu0 0
        %664 = vmatpush1.bf16.msra.mxu0 0
        %665 = vmatprep.mubr.bf16.mxu0 0
        %666 = vmatmul.mubr.bf16.gmra.mrb[0].mxu0 %v631
        %v667 = vpop.f32.mrb[0].mxu0
        %v668 = vadd.f32 %v615, %v667
        %v669 = vpop.f32.mrb[0].mxu0
        %v670 = vpop.f32.mrb[0].mxu0
        %v671 = vpop.f32.mrb[0].mxu0
        %672 = vdwg.mxu0
        %v673 = vpack.c.bf16 %v602, %v602
        %v674 = vld [vmem:[#allocation2] sm:$0xf]
        %v675 = vld [vmem:[#allocation2 + $0x4] sm:$0xf]
        %v676 = vld [vmem:[#allocation2 + $0x8] sm:$0xf]
        %v677 = vld [vmem:[#allocation2 + $0xc] sm:$0xf]
        %v678 = vld [vmem:[%s5] sm:$0x1]
        %v680 = vlaneseq
        %v681 = vshrl.u32 %v680, 7
        %v682 = vsub.s32 0, %v681
        %v683 = vrot.slane %v678, %v682
        %v689 = vunpack.c.l.b16 %v674
        %v690 = vunpack.c.l.b16 %v675
        %v691 = vunpack.c.l.b16 %v676
        %v692 = vunpack.c.l.b16 %v677
        %v693 = vpack.c.b16 %v690, %v689
        %v694 = vpack.c.b16 %v692, %v691
        %v698 = vsel %vm629, %v673, 0
        %700 = vmatprep.subr.bf16.mxu0 0
        %701 = vmatpush1.bf16.msra.mxu0 %v693
        %702 = vmatprep.subr.bf16.mxu0 0
        %703 = vmatpush1.bf16.msra.mxu0 %v694
        %704 = vmatprep.subr.bf16.mxu0 0
        %705 = vmatpush1.bf16.msra.mxu0 0
        %706 = vmatprep.subr.bf16.mxu0 0
        %707 = vmatpush1.bf16.msra.mxu0 0
        %708 = vmatprep.subr.bf16.mxu0 0
        %709 = vmatpush1.bf16.msra.mxu0 0
        %710 = vmatprep.subr.bf16.mxu0 0
        %711 = vmatpush1.bf16.msra.mxu0 0
        %712 = vmatprep.subr.bf16.mxu0 0
        %713 = vmatpush1.bf16.msra.mxu0 0
        %714 = vmatprep.subr.bf16.mxu0 0
        %715 = vmatpush1.bf16.msra.mxu0 0
        %716 = vmatprep.subr.bf16.mxu0 0
        %717 = vmatpush1.bf16.msra.mxu0 0
        %718 = vmatprep.subr.bf16.mxu0 0
        %719 = vmatpush1.bf16.msra.mxu0 0
        %720 = vmatprep.subr.bf16.mxu0 0
        %721 = vmatpush1.bf16.msra.mxu0 0
        %722 = vmatprep.subr.bf16.mxu0 0
        %723 = vmatpush1.bf16.msra.mxu0 0
        %724 = vmatprep.subr.bf16.mxu0 0
        %725 = vmatpush1.bf16.msra.mxu0 0
        %726 = vmatprep.subr.bf16.mxu0 0
        %727 = vmatpush1.bf16.msra.mxu0 0
        %728 = vmatprep.subr.bf16.mxu0 0
        %729 = vmatpush1.bf16.msra.mxu0 0
        %730 = vmatprep.subr.bf16.mxu0 0
        %731 = vmatpush1.bf16.msra.mxu0 0
        %732 = vmatprep.mubr.bf16.mxu0 0
        %733 = vmatmul.mubr.bf16.gmra.mrb[0].mxu0 %v698
        %v734 = vpop.f32.mrb[0].mxu0
        %v735 = vadd.f32 %v683, %v734
        %v736 = vpop.f32.mrb[0].mxu0
        %v737 = vpop.f32.mrb[0].mxu0
        %v738 = vpop.f32.mrb[0].mxu0
        %739 = vdwg.mxu0
        %v740 = vmul.f32 %v668, 0.35355338
        %v741 = vpack.c.bf16 %v740, %v740
        %v742 = vpack.c.bf16 %v668, %v668
        %v743 = vpack.c.bf16 %v735, %v735
        %745 = vrot.lane.b32.xlu0 %v741, 120
        %v746 = vpop.permute.xlu0 %745
        %747 = vrot.lane.b32.xlu0 %v741, 112
        %v748 = vpop.permute.xlu0 %747
        %749 = vrot.lane.b32.xlu0 %v741, 104
        %v750 = vpop.permute.xlu0 %749
        %752 = vrot.lane.b32.xlu0 %v742, 120
        %v753 = vpop.permute.xlu0 %752
        %754 = vrot.lane.b32.xlu0 %v742, 112
        %v755 = vpop.permute.xlu0 %754
        %756 = vrot.lane.b32.xlu0 %v742, 104
        %v757 = vpop.permute.xlu0 %756
        %759 = vrot.lane.b32.xlu0 %v743, 120
        %v760 = vpop.permute.xlu0 %759
        %761 = vrot.lane.b32.xlu0 %v743, 112
        %v762 = vpop.permute.xlu0 %761
        %763 = vrot.lane.b32.xlu0 %v743, 104
        %v764 = vpop.permute.xlu0 %763
        %765 = vrot.lane.b32.xlu0 %v742, 96
        %v766 = vpop.permute.xlu0 %765
        %vm767 = vcmask 64512
        %v769 = vsel %vm767, %v741, 0
        %v772 = vsel %vm767, %v766, 0
        %774 = vmatprep.subr.bf16.mxu0 0
        %775 = vmatpush1.bf16.xpose.msra.mxu0 %v772
        %776 = vmatprep.subr.bf16.mxu0 0
        %777 = vmatpush1.bf16.xpose.msra.mxu0 0
        %778 = vmatprep.subr.bf16.mxu0 0
        %779 = vmatpush1.bf16.xpose.msra.mxu0 0
        %780 = vmatprep.subr.bf16.mxu0 0
        %781 = vmatpush1.bf16.xpose.msra.mxu0 0
        %782 = vmatprep.subr.bf16.mxu0 0
        %783 = vmatpush1.bf16.xpose.msra.mxu0 0
        %784 = vmatprep.subr.bf16.mxu0 0
        %785 = vmatpush1.bf16.xpose.msra.mxu0 0
        %786 = vmatprep.subr.bf16.mxu0 0
        %787 = vmatpush1.bf16.xpose.msra.mxu0 0
        %788 = vmatprep.subr.bf16.mxu0 0
        %789 = vmatpush1.bf16.xpose.msra.mxu0 0
        %790 = vmatprep.subr.bf16.mxu0 0
        %791 = vmatpush1.bf16.xpose.msra.mxu0 0
        %792 = vmatprep.subr.bf16.mxu0 0
        %793 = vmatpush1.bf16.xpose.msra.mxu0 0
        %794 = vmatprep.subr.bf16.mxu0 0
        %795 = vmatpush1.bf16.xpose.msra.mxu0 0
        %796 = vmatprep.subr.bf16.mxu0 0
        %797 = vmatpush1.bf16.xpose.msra.mxu0 0
        %798 = vmatprep.subr.bf16.mxu0 0
        %799 = vmatpush1.bf16.xpose.msra.mxu0 0
        %800 = vmatprep.subr.bf16.mxu0 0
        %801 = vmatpush1.bf16.xpose.msra.mxu0 0
        %802 = vmatprep.subr.bf16.mxu0 0
        %803 = vmatpush1.bf16.xpose.msra.mxu0 0
        %804 = vmatprep.subr.bf16.mxu0 0
        %805 = vmatpush1.bf16.xpose.msra.mxu0 0
        %806 = vmatprep.mubr.bf16.mxu0 0
        %807 = vmatmul.mubr.bf16.gmra.mrb[0].mxu0 %v769
        %v808 = vpop.f32.mrb[0].mxu0
        %v809 = vadd.f32 0.0, %v808
        %v810 = vpop.f32.mrb[0].mxu0
        %v811 = vpop.f32.mrb[0].mxu0
        %v812 = vpop.f32.mrb[0].mxu0
        %813 = vdwg.mxu0
        %814 = vrot.lane.b32.xlu0 %v753, 96
        %v815 = vpop.permute.xlu0 %814
        %v817 = vsel %vm767, %v746, 0
        %v820 = vsel %vm767, %v815, 0
        %822 = vmatprep.subr.bf16.mxu0 0
        %823 = vmatpush1.bf16.xpose.msra.mxu0 %v820
        %824 = vmatprep.subr.bf16.mxu0 0
        %825 = vmatpush1.bf16.xpose.msra.mxu0 0
        %826 = vmatprep.subr.bf16.mxu0 0
        %827 = vmatpush1.bf16.xpose.msra.mxu0 0
        %828 = vmatprep.subr.bf16.mxu0 0
        %829 = vmatpush1.bf16.xpose.msra.mxu0 0
        %830 = vmatprep.subr.bf16.mxu0 0
        %831 = vmatpush1.bf16.xpose.msra.mxu0 0
        %832 = vmatprep.subr.bf16.mxu0 0
        %833 = vmatpush1.bf16.xpose.msra.mxu0 0
        %834 = vmatprep.subr.bf16.mxu0 0
        %835 = vmatpush1.bf16.xpose.msra.mxu0 0
        %836 = vmatprep.subr.bf16.mxu0 0
        %837 = vmatpush1.bf16.xpose.msra.mxu0 0
        %838 = vmatprep.subr.bf16.mxu0 0
        %839 = vmatpush1.bf16.xpose.msra.mxu0 0
        %840 = vmatprep.subr.bf16.mxu0 0
        %841 = vmatpush1.bf16.xpose.msra.mxu0 0
        %842 = vmatprep.subr.bf16.mxu0 0
        %843 = vmatpush1.bf16.xpose.msra.mxu0 0
        %844 = vmatprep.subr.bf16.mxu0 0
        %845 = vmatpush1.bf16.xpose.msra.mxu0 0
        %846 = vmatprep.subr.bf16.mxu0 0
        %847 = vmatpush1.bf16.xpose.msra.mxu0 0
        %848 = vmatprep.subr.bf16.mxu0 0
        %849 = vmatpush1.bf16.xpose.msra.mxu0 0
        %850 = vmatprep.subr.bf16.mxu0 0
        %851 = vmatpush1.bf16.xpose.msra.mxu0 0
        %852 = vmatprep.subr.bf16.mxu0 0
        %853 = vmatpush1.bf16.xpose.msra.mxu0 0
        %854 = vmatprep.mubr.bf16.mxu0 0
        %855 = vmatmul.mubr.bf16.gmra.mrb[0].mxu0 %v817
        %v856 = vpop.f32.mrb[0].mxu0
        %v857 = vadd.f32 0.0, %v856
        %v858 = vpop.f32.mrb[0].mxu0
        %v859 = vpop.f32.mrb[0].mxu0
        %v860 = vpop.f32.mrb[0].mxu0
        %861 = vdwg.mxu0
        %862 = vrot.lane.b32.xlu0 %v755, 96
        %v863 = vpop.permute.xlu0 %862
        %v865 = vsel %vm767, %v748, 0
        %v868 = vsel %vm767, %v863, 0
        %870 = vmatprep.subr.bf16.mxu0 0
        %871 = vmatpush1.bf16.xpose.msra.mxu0 %v868
        %872 = vmatprep.subr.bf16.mxu0 0
        %873 = vmatpush1.bf16.xpose.msra.mxu0 0
        %874 = vmatprep.subr.bf16.mxu0 0
        %875 = vmatpush1.bf16.xpose.msra.mxu0 0
        %876 = vmatprep.subr.bf16.mxu0 0
        %877 = vmatpush1.bf16.xpose.msra.mxu0 0
        %878 = vmatprep.subr.bf16.mxu0 0
        %879 = vmatpush1.bf16.xpose.msra.mxu0 0
        %880 = vmatprep.subr.bf16.mxu0 0
        %881 = vmatpush1.bf16.xpose.msra.mxu0 0
        %882 = vmatprep.subr.bf16.mxu0 0
        %883 = vmatpush1.bf16.xpose.msra.mxu0 0
        %884 = vmatprep.subr.bf16.mxu0 0
        %885 = vmatpush1.bf16.xpose.msra.mxu0 0
        %886 = vmatprep.subr.bf16.mxu0 0
        %887 = vmatpush1.bf16.xpose.msra.mxu0 0
        %888 = vmatprep.subr.bf16.mxu0 0
        %889 = vmatpush1.bf16.xpose.msra.mxu0 0
        %890 = vmatprep.subr.bf16.mxu0 0
        %891 = vmatpush1.bf16.xpose.msra.mxu0 0
        %892 = vmatprep.subr.bf16.mxu0 0
        %893 = vmatpush1.bf16.xpose.msra.mxu0 0
        %894 = vmatprep.subr.bf16.mxu0 0
        %895 = vmatpush1.bf16.xpose.msra.mxu0 0
        %896 = vmatprep.subr.bf16.mxu0 0
        %897 = vmatpush1.bf16.xpose.msra.mxu0 0
        %898 = vmatprep.subr.bf16.mxu0 0
        %899 = vmatpush1.bf16.xpose.msra.mxu0 0
        %900 = vmatprep.subr.bf16.mxu0 0
        %901 = vmatpush1.bf16.xpose.msra.mxu0 0
        %902 = vmatprep.mubr.bf16.mxu0 0
        %903 = vmatmul.mubr.bf16.gmra.mrb[0].mxu0 %v865
        %v904 = vpop.f32.mrb[0].mxu0
        %v905 = vadd.f32 0.0, %v904
        %v906 = vpop.f32.mrb[0].mxu0
        %v907 = vpop.f32.mrb[0].mxu0
        %v908 = vpop.f32.mrb[0].mxu0
        %909 = vdwg.mxu0
        %910 = vrot.lane.b32.xlu0 %v757, 96
        %v911 = vpop.permute.xlu0 %910
        %v913 = vsel %vm767, %v750, 0
        %v916 = vsel %vm767, %v911, 0
        %918 = vmatprep.subr.bf16.mxu0 0
        %919 = vmatpush1.bf16.xpose.msra.mxu0 %v916
        %920 = vmatprep.subr.bf16.mxu0 0
        %921 = vmatpush1.bf16.xpose.msra.mxu0 0
        %922 = vmatprep.subr.bf16.mxu0 0
        %923 = vmatpush1.bf16.xpose.msra.mxu0 0
        %924 = vmatprep.subr.bf16.mxu0 0
        %925 = vmatpush1.bf16.xpose.msra.mxu0 0
        %926 = vmatprep.subr.bf16.mxu0 0
        %927 = vmatpush1.bf16.xpose.msra.mxu0 0
        %928 = vmatprep.subr.bf16.mxu0 0
        %929 = vmatpush1.bf16.xpose.msra.mxu0 0
        %930 = vmatprep.subr.bf16.mxu0 0
        %931 = vmatpush1.bf16.xpose.msra.mxu0 0
        %932 = vmatprep.subr.bf16.mxu0 0
        %933 = vmatpush1.bf16.xpose.msra.mxu0 0
        %934 = vmatprep.subr.bf16.mxu0 0
        %935 = vmatpush1.bf16.xpose.msra.mxu0 0
        %936 = vmatprep.subr.bf16.mxu0 0
        %937 = vmatpush1.bf16.xpose.msra.mxu0 0
        %938 = vmatprep.subr.bf16.mxu0 0
        %939 = vmatpush1.bf16.xpose.msra.mxu0 0
        %940 = vmatprep.subr.bf16.mxu0 0
        %941 = vmatpush1.bf16.xpose.msra.mxu0 0
        %942 = vmatprep.subr.bf16.mxu0 0
        %943 = vmatpush1.bf16.xpose.msra.mxu0 0
        %944 = vmatprep.subr.bf16.mxu0 0
        %945 = vmatpush1.bf16.xpose.msra.mxu0 0
        %946 = vmatprep.subr.bf16.mxu0 0
        %947 = vmatpush1.bf16.xpose.msra.mxu0 0
        %948 = vmatprep.subr.bf16.mxu0 0
        %949 = vmatpush1.bf16.xpose.msra.mxu0 0
        %950 = vmatprep.mubr.bf16.mxu0 0
        %951 = vmatmul.mubr.bf16.gmra.mrb[0].mxu0 %v913
        %v952 = vpop.f32.mrb[0].mxu0
        %v953 = vadd.f32 0.0, %v952
        %v954 = vpop.f32.mrb[0].mxu0
        %v955 = vpop.f32.mrb[0].mxu0
        %v956 = vpop.f32.mrb[0].mxu0
        %957 = vdwg.mxu0
        %v958 = vsel %vm767, %v809, -inf
        %959 = vmax.xlane.f32.xlu0 %v958
        %v960 = vpop.xlane.xlu0 %959
        %v961 = vsel %vm767, %v857, -inf
        %962 = vmax.xlane.f32.xlu0 %v961
        %v963 = vpop.xlane.xlu0 %962
        %v964 = vsel %vm767, %v905, -inf
        %965 = vmax.xlane.f32.xlu0 %v964
        %v966 = vpop.xlane.xlu0 %965
        %v967 = vsel %vm767, %v953, -inf
        %968 = vmax.xlane.f32.xlu0 %v967
        %v969 = vpop.xlane.xlu0 %968
        %v970 = vsub.f32 %v809, %v960
        %v971 = vsub.f32 %v857, %v963
        %v972 = vsub.f32 %v905, %v966
        %v973 = vsub.f32 %v953, %v969
        %v974 = vmul.f32 %v970, 1.442695
        %v975 = vpow.pop %v974
        %v976 = vmul.f32 %v971, 1.442695
        %v977 = vpow.pop %v976
        %v978 = vmul.f32 %v972, 1.442695
        %v979 = vpow.pop %v978
        %v980 = vmul.f32 %v973, 1.442695
        %v981 = vpow.pop %v980
        %v982 = vsel %vm767, %v975, 0.0
        %983 = vadd.xlane.f32.xlu0 %v982
        %v984 = vpop.xlane.xlu0 %983
        %v985 = vsel %vm767, %v977, 0.0
        %986 = vadd.xlane.f32.xlu0 %v985
        %v987 = vpop.xlane.xlu0 %986
        %v988 = vsel %vm767, %v979, 0.0
        %989 = vadd.xlane.f32.xlu0 %v988
        %v990 = vpop.xlane.xlu0 %989
        %v991 = vsel %vm767, %v981, 0.0
        %992 = vadd.xlane.f32.xlu0 %v991
        %v993 = vpop.xlane.xlu0 %992
        %v994 = vrcp.pop %v984
        %v995 = vrcp.pop %v987
        %v996 = vrcp.pop %v990
        %v997 = vrcp.pop %v993
        %v998 = vmul.f32 %v975, %v994
        %v999 = vmul.f32 %v977, %v995
        %v1000 = vmul.f32 %v979, %v996
        %v1001 = vmul.f32 %v981, %v997
        %v1002 = vpack.c.bf16 %v998, %v998
        %v1003 = vpack.c.bf16 %v999, %v999
        %v1004 = vpack.c.bf16 %v1000, %v1000
        %v1005 = vpack.c.bf16 %v1001, %v1001
        %v1007 = vsel %vm767, %v1002, 0
        %vm1009 = vcmask 1043456
        %v1011 = vsel %vm1009, %v743, 0
        %1013 = vmatprep.subr.bf16.mxu0 0
        %1014 = vmatpush1.bf16.msra.mxu0 %v1011
        %1015 = vmatprep.subr.bf16.mxu0 0
        %1016 = vmatpush1.bf16.msra.mxu0 0
        %1017 = vmatprep.subr.bf16.mxu0 0
        %1018 = vmatpush1.bf16.msra.mxu0 0
        %1019 = vmatprep.subr.bf16.mxu0 0
        %1020 = vmatpush1.bf16.msra.mxu0 0
        %1021 = vmatprep.subr.bf16.mxu0 0
        %1022 = vmatpush1.bf16.msra.mxu0 0
        %1023 = vmatprep.subr.bf16.mxu0 0
        %1024 = vmatpush1.bf16.msra.mxu0 0
        %1025 = vmatprep.subr.bf16.mxu0 0
        %1026 = vmatpush1.bf16.msra.mxu0 0
        %1027 = vmatprep.subr.bf16.mxu0 0
        %1028 = vmatpush1.bf16.msra.mxu0 0
        %1029 = vmatprep.subr.bf16.mxu0 0
        %1030 = vmatpush1.bf16.msra.mxu0 0
        %1031 = vmatprep.subr.bf16.mxu0 0
        %1032 = vmatpush1.bf16.msra.mxu0 0
        %1033 = vmatprep.subr.bf16.mxu0 0
        %1034 = vmatpush1.bf16.msra.mxu0 0
        %1035 = vmatprep.subr.bf16.mxu0 0
        %1036 = vmatpush1.bf16.msra.mxu0 0
        %1037 = vmatprep.subr.bf16.mxu0 0
        %1038 = vmatpush1.bf16.msra.mxu0 0
        %1039 = vmatprep.subr.bf16.mxu0 0
        %1040 = vmatpush1.bf16.msra.mxu0 0
        %1041 = vmatprep.subr.bf16.mxu0 0
        %1042 = vmatpush1.bf16.msra.mxu0 0
        %1043 = vmatprep.subr.bf16.mxu0 0
        %1044 = vmatpush1.bf16.msra.mxu0 0
        %1045 = vmatprep.mubr.bf16.mxu0 0
        %1046 = vmatmul.mubr.bf16.gmra.mrb[0].mxu0 %v1007
        %v1047 = vpop.f32.mrb[0].mxu0
        %v1048 = vadd.f32 0.0, %v1047
        %v1049 = vpop.f32.mrb[0].mxu0
        %v1050 = vpop.f32.mrb[0].mxu0
        %v1051 = vpop.f32.mrb[0].mxu0
        %1052 = vdwg.mxu0
        %v1054 = vsel %vm767, %v1003, 0
        %v1057 = vsel %vm1009, %v760, 0
        %1059 = vmatprep.subr.bf16.mxu0 0
        %1060 = vmatpush1.bf16.msra.mxu0 %v1057
        %1061 = vmatprep.subr.bf16.mxu0 0
        %1062 = vmatpush1.bf16.msra.mxu0 0
        %1063 = vmatprep.subr.bf16.mxu0 0
        %1064 = vmatpush1.bf16.msra.mxu0 0
        %1065 = vmatprep.subr.bf16.mxu0 0
        %1066 = vmatpush1.bf16.msra.mxu0 0
        %1067 = vmatprep.subr.bf16.mxu0 0
        %1068 = vmatpush1.bf16.msra.mxu0 0
        %1069 = vmatprep.subr.bf16.mxu0 0
        %1070 = vmatpush1.bf16.msra.mxu0 0
        %1071 = vmatprep.subr.bf16.mxu0 0
        %1072 = vmatpush1.bf16.msra.mxu0 0
        %1073 = vmatprep.subr.bf16.mxu0 0
        %1074 = vmatpush1.bf16.msra.mxu0 0
        %1075 = vmatprep.subr.bf16.mxu0 0
        %1076 = vmatpush1.bf16.msra.mxu0 0
        %1077 = vmatprep.subr.bf16.mxu0 0
        %1078 = vmatpush1.bf16.msra.mxu0 0
        %1079 = vmatprep.subr.bf16.mxu0 0
        %1080 = vmatpush1.bf16.msra.mxu0 0
        %1081 = vmatprep.subr.bf16.mxu0 0
        %1082 = vmatpush1.bf16.msra.mxu0 0
        %1083 = vmatprep.subr.bf16.mxu0 0
        %1084 = vmatpush1.bf16.msra.mxu0 0
        %1085 = vmatprep.subr.bf16.mxu0 0
        %1086 = vmatpush1.bf16.msra.mxu0 0
        %1087 = vmatprep.subr.bf16.mxu0 0
        %1088 = vmatpush1.bf16.msra.mxu0 0
        %1089 = vmatprep.subr.bf16.mxu0 0
        %1090 = vmatpush1.bf16.msra.mxu0 0
        %1091 = vmatprep.mubr.bf16.mxu0 0
        %1092 = vmatmul.mubr.bf16.gmra.mrb[0].mxu0 %v1054
        %v1093 = vpop.f32.mrb[0].mxu0
        %v1094 = vadd.f32 0.0, %v1093
        %v1095 = vpop.f32.mrb[0].mxu0
        %v1096 = vpop.f32.mrb[0].mxu0
        %v1097 = vpop.f32.mrb[0].mxu0
        %1098 = vdwg.mxu0
        %v1100 = vsel %vm767, %v1004, 0
        %v1103 = vsel %vm1009, %v762, 0
        %1105 = vmatprep.subr.bf16.mxu0 0
        %1106 = vmatpush1.bf16.msra.mxu0 %v1103
        %1107 = vmatprep.subr.bf16.mxu0 0
        %1108 = vmatpush1.bf16.msra.mxu0 0
        %1109 = vmatprep.subr.bf16.mxu0 0
        %1110 = vmatpush1.bf16.msra.mxu0 0
        %1111 = vmatprep.subr.bf16.mxu0 0
        %1112 = vmatpush1.bf16.msra.mxu0 0
        %1113 = vmatprep.subr.bf16.mxu0 0
        %1114 = vmatpush1.bf16.msra.mxu0 0
        %1115 = vmatprep.subr.bf16.mxu0 0
        %1116 = vmatpush1.bf16.msra.mxu0 0
        %1117 = vmatprep.subr.bf16.mxu0 0
        %1118 = vmatpush1.bf16.msra.mxu0 0
        %1119 = vmatprep.subr.bf16.mxu0 0
        %1120 = vmatpush1.bf16.msra.mxu0 0
        %1121 = vmatprep.subr.bf16.mxu0 0
        %1122 = vmatpush1.bf16.msra.mxu0 0
        %1123 = vmatprep.subr.bf16.mxu0 0
        %1124 = vmatpush1.bf16.msra.mxu0 0
        %1125 = vmatprep.subr.bf16.mxu0 0
        %1126 = vmatpush1.bf16.msra.mxu0 0
        %1127 = vmatprep.subr.bf16.mxu0 0
        %1128 = vmatpush1.bf16.msra.mxu0 0
        %1129 = vmatprep.subr.bf16.mxu0 0
        %1130 = vmatpush1.bf16.msra.mxu0 0
        %1131 = vmatprep.subr.bf16.mxu0 0
        %1132 = vmatpush1.bf16.msra.mxu0 0
        %1133 = vmatprep.subr.bf16.mxu0 0
        %1134 = vmatpush1.bf16.msra.mxu0 0
        %1135 = vmatprep.subr.bf16.mxu0 0
        %1136 = vmatpush1.bf16.msra.mxu0 0
        %1137 = vmatprep.mubr.bf16.mxu0 0
        %1138 = vmatmul.mubr.bf16.gmra.mrb[0].mxu0 %v1100
        %v1139 = vpop.f32.mrb[0].mxu0
        %v1140 = vadd.f32 0.0, %v1139
        %v1141 = vpop.f32.mrb[0].mxu0
        %v1142 = vpop.f32.mrb[0].mxu0
        %v1143 = vpop.f32.mrb[0].mxu0
        %1144 = vdwg.mxu0
        %v1146 = vsel %vm767, %v1005, 0
        %v1149 = vsel %vm1009, %v764, 0
        %1151 = vmatprep.subr.bf16.mxu0 0
        %1152 = vmatpush1.bf16.msra.mxu0 %v1149
        %1153 = vmatprep.subr.bf16.mxu0 0
        %1154 = vmatpush1.bf16.msra.mxu0 0
        %1155 = vmatprep.subr.bf16.mxu0 0
        %1156 = vmatpush1.bf16.msra.mxu0 0
        %1157 = vmatprep.subr.bf16.mxu0 0
        %1158 = vmatpush1.bf16.msra.mxu0 0
        %1159 = vmatprep.subr.bf16.mxu0 0
        %1160 = vmatpush1.bf16.msra.mxu0 0
        %1161 = vmatprep.subr.bf16.mxu0 0
        %1162 = vmatpush1.bf16.msra.mxu0 0
        %1163 = vmatprep.subr.bf16.mxu0 0
        %1164 = vmatpush1.bf16.msra.mxu0 0
        %1165 = vmatprep.subr.bf16.mxu0 0
        %1166 = vmatpush1.bf16.msra.mxu0 0
        %1167 = vmatprep.subr.bf16.mxu0 0
        %1168 = vmatpush1.bf16.msra.mxu0 0
        %1169 = vmatprep.subr.bf16.mxu0 0
        %1170 = vmatpush1.bf16.msra.mxu0 0
        %1171 = vmatprep.subr.bf16.mxu0 0
        %1172 = vmatpush1.bf16.msra.mxu0 0
        %1173 = vmatprep.subr.bf16.mxu0 0
        %1174 = vmatpush1.bf16.msra.mxu0 0
        %1175 = vmatprep.subr.bf16.mxu0 0
        %1176 = vmatpush1.bf16.msra.mxu0 0
        %1177 = vmatprep.subr.bf16.mxu0 0
        %1178 = vmatpush1.bf16.msra.mxu0 0
        %1179 = vmatprep.subr.bf16.mxu0 0
        %1180 = vmatpush1.bf16.msra.mxu0 0
        %1181 = vmatprep.subr.bf16.mxu0 0
        %1182 = vmatpush1.bf16.msra.mxu0 0
        %1183 = vmatprep.mubr.bf16.mxu0 0
        %1184 = vmatmul.mubr.bf16.gmra.mrb[0].mxu0 %v1146
        %v1185 = vpop.f32.mrb[0].mxu0
        %v1186 = vadd.f32 0.0, %v1185
        %v1187 = vpop.f32.mrb[0].mxu0
        %v1188 = vpop.f32.mrb[0].mxu0
        %v1189 = vpop.f32.mrb[0].mxu0
        %1190 = vdwg.mxu0
        %v1191 = vpack.c.bf16 %v1048, %v1048
        %v1192 = vpack.c.bf16 %v1094, %v1094
        %v1193 = vpack.c.bf16 %v1140, %v1140
        %v1194 = vpack.c.bf16 %v1186, %v1186
        %1196 = vrot.lane.b32.xlu0 %v1192, 8
        %v1197 = vpop.permute.xlu0 %1196
        %1199 = vrot.lane.b32.xlu0 %v1193, 16
        %v1200 = vpop.permute.xlu0 %1199
        %1202 = vrot.lane.b32.xlu0 %v1194, 24
        %v1203 = vpop.permute.xlu0 %1202
        %v1206 = vsel %vm767, %v1191, %v1197
        %vm1207 = vcmask 130048
        %v1209 = vsel %vm1207, %v1206, %v1200
        %vm1210 = vcmask 195584
        %v1212 = vsel %vm1210, %v1209, %v1203
        %v1213 = vld [vmem:[#allocation5] sm:$0xf]
        %v1214 = vld [vmem:[#allocation5 + $0x4] sm:$0xf]
        %v1215 = vld [vmem:[#allocation5 + $0x8] sm:$0xf]
        %v1216 = vld [vmem:[#allocation5 + $0xc] sm:$0xf]
        %v1217 = vld [vmem:[#allocation7] sm:$0x1]
        %v1219 = vlaneseq
        %v1220 = vshrl.u32 %v1219, 7
        %v1221 = vsub.s32 0, %v1220
        %v1222 = vrot.slane %v1217, %v1221
        %v1228 = vunpack.c.l.b16 %v1213
        %v1229 = vunpack.c.l.b16 %v1214
        %v1230 = vunpack.c.l.b16 %v1215
        %v1231 = vunpack.c.l.b16 %v1216
        %v1232 = vpack.c.b16 %v1229, %v1228
        %v1233 = vpack.c.b16 %v1231, %v1230
        %v1236 = vsel %vm629, %v1212, 0
        %1238 = vmatprep.subr.bf16.mxu0 0
        %1239 = vmatpush1.bf16.msra.mxu0 %v1232
        %1240 = vmatprep.subr.bf16.mxu0 0
        %1241 = vmatpush1.bf16.msra.mxu0 %v1233
        %1242 = vmatprep.subr.bf16.mxu0 0
        %1243 = vmatpush1.bf16.msra.mxu0 0
        %1244 = vmatprep.subr.bf16.mxu0 0
        %1245 = vmatpush1.bf16.msra.mxu0 0
        %1246 = vmatprep.subr.bf16.mxu0 0
        %1247 = vmatpush1.bf16.msra.mxu0 0
        %1248 = vmatprep.subr.bf16.mxu0 0
        %1249 = vmatpush1.bf16.msra.mxu0 0
        %1250 = vmatprep.subr.bf16.mxu0 0
        %1251 = vmatpush1.bf16.msra.mxu0 0
        %1252 = vmatprep.subr.bf16.mxu0 0
        %1253 = vmatpush1.bf16.msra.mxu0 0
        %1254 = vmatprep.subr.bf16.mxu0 0
        %1255 = vmatpush1.bf16.msra.mxu0 0
        %1256 = vmatprep.subr.bf16.mxu0 0
        %1257 = vmatpush1.bf16.msra.mxu0 0
        %1258 = vmatprep.subr.bf16.mxu0 0
        %1259 = vmatpush1.bf16.msra.mxu0 0
        %1260 = vmatprep.subr.bf16.mxu0 0
        %1261 = vmatpush1.bf16.msra.mxu0 0
        %1262 = vmatprep.subr.bf16.mxu0 0
        %1263 = vmatpush1.bf16.msra.mxu0 0
        %1264 = vmatprep.subr.bf16.mxu0 0
        %1265 = vmatpush1.bf16.msra.mxu0 0
        %1266 = vmatprep.subr.bf16.mxu0 0
        %1267 = vmatpush1.bf16.msra.mxu0 0
        %1268 = vmatprep.subr.bf16.mxu0 0
        %1269 = vmatpush1.bf16.msra.mxu0 0
        %1270 = vmatprep.mubr.bf16.mxu0 0
        %1271 = vmatmul.mubr.bf16.gmra.mrb[0].mxu0 %v1236
        %v1272 = vpop.f32.mrb[0].mxu0
        %v1273 = vadd.f32 %v1222, %v1272
        %v1274 = vpop.f32.mrb[0].mxu0
        %v1275 = vpop.f32.mrb[0].mxu0
        %v1276 = vpop.f32.mrb[0].mxu0
        %1277 = vdwg.mxu0
        %v1278 = vadd.f32 %v602, %v1273
        %v1279 = vsel %vm629, %v1278, 0.0
        %1280 = vadd.xlane.f32.xlu0 %v1279
        %v1281 = vpop.xlane.xlu0 %1280
        %v1282 = vrcp.pop 32.0
        %v1283 = vmul.f32 %v1281, %v1282
        %v1284 = vsub.f32 %v1278, %v1283
        %v1285 = vmul.f32 %v1284, %v1284
        %v1286 = vsel %vm629, %v1285, 0.0
        %1287 = vadd.xlane.f32.xlu0 %v1286
        %v1288 = vpop.xlane.xlu0 %1287
        %v1289 = vmul.f32 %v1288, %v1282
        %v1290 = vadd.f32 %v1289, 1e-05
        %v1291 = vrsqrt.pop %v1290
        %v1292 = vmul.f32 %v1284, %v1291
        %v1293 = vld [vmem:[#allocation8] sm:$0x1]
        %v1295 = vlaneseq
        %v1296 = vshrl.u32 %v1295, 7
        %v1297 = vsub.s32 0, %v1296
        %v1298 = vrot.slane %v1293, %v1297
        %v1300 = vmul.f32 %v1292, %v1298
        %v1301 = vld [vmem:[#allocation10] sm:$0x1]
        %v1303 = vlaneseq
        %v1304 = vshrl.u32 %v1303, 7
        %v1305 = vsub.s32 0, %v1304
        %v1306 = vrot.slane %v1301, %v1305
        %v1308 = vadd.f32 %v1300, %v1306
        %v1309 = vpack.c.bf16 %v1308, %v1308
        %v1310 = vld [vmem:[%s10] sm:$0xf]
        %v1311 = vld [vmem:[%s10 + $0x4] sm:$0xf]
        %v1312 = vld [vmem:[%s10 + $0x8] sm:$0xf]
        %v1313 = vld [vmem:[%s10 + $0xc] sm:$0xf]
        %v1314 = vld [vmem:[%s11] sm:$0x1]
        %v1316 = vlaneseq
        %v1317 = vshrl.u32 %v1316, 7
        %v1318 = vsub.s32 0, %v1317
        %v1319 = vrot.slane %v1314, %v1318
        %v1325 = vunpack.c.l.b16 %v1310
        %v1326 = vunpack.c.l.b16 %v1311
        %v1327 = vunpack.c.l.b16 %v1312
        %v1328 = vunpack.c.l.b16 %v1313
        %v1329 = vpack.c.b16 %v1326, %v1325
        %v1330 = vpack.c.b16 %v1328, %v1327
        %v1334 = vsel %vm629, %v1309, 0
        %1336 = vmatprep.subr.bf16.mxu0 0
        %1337 = vmatpush1.bf16.msra.mxu0 %v1329
        %1338 = vmatprep.subr.bf16.mxu0 0
        %1339 = vmatpush1.bf16.msra.mxu0 %v1330
        %1340 = vmatprep.subr.bf16.mxu0 0
        %1341 = vmatpush1.bf16.msra.mxu0 0
        %1342 = vmatprep.subr.bf16.mxu0 0
        %1343 = vmatpush1.bf16.msra.mxu0 0
        %1344 = vmatprep.subr.bf16.mxu0 0
        %1345 = vmatpush1.bf16.msra.mxu0 0
        %1346 = vmatprep.subr.bf16.mxu0 0
        %1347 = vmatpush1.bf16.msra.mxu0 0
        %1348 = vmatprep.subr.bf16.mxu0 0
        %1349 = vmatpush1.bf16.msra.mxu0 0
        %1350 = vmatprep.subr.bf16.mxu0 0
        %1351 = vmatpush1.bf16.msra.mxu0 0
        %1352 = vmatprep.subr.bf16.mxu0 0
        %1353 = vmatpush1.bf16.msra.mxu0 0
        %1354 = vmatprep.subr.bf16.mxu0 0
        %1355 = vmatpush1.bf16.msra.mxu0 0
        %1356 = vmatprep.subr.bf16.mxu0 0
        %1357 = vmatpush1.bf16.msra.mxu0 0
        %1358 = vmatprep.subr.bf16.mxu0 0
        %1359 = vmatpush1.bf16.msra.mxu0 0
        %1360 = vmatprep.subr.bf16.mxu0 0
        %1361 = vmatpush1.bf16.msra.mxu0 0
        %1362 = vmatprep.subr.bf16.mxu0 0
        %1363 = vmatpush1.bf16.msra.mxu0 0
        %1364 = vmatprep.subr.bf16.mxu0 0
        %1365 = vmatpush1.bf16.msra.mxu0 0
        %1366 = vmatprep.subr.bf16.mxu0 0
        %1367 = vmatpush1.bf16.msra.mxu0 0
        %1368 = vmatprep.mubr.bf16.mxu0 0
        %1369 = vmatmul.mubr.bf16.gmra.mrb[0].mxu0 %v1334
        %v1370 = vpop.f32.mrb[0].mxu0
        %v1371 = vadd.f32 %v1319, %v1370
        %v1372 = vpop.f32.mrb[0].mxu0
        %v1373 = vpop.f32.mrb[0].mxu0
        %v1374 = vpop.f32.mrb[0].mxu0
        %1375 = vdwg.mxu0
        %v1376 = vmax.f32 %v1371, 0.0
        %v1377 = vpack.c.bf16 %v1376, %v1376
        %v1378 = vld [vmem:[%s12] sm:$0xf]
        %v1379 = vld [vmem:[%s12 + $0x4] sm:$0xf]
        %v1380 = vld [vmem:[%s12 + $0x8] sm:$0xf]
        %v1381 = vld [vmem:[%s12 + $0xc] sm:$0xf]
        %v1382 = vld [vmem:[%s12 + $0x10] sm:$0xf]
        %v1383 = vld [vmem:[%s12 + $0x14] sm:$0xf]
        %v1384 = vld [vmem:[%s12 + $0x18] sm:$0xf]
        %v1385 = vld [vmem:[%s12 + $0x1c] sm:$0xf]
        %v1386 = vld [vmem:[%s13] sm:$0x1]
        %v1388 = vlaneseq
        %v1389 = vshrl.u32 %v1388, 7
        %v1390 = vsub.s32 0, %v1389
        %v1391 = vrot.slane %v1386, %v1390
        %v1401 = vunpack.c.l.b16 %v1378
        %v1402 = vunpack.c.l.b16 %v1379
        %v1403 = vunpack.c.l.b16 %v1380
        %v1404 = vunpack.c.l.b16 %v1381
        %v1405 = vunpack.c.l.b16 %v1382
        %v1406 = vunpack.c.l.b16 %v1383
        %v1407 = vunpack.c.l.b16 %v1384
        %v1408 = vunpack.c.l.b16 %v1385
        %v1409 = vpack.c.b16 %v1402, %v1401
        %v1410 = vpack.c.b16 %v1404, %v1403
        %v1411 = vpack.c.b16 %v1406, %v1405
        %v1412 = vpack.c.b16 %v1408, %v1407
        %vm1417 = vcmask 523264
        %v1419 = vsel %vm1417, %v1377, 0
        %1421 = vmatprep.subr.bf16.mxu0 0
        %1422 = vmatpush1.bf16.msra.mxu0 %v1409
        %1423 = vmatprep.subr.bf16.mxu0 0
        %1424 = vmatpush1.bf16.msra.mxu0 %v1410
        %1425 = vmatprep.subr.bf16.mxu0 0
        %1426 = vmatpush1.bf16.msra.mxu0 %v1411
        %1427 = vmatprep.subr.bf16.mxu0 0
        %1428 = vmatpush1.bf16.msra.mxu0 %v1412
        %1429 = vmatprep.subr.bf16.mxu0 0
        %1430 = vmatpush1.bf16.msra.mxu0 0
        %1431 = vmatprep.subr.bf16.mxu0 0
        %1432 = vmatpush1.bf16.msra.mxu0 0
        %1433 = vmatprep.subr.bf16.mxu0 0
        %1434 = vmatpush1.bf16.msra.mxu0 0
        %1435 = vmatprep.subr.bf16.mxu0 0
        %1436 = vmatpush1.bf16.msra.mxu0 0
        %1437 = vmatprep.subr.bf16.mxu0 0
        %1438 = vmatpush1.bf16.msra.mxu0 0
        %1439 = vmatprep.subr.bf16.mxu0 0
        %1440 = vmatpush1.bf16.msra.mxu0 0
        %1441 = vmatprep.subr.bf16.mxu0 0
        %1442 = vmatpush1.bf16.msra.mxu0 0
        %1443 = vmatprep.subr.bf16.mxu0 0
        %1444 = vmatpush1.bf16.msra.mxu0 0
        %1445 = vmatprep.subr.bf16.mxu0 0
        %1446 = vmatpush1.bf16.msra.mxu0 0
        %1447 = vmatprep.subr.bf16.mxu0 0
        %1448 = vmatpush1.bf16.msra.mxu0 0
        %1449 = vmatprep.subr.bf16.mxu0 0
        %1450 = vmatpush1.bf16.msra.mxu0 0
        %1451 = vmatprep.subr.bf16.mxu0 0
        %1452 = vmatpush1.bf16.msra.mxu0 0
        %1453 = vmatprep.mubr.bf16.mxu0 0
        %1454 = vmatmul.mubr.bf16.gmra.mrb[0].mxu0 %v1419
        %v1455 = vpop.f32.mrb[0].mxu0
        %v1456 = vadd.f32 %v1391, %v1455
        %v1457 = vpop.f32.mrb[0].mxu0
        %v1458 = vpop.f32.mrb[0].mxu0
        %v1459 = vpop.f32.mrb[0].mxu0
        %1460 = vdwg.mxu0
        %v1461 = vadd.f32 %v1308, %v1456
        %v1462 = vsel %vm629, %v1461, 0.0
        %1463 = vadd.xlane.f32.xlu0 %v1462
        %v1464 = vpop.xlane.xlu0 %1463
        %v1465 = vmul.f32 %v1464, %v1282
        %v1466 = vsub.f32 %v1461, %v1465
        %v1467 = vmul.f32 %v1466, %v1466
        %v1468 = vsel %vm629, %v1467, 0.0
        %1469 = vadd.xlane.f32.xlu0 %v1468
        %v1470 = vpop.xlane.xlu0 %1469
        %v1471 = vmul.f32 %v1470, %v1282
        %v1472 = vadd.f32 %v1471, 1e-05
        %v1473 = vrsqrt.pop %v1472
        %v1474 = vmul.f32 %v1466, %v1473
        %v1475 = vld [vmem:[%s14] sm:$0x1]
        %v1477 = vlaneseq
        %v1478 = vshrl.u32 %v1477, 7
        %v1479 = vsub.s32 0, %v1478
        %v1480 = vrot.slane %v1475, %v1479
        %v1482 = vmul.f32 %v1474, %v1480
        %v1483 = vld [vmem:[%s15] sm:$0x1]
        %v1485 = vlaneseq
        %v1486 = vshrl.u32 %v1485, 7
        %v1487 = vsub.s32 0, %v1486
        %v1488 = vrot.slane %v1483, %v1487
        %v1490 = vadd.f32 %v1482, %v1488
        %1491 = vst.msk [vmem:[%s592] sm:$0xff] %vm629, %v1490
        %s1492 = sand.u32 %s387, 1
        %s1493 = scalar_lea.sflag [#allocation4], %s1492
        %s1494 = sand.u32 %s387, 1
        %s1495 = smul.addr %s1494, 8
        %s1496 = scalar_lea.vmem [#allocation11], %s1495
        // Predicated region
        $region105: #{tpu_custom_call.1} parent=83 // pred_check
          %p1497 = pneg %p397
        $region106: #{tpu_custom_call.1} parent=83 // pred_check_branch
          %1499 = sbr.rel (%p1497) target = $region108
        $region107: #{tpu_custom_call.1} parent=83 // pred_region
          %s1501 = ssub.s32 128, 128
          %1502 = vsyncadd %s1493, %s1501
          %s1503 = smul.addr %s33, 128
          %s1504 = scalar_lea.hbm %s16, %s1503
          %s1506 = sshll.u32 %s1496, 4
          %s1507 = int_to_ptr.vmem [resolvable:$true] %s1506
          %1509 = dma.vmem_to_hbm [thread:$0]  %s1507, 128, %s1504, %s1493
        $region108: #{tpu_custom_call.1} parent=83 // pred_fallthru
          _
      $region84: #{tpu_custom_call.1} parent=5 // pred_fallthru
        _
      %p1510 = scmp.le.s32.totalorder 2, %s28
      // Predicated region
      $region109: #{tpu_custom_call.1} parent=5 // pred_check
        %p1511 = pneg %p1510
      $region110: #{tpu_custom_call.1} parent=5 // pred_check_branch
        %1513 = sbr.rel (%p1511) target = $region112
      $region111: #{tpu_custom_call.1} parent=5 // pred_region
        %s1514 = ssub.s32 %s28, 2
        // Predicated region
        $region113: #{tpu_custom_call.1} parent=111 // pred_check
          %p1515 = pneg %p403
        $region114: #{tpu_custom_call.1} parent=111 // pred_check_branch
          %1517 = sbr.rel (%p1515) target = $region116
        $region115: #{tpu_custom_call.1} parent=111 // pred_region
          %s1518 = sand.u32 %s388, 1
          %s1519 = scalar_lea.sflag [#allocation4], %s1518
          %s1520 = sand.u32 %s388, 1
          %s1521 = smul.addr %s1520, 8
          %s1522 = scalar_lea.vmem [#allocation11], %s1521
          %1523 = dma.done %s1519, 128
        $region116: #{tpu_custom_call.1} parent=111 // pred_fallthru
          _
      $region112: #{tpu_custom_call.1} parent=5 // pred_fallthru
        _
    $region6: #{tpu_custom_call.1} parent=1 // loop_footer
      %s32 = sadd.s32 1, %s28
    $region7: #{tpu_custom_call.1} parent=1 // loop_footer_branch
      %27 = sbr.rel target = $region3
    $region8: #{tpu_custom_call.1} parent=1 // loop_exit
      _
    %1524 = vsyncpa [#allocation3], 1
    %s1525 = scalar_lea.sflag [#allocation3], 1
    %1526 = vsyncpa %s1525, 1
    %1527 = vsyncpa [#allocation6], 1
    %1528 = vsyncpa [#allocation9], 1
    %1529 = vsyncpa [#allocation4], 1
    %s1530 = scalar_lea.sflag [#allocation4], 1
    %1531 = vsyncpa %s1530, 1

</llo_original>
